<compile_context>
chip_gen: v7x
topology: tpu7x:2x2x1
jax: 0.10.0
libtpu: 0.0.40
codegen_flags: <defaults>
</compile_context>

<pallas_src>
import functools
import math

import jax
import jax.numpy as jnp
from jax.experimental import pallas as pl
from jax.experimental.pallas import tpu as pltpu


# ----------------------------- config ---------------------------------------
class Config:
    vocab_size = 64
    block_size = 16
    n_layer = 2
    n_head = 4
    n_embd = 32
    num_channels = 4
    channel_dim = 32


LN_EPS = 1e-5
LANE = 128


def _round_up(x, m):
    return (x + m - 1) // m * m


# --------------------------- kernel helpers ----------------------------------
def _layernorm(x, gamma, beta):
    """LayerNorm over last axis (torch.nn.LayerNorm, eps=1e-5)."""
    mu = jnp.mean(x, axis=-1, keepdims=True)
    xc = x - mu
    var = jnp.mean(xc * xc, axis=-1, keepdims=True)
    inv = jax.lax.rsqrt(var + LN_EPS)
    return xc * inv * gamma + beta


def _gelu_tanh(x):
    """GELU tanh approximation (nn.GELU(approximate='tanh'))."""
    c = math.sqrt(2.0 / math.pi)
    return 0.5 * x * (1.0 + jnp.tanh(c * (x + 0.044715 * x * x * x)))


# ----------------------------- fused kernel ----------------------------------
def _gpt_fwd_kernel(
        # batch-sliced activations + batch-invariant embedding params
        tok_ref, pos_ref, cha_ref, wcp_ref, bcp_ref, scale_ref,
        # per-layer packed weight slabs (leading dim = layer, fully resident)
        ln_ref, wqkv_ref, bqkv_ref, wo_ref, bo_ref,
        wfc_ref, bfc_ref, wmp_ref, bmp_ref,
        # final layernorm + tied (pre-transposed, lane-padded) lm head
        lnf_ref, wte_t_ref,
        # output
        logits_ref,
        *, T, C, H, HD, CD, Vp, n_layer):
    """One grid step = one batch element; static in-kernel loop over layers."""
    # ---- fused embedding: token + position + scaled channel projection ------
    proj = jnp.dot(cha_ref[0], wcp_ref[...],
                   preferred_element_type=jnp.float32) + bcp_ref[...]
    x = tok_ref[0] + pos_ref[...] + scale_ref[0, 0] * proj          # (T, C)

    # additive causal mask, built ONCE and reused by every layer / head
    row = jax.lax.broadcasted_iota(jnp.int32, (T, T), 0)
    col = jax.lax.broadcasted_iota(jnp.int32, (T, T), 1)
    mask = jnp.where(row >= col, 0.0, -1e30).astype(jnp.float32)[None]  # (1,T,T)
    sm_scale = 1.0 / math.sqrt(HD)

    for l in range(n_layer):        # static loop: all weights VMEM-resident
        lnp = ln_ref[l]                                             # (4, C)

        # ---- attention branch -------------------------------------------
        h1 = _layernorm(x, lnp[0], lnp[1])                          # (T, C)
        qkv = (jnp.dot(h1, wqkv_ref[l], preferred_element_type=jnp.float32)
               + bqkv_ref[l])                                       # (T, 3C)
        q = qkv[:, 0 * C:1 * C].reshape(T, H, HD)
        k = qkv[:, 1 * C:2 * C].reshape(T, H, HD)
        v = qkv[:, 2 * C:3 * C].reshape(T, H, HD)
        s = jnp.einsum('qhd,khd->hqk', q, k,
                       preferred_element_type=jnp.float32) * sm_scale
        s = s + mask                                                # (H, T, T)
        m = jnp.max(s, axis=-1, keepdims=True)
        e = jnp.exp(s - m)
        p = e / jnp.sum(e, axis=-1, keepdims=True)   # exact softmax (parity)
        o = jnp.einsum('hqk,khd->qhd', p, v,
                       preferred_element_type=jnp.float32).reshape(T, C)
        y = (jnp.dot(o, wo_ref[l], preferred_element_type=jnp.float32)
             + bo_ref[l])
        x = x + y

        # ---- MLP branch ---------------------------------------------------
        h2 = _layernorm(x, lnp[2], lnp[3])
        hf = _gelu_tanh(jnp.dot(h2, wfc_ref[l],
                                preferred_element_type=jnp.float32)
                        + bfc_ref[l])
        x = x + (jnp.dot(hf, wmp_ref[l], preferred_element_type=jnp.float32)
                 + bmp_ref[l])

    # ---- final layernorm + tied lm_head (lane-dense, pre-transposed RHS) ----
    hfin = _layernorm(x, lnf_ref[0], lnf_ref[1])
    logits_ref[0] = jnp.dot(hfin, wte_t_ref[...],
                            preferred_element_type=jnp.float32)     # (T, Vp)


# --------------------------- parameter init -----------------------------------
def init_params(key, cfg):
    C, V, L = cfg.n_embd, cfg.vocab_size, cfg.n_layer
    std = 0.02
    std_scaled = 0.02 * (2 * L) ** (-0.5)            # NANOGPT_SCALE_INIT

    def nrm(k, shape, s):
        return s * jax.random.normal(k, shape, dtype=jnp.float32)

    keys = jax.random.split(key, 4 + 4 * L)
    ki = iter(range(len(keys)))

    params = {
        'wte': nrm(keys[next(ki)], (V, C), std),              # tied with lm_head
        'wpe': nrm(keys[next(ki)], (cfg.block_size, C), std),
        'wce': nrm(keys[next(ki)], (cfg.num_channels, cfg.channel_dim), std),
        'channel_proj_w': nrm(keys[next(ki)], (cfg.channel_dim, C), std),
        'channel_proj_b': jnp.zeros((1, C), jnp.float32),
        'channel_scale': jnp.ones((1, 1), jnp.float32),
        'ln_f_g': jnp.ones((1, C), jnp.float32),
        'ln_f_b': jnp.zeros((1, C), jnp.float32),
        'blocks': [],
    }
    for _ in range(L):
        blk = {
            'ln1_g': jnp.ones((1, C), jnp.float32),
            'ln1_b': jnp.zeros((1, C), jnp.float32),
            'w_qkv': nrm(keys[next(ki)], (C, 3 * C), std),
            'b_qkv': jnp.zeros((3 * C,), jnp.float32),
            'w_attn_proj': nrm(keys[next(ki)], (C, C), std_scaled),
            'b_attn_proj': jnp.zeros((1, C), jnp.float32),
            'ln2_g': jnp.ones((1, C), jnp.float32),
            'ln2_b': jnp.zeros((1, C), jnp.float32),
            'w_fc': nrm(keys[next(ki)], (C, 4 * C), std),
            'b_fc': jnp.zeros((1, 4 * C), jnp.float32),
            'w_mlp_proj': nrm(keys[next(ki)], (4 * C, C), std_scaled),
            'b_mlp_proj': jnp.zeros((1, C), jnp.float32),
        }
        params['blocks'].append(blk)
    return params


def pack_params(params, cfg):
    """Wrapper-side layout plumbing: pack per-layer weights into a few (L, ...)
    slabs, pack LayerNorm params into one slab, pre-transpose + lane-pad the
    tied lm_head weight."""
    C = cfg.n_embd
    V = cfg.vocab_size
    Vp = _round_up(V, LANE)

    def stack(fn):
        return jnp.stack([fn(b) for b in params['blocks']], axis=0)

    stacked = {
        'ln':    stack(lambda b: jnp.concatenate(
                     [b['ln1_g'], b['ln1_b'], b['ln2_g'], b['ln2_b']], axis=0)),
        'w_qkv': stack(lambda b: b['w_qkv']),
        'b_qkv': stack(lambda b: b['b_qkv'].reshape(1, 3 * C)),
        'w_o':   stack(lambda b: b['w_attn_proj']),
        'b_o':   stack(lambda b: b['b_attn_proj']),
        'w_fc':  stack(lambda b: b['w_fc']),
        'b_fc':  stack(lambda b: b['b_fc']),
        'w_mp':  stack(lambda b: b['w_mlp_proj']),
        'b_mp':  stack(lambda b: b['b_mlp_proj']),
    }

    wte_t_pad = jnp.pad(params['wte'].T, ((0, 0), (0, Vp - V)))   # (C, Vp)
    ln_f = jnp.concatenate([params['ln_f_g'], params['ln_f_b']], axis=0)  # (2,C)

    return {
        'wte': params['wte'], 'wpe': params['wpe'], 'wce': params['wce'],
        'channel_proj_w': params['channel_proj_w'],
        'channel_proj_b': params['channel_proj_b'],
        'channel_scale': params['channel_scale'],
        'ln_f': ln_f, 'wte_t_pad': wte_t_pad,
        'stacked': stacked, 'vocab_pad': Vp,
    }


# ------------------------------ forward ---------------------------------------
def gpt_forward(packed, cfg, idx, channel_idx=None, targets=None):
    B, T = idx.shape
    C, H, L = cfg.n_embd, cfg.n_head, cfg.n_layer
    HD = C // H
    CD = cfg.channel_dim
    V = cfg.vocab_size
    Vp = packed['vocab_pad']

    # Embedding gathers are plain-JAX glue (integer gather).
    tok_emb = packed['wte'][idx]                       # (B, T, C)
    pos_emb = packed['wpe'][:T]                        # (T, C)
    if channel_idx is not None:
        cha_small = packed['wce'][channel_idx]         # (B, T, CD)
        scale = packed['channel_scale']
    else:
        cha_small = jnp.zeros((B, T, CD), jnp.float32)
        scale = jnp.zeros((1, 1), jnp.float32)         # disables channel branch

    stk = packed['stacked']

    kern = functools.partial(_gpt_fwd_kernel, T=T, C=C, H=H, HD=HD, CD=CD,
                             Vp=Vp, n_layer=L)

    c2 = lambda b: (0, 0)
    c3 = lambda b: (0, 0, 0)

    in_specs = [
        pl.BlockSpec((1, T, C), lambda b: (b, 0, 0)),        # tok_emb (per batch)
        pl.BlockSpec((T, C), c2),                            # pos_emb
        pl.BlockSpec((1, T, CD), lambda b: (b, 0, 0)),       # cha_small
        pl.BlockSpec((CD, C), c2),                           # channel_proj_w
        pl.BlockSpec((1, C), c2),                            # channel_proj_b
        pl.BlockSpec(memory_space=pltpu.MemorySpace.SMEM),   # channel_scale
        pl.BlockSpec((L, 4, C), c3),                         # ln1g/ln1b/ln2g/ln2b
        pl.BlockSpec((L, C, 3 * C), c3),                     # w_qkv
        pl.BlockSpec((L, 1, 3 * C), c3),                     # b_qkv
        pl.BlockSpec((L, C, C), c3),                         # w_o
        pl.BlockSpec((L, 1, C), c3),                         # b_o
        pl.BlockSpec((L, C, 4 * C), c3),                     # w_fc
        pl.BlockSpec((L, 1, 4 * C), c3),                     # b_fc
        pl.BlockSpec((L, 4 * C, C), c3),                     # w_mp
        pl.BlockSpec((L, 1, C), c3),                         # b_mp
        pl.BlockSpec((2, C), c2),                            # ln_f gamma/beta
        pl.BlockSpec((C, Vp), c2),                           # wte_t_pad (K-major)
    ]
    out_spec = pl.BlockSpec((1, T, Vp), lambda b: (b, 0, 0))

    logits_pad = pl.pallas_call(
        kern,
        out_shape=jax.ShapeDtypeStruct((B, T, Vp), jnp.float32),
        grid_spec=pltpu.PrefetchScalarGridSpec(
            num_scalar_prefetch=0,
            grid=(B,),                                   # parallel over batch
            in_specs=in_specs,
            out_specs=out_spec),
        compiler_params=pltpu.CompilerParams(
            dimension_semantics=("parallel",)),
    )(tok_emb, pos_emb, cha_small, packed['channel_proj_w'],
      packed['channel_proj_b'], scale,
      stk['ln'], stk['w_qkv'], stk['b_qkv'], stk['w_o'], stk['b_o'],
      stk['w_fc'], stk['b_fc'], stk['w_mp'], stk['b_mp'],
      packed['ln_f'], packed['wte_t_pad'])

    logits = logits_pad[..., :V]                       # drop lane padding

    loss = None
    if targets is not None:
        # cross-entropy in plain JAX (glue; matches F.cross_entropy mean)
        lf = logits.reshape(-1, V)
        tf = targets.reshape(-1)
        logp = jax.nn.log_softmax(lf, axis=-1)
        loss = -jnp.mean(jnp.take_along_axis(logp, tf[:, None], axis=-1))
    return logits, loss


# ------------------------------- main ------------------------------------------
if __name__ == "__main__":
    cfg = Config()
    B, T = 2, 8

    key = jax.random.PRNGKey(0)
    kp, kidx, kc, kt = jax.random.split(key, 4)

    params = init_params(kp, cfg)
    packed = pack_params(params, cfg)

    idx = jax.random.randint(kidx, (B, T), 0, cfg.vocab_size, dtype=jnp.int32)
    channel_idx = jax.random.randint(kc, (B, T), 0, cfg.num_channels,
                                     dtype=jnp.int32)
    targets = jax.random.randint(kt, (B, T), 0, cfg.vocab_size, dtype=jnp.int32)

    logits, loss = gpt_forward(packed, cfg, idx, channel_idx=channel_idx,
                               targets=targets)
    logits = jax.block_until_ready(logits)
    loss = jax.block_until_ready(loss)

    assert logits.shape == (B, T, cfg.vocab_size)
    assert bool(jnp.isfinite(loss))
    print("KERNEL_OK")
</pallas_src>

<mosaic_0001>
module attributes {stable_mosaic.version = 11 : i64} {
  func.func @_gpt_fwd_kernel(%arg0: i32, %arg1: memref<1x8x32xf32, #tpu.memory_space<vmem>>, %arg2: memref<8x32xf32, #tpu.memory_space<vmem>>, %arg3: memref<1x8x32xf32, #tpu.memory_space<vmem>>, %arg4: memref<32x32xf32, #tpu.memory_space<vmem>>, %arg5: memref<1x32xf32, #tpu.memory_space<vmem>>, %arg6: memref<1x1xf32, #tpu.memory_space<smem>>, %arg7: memref<2x4x32xf32, #tpu.memory_space<vmem>>, %arg8: memref<2x32x96xf32, #tpu.memory_space<vmem>>, %arg9: memref<2x1x96xf32, #tpu.memory_space<vmem>>, %arg10: memref<2x32x32xf32, #tpu.memory_space<vmem>>, %arg11: memref<2x1x32xf32, #tpu.memory_space<vmem>>, %arg12: memref<2x32x128xf32, #tpu.memory_space<vmem>>, %arg13: memref<2x1x128xf32, #tpu.memory_space<vmem>>, %arg14: memref<2x128x32xf32, #tpu.memory_space<vmem>>, %arg15: memref<2x1x32xf32, #tpu.memory_space<vmem>>, %arg16: memref<2x32xf32, #tpu.memory_space<vmem>>, %arg17: memref<32x128xf32, #tpu.memory_space<vmem>>, %arg18: memref<1x8x128xf32, #tpu.memory_space<vmem>>) attributes {dimension_semantics = [#tpu.dimension_semantics<parallel>], iteration_bounds = array<i64: 2>, scalar_prefetch = 0 : i64, scratch_operands = 0 : i64, tpu.core_type = #tpu.core_type<tc>, window_params = [{transform_indices = @transform_0, window_bounds = array<i64: 1, 8, 32>}, {pipeline_mode = #tpu.pipeline_mode<synchronous>, transform_indices = @transform_1, window_bounds = array<i64: 8, 32>}, {transform_indices = @transform_2, window_bounds = array<i64: 1, 8, 32>}, {pipeline_mode = #tpu.pipeline_mode<synchronous>, transform_indices = @transform_3, window_bounds = array<i64: 32, 32>}, {pipeline_mode = #tpu.pipeline_mode<synchronous>, transform_indices = @transform_4, window_bounds = array<i64: 1, 32>}, {transform_indices = @transform_5, window_bounds = array<i64: 1, 1>}, {pipeline_mode = #tpu.pipeline_mode<synchronous>, transform_indices = @transform_6, window_bounds = array<i64: 2, 4, 32>}, {pipeline_mode = #tpu.pipeline_mode<synchronous>, transform_indices = @transform_7, window_bounds = array<i64: 2, 32, 96>}, {pipeline_mode = #tpu.pipeline_mode<synchronous>, transform_indices = @transform_8, window_bounds = array<i64: 2, 1, 96>}, {pipeline_mode = #tpu.pipeline_mode<synchronous>, transform_indices = @transform_9, window_bounds = array<i64: 2, 32, 32>}, {pipeline_mode = #tpu.pipeline_mode<synchronous>, transform_indices = @transform_10, window_bounds = array<i64: 2, 1, 32>}, {pipeline_mode = #tpu.pipeline_mode<synchronous>, transform_indices = @transform_11, window_bounds = array<i64: 2, 32, 128>}, {pipeline_mode = #tpu.pipeline_mode<synchronous>, transform_indices = @transform_12, window_bounds = array<i64: 2, 1, 128>}, {pipeline_mode = #tpu.pipeline_mode<synchronous>, transform_indices = @transform_13, window_bounds = array<i64: 2, 128, 32>}, {pipeline_mode = #tpu.pipeline_mode<synchronous>, transform_indices = @transform_14, window_bounds = array<i64: 2, 1, 32>}, {pipeline_mode = #tpu.pipeline_mode<synchronous>, transform_indices = @transform_15, window_bounds = array<i64: 2, 32>}, {pipeline_mode = #tpu.pipeline_mode<synchronous>, transform_indices = @transform_16, window_bounds = array<i64: 32, 128>}, {transform_indices = @transform_17, window_bounds = array<i64: 1, 8, 128>}]} {
    %c0 = arith.constant 0 : index
    %c0_0 = arith.constant 0 : index
    %c0_1 = arith.constant 0 : index
    %0 = vector.load %arg3[%c0, %c0_0, %c0_1] : memref<1x8x32xf32, #tpu.memory_space<vmem>>, vector<1x8x32xf32>
    %1 = vector.shape_cast %0 : vector<1x8x32xf32> to vector<8x32xf32>
    %c0_2 = arith.constant 0 : index
    %c0_3 = arith.constant 0 : index
    %2 = vector.load %arg4[%c0_2, %c0_3] : memref<32x32xf32, #tpu.memory_space<vmem>>, vector<32x32xf32>
    %cst = arith.constant dense<0.000000e+00> : vector<8x32xf32>
    %3 = tpu.matmul %1, %2, %cst {dimension_numbers = #tpu.dot_dimension_numbers<[1], [0], [0], [1], [0, 0, 1, 1], [], []>} : vector<8x32xf32>, vector<32x32xf32>, vector<8x32xf32> -> vector<8x32xf32>
    %c0_4 = arith.constant 0 : index
    %c0_5 = arith.constant 0 : index
    %4 = vector.load %arg5[%c0_4, %c0_5] : memref<1x32xf32, #tpu.memory_space<vmem>>, vector<1x32xf32>
    %5 = vector.broadcast %4 : vector<1x32xf32> to vector<8x32xf32>
    %6 = arith.addf %3, %5 : vector<8x32xf32>
    %c0_6 = arith.constant 0 : index
    %c0_7 = arith.constant 0 : index
    %c0_8 = arith.constant 0 : index
    %7 = vector.load %arg1[%c0_6, %c0_7, %c0_8] : memref<1x8x32xf32, #tpu.memory_space<vmem>>, vector<1x8x32xf32>
    %8 = vector.shape_cast %7 : vector<1x8x32xf32> to vector<8x32xf32>
    %c0_9 = arith.constant 0 : index
    %c0_10 = arith.constant 0 : index
    %9 = vector.load %arg2[%c0_9, %c0_10] : memref<8x32xf32, #tpu.memory_space<vmem>>, vector<8x32xf32>
    %10 = arith.addf %8, %9 : vector<8x32xf32>
    %c0_11 = arith.constant 0 : index
    %c0_12 = arith.constant 0 : index
    %11 = memref.load %arg6[%c0_11, %c0_12] : memref<1x1xf32, #tpu.memory_space<smem>>
    %12 = vector.broadcast %11 : f32 to vector<8x32xf32>
    %13 = arith.mulf %12, %6 : vector<8x32xf32>
    %14 = arith.addf %10, %13 : vector<8x32xf32>
    %15 = tpu.iota {dimensions = array<i32: 0>} : vector<8x8xi32>
    %16 = tpu.iota {dimensions = array<i32: 1>} : vector<8x8xi32>
    %17 = arith.cmpi sge, %15, %16 : vector<8x8xi32>
    %cst_13 = arith.constant 0.000000e+00 : f32
    %cst_14 = arith.constant -1.000000e+30 : f32
    %18 = vector.broadcast %cst_13 : f32 to vector<8x8xf32>
    %19 = vector.broadcast %cst_14 : f32 to vector<8x8xf32>
    %20 = arith.select %17, %18, %19 : vector<8x8xi1>, vector<8x8xf32>
    %21 = vector.shape_cast %20 : vector<8x8xf32> to vector<1x8x8xf32>
    %c0_15 = arith.constant 0 : index
    %c0_16 = arith.constant 0 : index
    %c0_17 = arith.constant 0 : index
    %22 = vector.load %arg7[%c0_15, %c0_16, %c0_17] : memref<2x4x32xf32, #tpu.memory_space<vmem>>, vector<1x4x32xf32>
    %23 = vector.shape_cast %22 : vector<1x4x32xf32> to vector<4x32xf32>
    %24 = vector.extract_strided_slice %23 {offsets = [0, 0], sizes = [1, 32], strides = [1, 1]} : vector<4x32xf32> to vector<1x32xf32>
    %25 = vector.shape_cast %24 : vector<1x32xf32> to vector<32xf32>
    %26 = vector.extract_strided_slice %23 {offsets = [1, 0], sizes = [1, 32], strides = [1, 1]} : vector<4x32xf32> to vector<1x32xf32>
    %27 = vector.shape_cast %26 : vector<1x32xf32> to vector<32xf32>
    %cst_18 = arith.constant dense<0.000000e+00> : vector<8xf32>
    %28 = vector.multi_reduction <add>, %14, %cst_18 [1] : vector<8x32xf32> to vector<8xf32>
    %29 = vector.shape_cast %28 : vector<8xf32> to vector<8x1xf32>
    %cst_19 = arith.constant 3.200000e+01 : f32
    %30 = vector.broadcast %cst_19 : f32 to vector<8x1xf32>
    %31 = arith.divf %29, %30 : vector<8x1xf32>
    %32 = vector.broadcast %31 : vector<8x1xf32> to vector<8x32xf32>
    %33 = arith.subf %14, %32 : vector<8x32xf32>
    %34 = arith.mulf %33, %33 : vector<8x32xf32>
    %cst_20 = arith.constant dense<0.000000e+00> : vector<8xf32>
    %35 = vector.multi_reduction <add>, %34, %cst_20 [1] : vector<8x32xf32> to vector<8xf32>
    %36 = vector.shape_cast %35 : vector<8xf32> to vector<8x1xf32>
    %cst_21 = arith.constant 3.200000e+01 : f32
    %37 = vector.broadcast %cst_21 : f32 to vector<8x1xf32>
    %38 = arith.divf %36, %37 : vector<8x1xf32>
    %cst_22 = arith.constant 9.99999974E-6 : f32
    %39 = vector.broadcast %cst_22 : f32 to vector<8x1xf32>
    %40 = arith.addf %38, %39 : vector<8x1xf32>
    %41 = math.rsqrt %40 : vector<8x1xf32>
    %42 = vector.broadcast %41 : vector<8x1xf32> to vector<8x32xf32>
    %43 = arith.mulf %33, %42 : vector<8x32xf32>
    %44 = vector.shape_cast %25 : vector<32xf32> to vector<1x32xf32>
    %45 = vector.broadcast %44 : vector<1x32xf32> to vector<8x32xf32>
    %46 = arith.mulf %43, %45 : vector<8x32xf32>
    %47 = vector.shape_cast %27 : vector<32xf32> to vector<1x32xf32>
    %48 = vector.broadcast %47 : vector<1x32xf32> to vector<8x32xf32>
    %49 = arith.addf %46, %48 : vector<8x32xf32>
    %c0_23 = arith.constant 0 : index
    %c0_24 = arith.constant 0 : index
    %c0_25 = arith.constant 0 : index
    %50 = vector.load %arg8[%c0_23, %c0_24, %c0_25] : memref<2x32x96xf32, #tpu.memory_space<vmem>>, vector<1x32x96xf32>
    %51 = vector.shape_cast %50 : vector<1x32x96xf32> to vector<32x96xf32>
    %cst_26 = arith.constant dense<0.000000e+00> : vector<8x96xf32>
    %52 = tpu.matmul %49, %51, %cst_26 {dimension_numbers = #tpu.dot_dimension_numbers<[1], [0], [0], [1], [0, 0, 1, 1], [], []>} : vector<8x32xf32>, vector<32x96xf32>, vector<8x96xf32> -> vector<8x96xf32>
    %c0_27 = arith.constant 0 : index
    %c0_28 = arith.constant 0 : index
    %c0_29 = arith.constant 0 : index
    %53 = vector.load %arg9[%c0_27, %c0_28, %c0_29] : memref<2x1x96xf32, #tpu.memory_space<vmem>>, vector<1x1x96xf32>
    %54 = vector.shape_cast %53 : vector<1x1x96xf32> to vector<1x96xf32>
    %55 = vector.broadcast %54 : vector<1x96xf32> to vector<8x96xf32>
    %56 = arith.addf %52, %55 : vector<8x96xf32>
    %57 = vector.extract_strided_slice %56 {offsets = [0, 0], sizes = [8, 32], strides = [1, 1]} : vector<8x96xf32> to vector<8x32xf32>
    %58 = vector.shape_cast %57 : vector<8x32xf32> to vector<8x4x8xf32>
    %59 = vector.extract_strided_slice %56 {offsets = [0, 32], sizes = [8, 32], strides = [1, 1]} : vector<8x96xf32> to vector<8x32xf32>
    %60 = vector.shape_cast %59 : vector<8x32xf32> to vector<8x4x8xf32>
    %61 = vector.extract_strided_slice %56 {offsets = [0, 64], sizes = [8, 32], strides = [1, 1]} : vector<8x96xf32> to vector<8x32xf32>
    %62 = vector.shape_cast %61 : vector<8x32xf32> to vector<8x4x8xf32>
    "tpu.trace_start"() <{level = 10 : i32, message = "qhd,khd->hqk"}> : () -> ()
    %cst_30 = arith.constant dense<0.000000e+00> : vector<4x8x8xf32>
    %63 = tpu.matmul %58, %60, %cst_30 {dimension_numbers = #tpu.dot_dimension_numbers<[2], [2], [0], [0], [0, 1, 0, 0, 1, 0], [1], [1]>} : vector<8x4x8xf32>, vector<8x4x8xf32>, vector<4x8x8xf32> -> vector<4x8x8xf32>
    "tpu.trace_stop"() : () -> ()
    %cst_31 = arith.constant 0.353553385 : f32
    %64 = vector.broadcast %cst_31 : f32 to vector<4x8x8xf32>
    %65 = arith.mulf %63, %64 : vector<4x8x8xf32>
    %66 = vector.broadcast %21 : vector<1x8x8xf32> to vector<4x8x8xf32>
    %67 = arith.addf %65, %66 : vector<4x8x8xf32>
    %cst_32 = arith.constant dense<0xFF800000> : vector<4x8xf32>
    %68 = vector.multi_reduction <maximumf>, %67, %cst_32 [2] : vector<4x8x8xf32> to vector<4x8xf32>
    %69 = vector.shape_cast %68 : vector<4x8xf32> to vector<4x8x1xf32>
    %70 = vector.broadcast %69 : vector<4x8x1xf32> to vector<4x8x8xf32>
    %71 = arith.subf %67, %70 : vector<4x8x8xf32>
    %72 = math.exp %71 : vector<4x8x8xf32>
    %cst_33 = arith.constant dense<0.000000e+00> : vector<4x8xf32>
    %73 = vector.multi_reduction <add>, %72, %cst_33 [2] : vector<4x8x8xf32> to vector<4x8xf32>
    %74 = vector.shape_cast %73 : vector<4x8xf32> to vector<4x8x1xf32>
    %75 = vector.broadcast %74 : vector<4x8x1xf32> to vector<4x8x8xf32>
    %76 = arith.divf %72, %75 : vector<4x8x8xf32>
    "tpu.trace_start"() <{level = 10 : i32, message = "hqk,khd->qhd"}> : () -> ()
    %cst_34 = arith.constant dense<0.000000e+00> : vector<4x8x8xf32>
    %77 = tpu.matmul %62, %76, %cst_34 {dimension_numbers = #tpu.dot_dimension_numbers<[0], [2], [2], [1], [0, 1, 0, 2, 1, 1], [1], [0]>} : vector<8x4x8xf32>, vector<4x8x8xf32>, vector<4x8x8xf32> -> vector<4x8x8xf32>
    %78 = tpu.transpose %77, [2, 0, 1] : vector<4x8x8xf32> -> vector<8x4x8xf32>
    "tpu.trace_stop"() : () -> ()
    %79 = vector.shape_cast %78 : vector<8x4x8xf32> to vector<8x32xf32>
    %c0_35 = arith.constant 0 : index
    %c0_36 = arith.constant 0 : index
    %c0_37 = arith.constant 0 : index
    %80 = vector.load %arg10[%c0_35, %c0_36, %c0_37] : memref<2x32x32xf32, #tpu.memory_space<vmem>>, vector<1x32x32xf32>
    %81 = vector.shape_cast %80 : vector<1x32x32xf32> to vector<32x32xf32>
    %cst_38 = arith.constant dense<0.000000e+00> : vector<8x32xf32>
    %82 = tpu.matmul %79, %81, %cst_38 {dimension_numbers = #tpu.dot_dimension_numbers<[1], [0], [0], [1], [0, 0, 1, 1], [], []>} : vector<8x32xf32>, vector<32x32xf32>, vector<8x32xf32> -> vector<8x32xf32>
    %c0_39 = arith.constant 0 : index
    %c0_40 = arith.constant 0 : index
    %c0_41 = arith.constant 0 : index
    %83 = vector.load %arg11[%c0_39, %c0_40, %c0_41] : memref<2x1x32xf32, #tpu.memory_space<vmem>>, vector<1x1x32xf32>
    %84 = vector.shape_cast %83 : vector<1x1x32xf32> to vector<1x32xf32>
    %85 = vector.broadcast %84 : vector<1x32xf32> to vector<8x32xf32>
    %86 = arith.addf %82, %85 : vector<8x32xf32>
    %87 = arith.addf %14, %86 : vector<8x32xf32>
    %88 = vector.extract_strided_slice %23 {offsets = [2, 0], sizes = [1, 32], strides = [1, 1]} : vector<4x32xf32> to vector<1x32xf32>
    %89 = vector.shape_cast %88 : vector<1x32xf32> to vector<32xf32>
    %90 = vector.extract_strided_slice %23 {offsets = [3, 0], sizes = [1, 32], strides = [1, 1]} : vector<4x32xf32> to vector<1x32xf32>
    %91 = vector.shape_cast %90 : vector<1x32xf32> to vector<32xf32>
    %cst_42 = arith.constant dense<0.000000e+00> : vector<8xf32>
    %92 = vector.multi_reduction <add>, %87, %cst_42 [1] : vector<8x32xf32> to vector<8xf32>
    %93 = vector.shape_cast %92 : vector<8xf32> to vector<8x1xf32>
    %cst_43 = arith.constant 3.200000e+01 : f32
    %94 = vector.broadcast %cst_43 : f32 to vector<8x1xf32>
    %95 = arith.divf %93, %94 : vector<8x1xf32>
    %96 = vector.broadcast %95 : vector<8x1xf32> to vector<8x32xf32>
    %97 = arith.subf %87, %96 : vector<8x32xf32>
    %98 = arith.mulf %97, %97 : vector<8x32xf32>
    %cst_44 = arith.constant dense<0.000000e+00> : vector<8xf32>
    %99 = vector.multi_reduction <add>, %98, %cst_44 [1] : vector<8x32xf32> to vector<8xf32>
    %100 = vector.shape_cast %99 : vector<8xf32> to vector<8x1xf32>
    %cst_45 = arith.constant 3.200000e+01 : f32
    %101 = vector.broadcast %cst_45 : f32 to vector<8x1xf32>
    %102 = arith.divf %100, %101 : vector<8x1xf32>
    %cst_46 = arith.constant 9.99999974E-6 : f32
    %103 = vector.broadcast %cst_46 : f32 to vector<8x1xf32>
    %104 = arith.addf %102, %103 : vector<8x1xf32>
    %105 = math.rsqrt %104 : vector<8x1xf32>
    %106 = vector.broadcast %105 : vector<8x1xf32> to vector<8x32xf32>
    %107 = arith.mulf %97, %106 : vector<8x32xf32>
    %108 = vector.shape_cast %89 : vector<32xf32> to vector<1x32xf32>
    %109 = vector.broadcast %108 : vector<1x32xf32> to vector<8x32xf32>
    %110 = arith.mulf %107, %109 : vector<8x32xf32>
    %111 = vector.shape_cast %91 : vector<32xf32> to vector<1x32xf32>
    %112 = vector.broadcast %111 : vector<1x32xf32> to vector<8x32xf32>
    %113 = arith.addf %110, %112 : vector<8x32xf32>
    %c0_47 = arith.constant 0 : index
    %c0_48 = arith.constant 0 : index
    %c0_49 = arith.constant 0 : index
    %114 = vector.load %arg12[%c0_47, %c0_48, %c0_49] : memref<2x32x128xf32, #tpu.memory_space<vmem>>, vector<1x32x128xf32>
    %115 = vector.shape_cast %114 : vector<1x32x128xf32> to vector<32x128xf32>
    %cst_50 = arith.constant dense<0.000000e+00> : vector<8x128xf32>
    %116 = tpu.matmul %113, %115, %cst_50 {dimension_numbers = #tpu.dot_dimension_numbers<[1], [0], [0], [1], [0, 0, 1, 1], [], []>} : vector<8x32xf32>, vector<32x128xf32>, vector<8x128xf32> -> vector<8x128xf32>
    %c0_51 = arith.constant 0 : index
    %c0_52 = arith.constant 0 : index
    %c0_53 = arith.constant 0 : index
    %117 = vector.load %arg13[%c0_51, %c0_52, %c0_53] : memref<2x1x128xf32, #tpu.memory_space<vmem>>, vector<1x1x128xf32>
    %118 = vector.shape_cast %117 : vector<1x1x128xf32> to vector<1x128xf32>
    %119 = vector.broadcast %118 : vector<1x128xf32> to vector<8x128xf32>
    %120 = arith.addf %116, %119 : vector<8x128xf32>
    %cst_54 = arith.constant 5.000000e-01 : f32
    %121 = vector.broadcast %cst_54 : f32 to vector<8x128xf32>
    %122 = arith.mulf %121, %120 : vector<8x128xf32>
    %cst_55 = arith.constant 4.471500e-02 : f32
    %123 = vector.broadcast %cst_55 : f32 to vector<8x128xf32>
    %124 = arith.mulf %123, %120 : vector<8x128xf32>
    %125 = arith.mulf %124, %120 : vector<8x128xf32>
    %126 = arith.mulf %125, %120 : vector<8x128xf32>
    %127 = arith.addf %120, %126 : vector<8x128xf32>
    %cst_56 = arith.constant 0.797884583 : f32
    %128 = vector.broadcast %cst_56 : f32 to vector<8x128xf32>
    %129 = arith.mulf %128, %127 : vector<8x128xf32>
    %130 = math.tanh %129 : vector<8x128xf32>
    %cst_57 = arith.constant 1.000000e+00 : f32
    %131 = vector.broadcast %cst_57 : f32 to vector<8x128xf32>
    %132 = arith.addf %131, %130 : vector<8x128xf32>
    %133 = arith.mulf %122, %132 : vector<8x128xf32>
    %c0_58 = arith.constant 0 : index
    %c0_59 = arith.constant 0 : index
    %c0_60 = arith.constant 0 : index
    %134 = vector.load %arg14[%c0_58, %c0_59, %c0_60] : memref<2x128x32xf32, #tpu.memory_space<vmem>>, vector<1x128x32xf32>
    %135 = vector.shape_cast %134 : vector<1x128x32xf32> to vector<128x32xf32>
    %cst_61 = arith.constant dense<0.000000e+00> : vector<8x32xf32>
    %136 = tpu.matmul %133, %135, %cst_61 {dimension_numbers = #tpu.dot_dimension_numbers<[1], [0], [0], [1], [0, 0, 1, 1], [], []>} : vector<8x128xf32>, vector<128x32xf32>, vector<8x32xf32> -> vector<8x32xf32>
    %c0_62 = arith.constant 0 : index
    %c0_63 = arith.constant 0 : index
    %c0_64 = arith.constant 0 : index
    %137 = vector.load %arg15[%c0_62, %c0_63, %c0_64] : memref<2x1x32xf32, #tpu.memory_space<vmem>>, vector<1x1x32xf32>
    %138 = vector.shape_cast %137 : vector<1x1x32xf32> to vector<1x32xf32>
    %139 = vector.broadcast %138 : vector<1x32xf32> to vector<8x32xf32>
    %140 = arith.addf %136, %139 : vector<8x32xf32>
    %141 = arith.addf %87, %140 : vector<8x32xf32>
    %c1 = arith.constant 1 : index
    %c0_65 = arith.constant 0 : index
    %c0_66 = arith.constant 0 : index
    %142 = vector.load %arg7[%c1, %c0_65, %c0_66] : memref<2x4x32xf32, #tpu.memory_space<vmem>>, vector<1x4x32xf32>
    %143 = vector.shape_cast %142 : vector<1x4x32xf32> to vector<4x32xf32>
    %144 = vector.extract_strided_slice %143 {offsets = [0, 0], sizes = [1, 32], strides = [1, 1]} : vector<4x32xf32> to vector<1x32xf32>
    %145 = vector.shape_cast %144 : vector<1x32xf32> to vector<32xf32>
    %146 = vector.extract_strided_slice %143 {offsets = [1, 0], sizes = [1, 32], strides = [1, 1]} : vector<4x32xf32> to vector<1x32xf32>
    %147 = vector.shape_cast %146 : vector<1x32xf32> to vector<32xf32>
    %cst_67 = arith.constant dense<0.000000e+00> : vector<8xf32>
    %148 = vector.multi_reduction <add>, %141, %cst_67 [1] : vector<8x32xf32> to vector<8xf32>
    %149 = vector.shape_cast %148 : vector<8xf32> to vector<8x1xf32>
    %cst_68 = arith.constant 3.200000e+01 : f32
    %150 = vector.broadcast %cst_68 : f32 to vector<8x1xf32>
    %151 = arith.divf %149, %150 : vector<8x1xf32>
    %152 = vector.broadcast %151 : vector<8x1xf32> to vector<8x32xf32>
    %153 = arith.subf %141, %152 : vector<8x32xf32>
    %154 = arith.mulf %153, %153 : vector<8x32xf32>
    %cst_69 = arith.constant dense<0.000000e+00> : vector<8xf32>
    %155 = vector.multi_reduction <add>, %154, %cst_69 [1] : vector<8x32xf32> to vector<8xf32>
    %156 = vector.shape_cast %155 : vector<8xf32> to vector<8x1xf32>
    %cst_70 = arith.constant 3.200000e+01 : f32
    %157 = vector.broadcast %cst_70 : f32 to vector<8x1xf32>
    %158 = arith.divf %156, %157 : vector<8x1xf32>
    %cst_71 = arith.constant 9.99999974E-6 : f32
    %159 = vector.broadcast %cst_71 : f32 to vector<8x1xf32>
    %160 = arith.addf %158, %159 : vector<8x1xf32>
    %161 = math.rsqrt %160 : vector<8x1xf32>
    %162 = vector.broadcast %161 : vector<8x1xf32> to vector<8x32xf32>
    %163 = arith.mulf %153, %162 : vector<8x32xf32>
    %164 = vector.shape_cast %145 : vector<32xf32> to vector<1x32xf32>
    %165 = vector.broadcast %164 : vector<1x32xf32> to vector<8x32xf32>
    %166 = arith.mulf %163, %165 : vector<8x32xf32>
    %167 = vector.shape_cast %147 : vector<32xf32> to vector<1x32xf32>
    %168 = vector.broadcast %167 : vector<1x32xf32> to vector<8x32xf32>
    %169 = arith.addf %166, %168 : vector<8x32xf32>
    %c1_72 = arith.constant 1 : index
    %c0_73 = arith.constant 0 : index
    %c0_74 = arith.constant 0 : index
    %170 = vector.load %arg8[%c1_72, %c0_73, %c0_74] : memref<2x32x96xf32, #tpu.memory_space<vmem>>, vector<1x32x96xf32>
    %171 = vector.shape_cast %170 : vector<1x32x96xf32> to vector<32x96xf32>
    %cst_75 = arith.constant dense<0.000000e+00> : vector<8x96xf32>
    %172 = tpu.matmul %169, %171, %cst_75 {dimension_numbers = #tpu.dot_dimension_numbers<[1], [0], [0], [1], [0, 0, 1, 1], [], []>} : vector<8x32xf32>, vector<32x96xf32>, vector<8x96xf32> -> vector<8x96xf32>
    %c1_76 = arith.constant 1 : index
    %c0_77 = arith.constant 0 : index
    %c0_78 = arith.constant 0 : index
    %173 = vector.load %arg9[%c1_76, %c0_77, %c0_78] : memref<2x1x96xf32, #tpu.memory_space<vmem>>, vector<1x1x96xf32>
    %174 = vector.shape_cast %173 : vector<1x1x96xf32> to vector<1x96xf32>
    %175 = vector.broadcast %174 : vector<1x96xf32> to vector<8x96xf32>
    %176 = arith.addf %172, %175 : vector<8x96xf32>
    %177 = vector.extract_strided_slice %176 {offsets = [0, 0], sizes = [8, 32], strides = [1, 1]} : vector<8x96xf32> to vector<8x32xf32>
    %178 = vector.shape_cast %177 : vector<8x32xf32> to vector<8x4x8xf32>
    %179 = vector.extract_strided_slice %176 {offsets = [0, 32], sizes = [8, 32], strides = [1, 1]} : vector<8x96xf32> to vector<8x32xf32>
    %180 = vector.shape_cast %179 : vector<8x32xf32> to vector<8x4x8xf32>
    %181 = vector.extract_strided_slice %176 {offsets = [0, 64], sizes = [8, 32], strides = [1, 1]} : vector<8x96xf32> to vector<8x32xf32>
    %182 = vector.shape_cast %181 : vector<8x32xf32> to vector<8x4x8xf32>
    "tpu.trace_start"() <{level = 10 : i32, message = "qhd,khd->hqk"}> : () -> ()
    %cst_79 = arith.constant dense<0.000000e+00> : vector<4x8x8xf32>
    %183 = tpu.matmul %178, %180, %cst_79 {dimension_numbers = #tpu.dot_dimension_numbers<[2], [2], [0], [0], [0, 1, 0, 0, 1, 0], [1], [1]>} : vector<8x4x8xf32>, vector<8x4x8xf32>, vector<4x8x8xf32> -> vector<4x8x8xf32>
    "tpu.trace_stop"() : () -> ()
    %cst_80 = arith.constant 0.353553385 : f32
    %184 = vector.broadcast %cst_80 : f32 to vector<4x8x8xf32>
    %185 = arith.mulf %183, %184 : vector<4x8x8xf32>
    %186 = vector.broadcast %21 : vector<1x8x8xf32> to vector<4x8x8xf32>
    %187 = arith.addf %185, %186 : vector<4x8x8xf32>
    %cst_81 = arith.constant dense<0xFF800000> : vector<4x8xf32>
    %188 = vector.multi_reduction <maximumf>, %187, %cst_81 [2] : vector<4x8x8xf32> to vector<4x8xf32>
    %189 = vector.shape_cast %188 : vector<4x8xf32> to vector<4x8x1xf32>
    %190 = vector.broadcast %189 : vector<4x8x1xf32> to vector<4x8x8xf32>
    %191 = arith.subf %187, %190 : vector<4x8x8xf32>
    %192 = math.exp %191 : vector<4x8x8xf32>
    %cst_82 = arith.constant dense<0.000000e+00> : vector<4x8xf32>
    %193 = vector.multi_reduction <add>, %192, %cst_82 [2] : vector<4x8x8xf32> to vector<4x8xf32>
    %194 = vector.shape_cast %193 : vector<4x8xf32> to vector<4x8x1xf32>
    %195 = vector.broadcast %194 : vector<4x8x1xf32> to vector<4x8x8xf32>
    %196 = arith.divf %192, %195 : vector<4x8x8xf32>
    "tpu.trace_start"() <{level = 10 : i32, message = "hqk,khd->qhd"}> : () -> ()
    %cst_83 = arith.constant dense<0.000000e+00> : vector<4x8x8xf32>
    %197 = tpu.matmul %182, %196, %cst_83 {dimension_numbers = #tpu.dot_dimension_numbers<[0], [2], [2], [1], [0, 1, 0, 2, 1, 1], [1], [0]>} : vector<8x4x8xf32>, vector<4x8x8xf32>, vector<4x8x8xf32> -> vector<4x8x8xf32>
    %198 = tpu.transpose %197, [2, 0, 1] : vector<4x8x8xf32> -> vector<8x4x8xf32>
    "tpu.trace_stop"() : () -> ()
    %199 = vector.shape_cast %198 : vector<8x4x8xf32> to vector<8x32xf32>
    %c1_84 = arith.constant 1 : index
    %c0_85 = arith.constant 0 : index
    %c0_86 = arith.constant 0 : index
    %200 = vector.load %arg10[%c1_84, %c0_85, %c0_86] : memref<2x32x32xf32, #tpu.memory_space<vmem>>, vector<1x32x32xf32>
    %201 = vector.shape_cast %200 : vector<1x32x32xf32> to vector<32x32xf32>
    %cst_87 = arith.constant dense<0.000000e+00> : vector<8x32xf32>
    %202 = tpu.matmul %199, %201, %cst_87 {dimension_numbers = #tpu.dot_dimension_numbers<[1], [0], [0], [1], [0, 0, 1, 1], [], []>} : vector<8x32xf32>, vector<32x32xf32>, vector<8x32xf32> -> vector<8x32xf32>
    %c1_88 = arith.constant 1 : index
    %c0_89 = arith.constant 0 : index
    %c0_90 = arith.constant 0 : index
    %203 = vector.load %arg11[%c1_88, %c0_89, %c0_90] : memref<2x1x32xf32, #tpu.memory_space<vmem>>, vector<1x1x32xf32>
    %204 = vector.shape_cast %203 : vector<1x1x32xf32> to vector<1x32xf32>
    %205 = vector.broadcast %204 : vector<1x32xf32> to vector<8x32xf32>
    %206 = arith.addf %202, %205 : vector<8x32xf32>
    %207 = arith.addf %141, %206 : vector<8x32xf32>
    %208 = vector.extract_strided_slice %143 {offsets = [2, 0], sizes = [1, 32], strides = [1, 1]} : vector<4x32xf32> to vector<1x32xf32>
    %209 = vector.shape_cast %208 : vector<1x32xf32> to vector<32xf32>
    %210 = vector.extract_strided_slice %143 {offsets = [3, 0], sizes = [1, 32], strides = [1, 1]} : vector<4x32xf32> to vector<1x32xf32>
    %211 = vector.shape_cast %210 : vector<1x32xf32> to vector<32xf32>
    %cst_91 = arith.constant dense<0.000000e+00> : vector<8xf32>
    %212 = vector.multi_reduction <add>, %207, %cst_91 [1] : vector<8x32xf32> to vector<8xf32>
    %213 = vector.shape_cast %212 : vector<8xf32> to vector<8x1xf32>
    %cst_92 = arith.constant 3.200000e+01 : f32
    %214 = vector.broadcast %cst_92 : f32 to vector<8x1xf32>
    %215 = arith.divf %213, %214 : vector<8x1xf32>
    %216 = vector.broadcast %215 : vector<8x1xf32> to vector<8x32xf32>
    %217 = arith.subf %207, %216 : vector<8x32xf32>
    %218 = arith.mulf %217, %217 : vector<8x32xf32>
    %cst_93 = arith.constant dense<0.000000e+00> : vector<8xf32>
    %219 = vector.multi_reduction <add>, %218, %cst_93 [1] : vector<8x32xf32> to vector<8xf32>
    %220 = vector.shape_cast %219 : vector<8xf32> to vector<8x1xf32>
    %cst_94 = arith.constant 3.200000e+01 : f32
    %221 = vector.broadcast %cst_94 : f32 to vector<8x1xf32>
    %222 = arith.divf %220, %221 : vector<8x1xf32>
    %cst_95 = arith.constant 9.99999974E-6 : f32
    %223 = vector.broadcast %cst_95 : f32 to vector<8x1xf32>
    %224 = arith.addf %222, %223 : vector<8x1xf32>
    %225 = math.rsqrt %224 : vector<8x1xf32>
    %226 = vector.broadcast %225 : vector<8x1xf32> to vector<8x32xf32>
    %227 = arith.mulf %217, %226 : vector<8x32xf32>
    %228 = vector.shape_cast %209 : vector<32xf32> to vector<1x32xf32>
    %229 = vector.broadcast %228 : vector<1x32xf32> to vector<8x32xf32>
    %230 = arith.mulf %227, %229 : vector<8x32xf32>
    %231 = vector.shape_cast %211 : vector<32xf32> to vector<1x32xf32>
    %232 = vector.broadcast %231 : vector<1x32xf32> to vector<8x32xf32>
    %233 = arith.addf %230, %232 : vector<8x32xf32>
    %c1_96 = arith.constant 1 : index
    %c0_97 = arith.constant 0 : index
    %c0_98 = arith.constant 0 : index
    %234 = vector.load %arg12[%c1_96, %c0_97, %c0_98] : memref<2x32x128xf32, #tpu.memory_space<vmem>>, vector<1x32x128xf32>
    %235 = vector.shape_cast %234 : vector<1x32x128xf32> to vector<32x128xf32>
    %cst_99 = arith.constant dense<0.000000e+00> : vector<8x128xf32>
    %236 = tpu.matmul %233, %235, %cst_99 {dimension_numbers = #tpu.dot_dimension_numbers<[1], [0], [0], [1], [0, 0, 1, 1], [], []>} : vector<8x32xf32>, vector<32x128xf32>, vector<8x128xf32> -> vector<8x128xf32>
    %c1_100 = arith.constant 1 : index
    %c0_101 = arith.constant 0 : index
    %c0_102 = arith.constant 0 : index
    %237 = vector.load %arg13[%c1_100, %c0_101, %c0_102] : memref<2x1x128xf32, #tpu.memory_space<vmem>>, vector<1x1x128xf32>
    %238 = vector.shape_cast %237 : vector<1x1x128xf32> to vector<1x128xf32>
    %239 = vector.broadcast %238 : vector<1x128xf32> to vector<8x128xf32>
    %240 = arith.addf %236, %239 : vector<8x128xf32>
    %cst_103 = arith.constant 5.000000e-01 : f32
    %241 = vector.broadcast %cst_103 : f32 to vector<8x128xf32>
    %242 = arith.mulf %241, %240 : vector<8x128xf32>
    %cst_104 = arith.constant 4.471500e-02 : f32
    %243 = vector.broadcast %cst_104 : f32 to vector<8x128xf32>
    %244 = arith.mulf %243, %240 : vector<8x128xf32>
    %245 = arith.mulf %244, %240 : vector<8x128xf32>
    %246 = arith.mulf %245, %240 : vector<8x128xf32>
    %247 = arith.addf %240, %246 : vector<8x128xf32>
    %cst_105 = arith.constant 0.797884583 : f32
    %248 = vector.broadcast %cst_105 : f32 to vector<8x128xf32>
    %249 = arith.mulf %248, %247 : vector<8x128xf32>
    %250 = math.tanh %249 : vector<8x128xf32>
    %cst_106 = arith.constant 1.000000e+00 : f32
    %251 = vector.broadcast %cst_106 : f32 to vector<8x128xf32>
    %252 = arith.addf %251, %250 : vector<8x128xf32>
    %253 = arith.mulf %242, %252 : vector<8x128xf32>
    %c1_107 = arith.constant 1 : index
    %c0_108 = arith.constant 0 : index
    %c0_109 = arith.constant 0 : index
    %254 = vector.load %arg14[%c1_107, %c0_108, %c0_109] : memref<2x128x32xf32, #tpu.memory_space<vmem>>, vector<1x128x32xf32>
    %255 = vector.shape_cast %254 : vector<1x128x32xf32> to vector<128x32xf32>
    %cst_110 = arith.constant dense<0.000000e+00> : vector<8x32xf32>
    %256 = tpu.matmul %253, %255, %cst_110 {dimension_numbers = #tpu.dot_dimension_numbers<[1], [0], [0], [1], [0, 0, 1, 1], [], []>} : vector<8x128xf32>, vector<128x32xf32>, vector<8x32xf32> -> vector<8x32xf32>
    %c1_111 = arith.constant 1 : index
    %c0_112 = arith.constant 0 : index
    %c0_113 = arith.constant 0 : index
    %257 = vector.load %arg15[%c1_111, %c0_112, %c0_113] : memref<2x1x32xf32, #tpu.memory_space<vmem>>, vector<1x1x32xf32>
    %258 = vector.shape_cast %257 : vector<1x1x32xf32> to vector<1x32xf32>
    %259 = vector.broadcast %258 : vector<1x32xf32> to vector<8x32xf32>
    %260 = arith.addf %256, %259 : vector<8x32xf32>
    %261 = arith.addf %207, %260 : vector<8x32xf32>
    %c0_114 = arith.constant 0 : index
    %c0_115 = arith.constant 0 : index
    %262 = vector.load %arg16[%c0_114, %c0_115] : memref<2x32xf32, #tpu.memory_space<vmem>>, vector<1x32xf32>
    %263 = vector.shape_cast %262 : vector<1x32xf32> to vector<32xf32>
    %c1_116 = arith.constant 1 : index
    %c0_117 = arith.constant 0 : index
    %264 = vector.load %arg16[%c1_116, %c0_117] : memref<2x32xf32, #tpu.memory_space<vmem>>, vector<1x32xf32>
    %265 = vector.shape_cast %264 : vector<1x32xf32> to vector<32xf32>
    %cst_118 = arith.constant dense<0.000000e+00> : vector<8xf32>
    %266 = vector.multi_reduction <add>, %261, %cst_118 [1] : vector<8x32xf32> to vector<8xf32>
    %267 = vector.shape_cast %266 : vector<8xf32> to vector<8x1xf32>
    %cst_119 = arith.constant 3.200000e+01 : f32
    %268 = vector.broadcast %cst_119 : f32 to vector<8x1xf32>
    %269 = arith.divf %267, %268 : vector<8x1xf32>
    %270 = vector.broadcast %269 : vector<8x1xf32> to vector<8x32xf32>
    %271 = arith.subf %261, %270 : vector<8x32xf32>
    %272 = arith.mulf %271, %271 : vector<8x32xf32>
    %cst_120 = arith.constant dense<0.000000e+00> : vector<8xf32>
    %273 = vector.multi_reduction <add>, %272, %cst_120 [1] : vector<8x32xf32> to vector<8xf32>
    %274 = vector.shape_cast %273 : vector<8xf32> to vector<8x1xf32>
    %cst_121 = arith.constant 3.200000e+01 : f32
    %275 = vector.broadcast %cst_121 : f32 to vector<8x1xf32>
    %276 = arith.divf %274, %275 : vector<8x1xf32>
    %cst_122 = arith.constant 9.99999974E-6 : f32
    %277 = vector.broadcast %cst_122 : f32 to vector<8x1xf32>
    %278 = arith.addf %276, %277 : vector<8x1xf32>
    %279 = math.rsqrt %278 : vector<8x1xf32>
    %280 = vector.broadcast %279 : vector<8x1xf32> to vector<8x32xf32>
    %281 = arith.mulf %271, %280 : vector<8x32xf32>
    %282 = vector.shape_cast %263 : vector<32xf32> to vector<1x32xf32>
    %283 = vector.broadcast %282 : vector<1x32xf32> to vector<8x32xf32>
    %284 = arith.mulf %281, %283 : vector<8x32xf32>
    %285 = vector.shape_cast %265 : vector<32xf32> to vector<1x32xf32>
    %286 = vector.broadcast %285 : vector<1x32xf32> to vector<8x32xf32>
    %287 = arith.addf %284, %286 : vector<8x32xf32>
    %c0_123 = arith.constant 0 : index
    %c0_124 = arith.constant 0 : index
    %288 = vector.load %arg17[%c0_123, %c0_124] : memref<32x128xf32, #tpu.memory_space<vmem>>, vector<32x128xf32>
    %cst_125 = arith.constant dense<0.000000e+00> : vector<8x128xf32>
    %289 = tpu.matmul %287, %288, %cst_125 {dimension_numbers = #tpu.dot_dimension_numbers<[1], [0], [0], [1], [0, 0, 1, 1], [], []>} : vector<8x32xf32>, vector<32x128xf32>, vector<8x128xf32> -> vector<8x128xf32>
    %c0_126 = arith.constant 0 : index
    %c0_127 = arith.constant 0 : index
    %c0_128 = arith.constant 0 : index
    %290 = vector.load %arg18[%c0_126, %c0_127, %c0_128] : memref<1x8x128xf32, #tpu.memory_space<vmem>>, vector<1x8x128xf32>
    %291 = vector.shape_cast %290 : vector<1x8x128xf32> to vector<8x128xf32>
    %292 = vector.shape_cast %289 : vector<8x128xf32> to vector<1x8x128xf32>
    tpu.vector_store %arg18[%c0_126, %c0_127, %c0_128], %292 {strides = array<i32>} : memref<1x8x128xf32, #tpu.memory_space<vmem>>, vector<1x8x128xf32>,
    return
  }
  func.func @transform_0(%arg0: i32) -> (i32, i32, i32) {
    %c0_i32 = arith.constant 0 : i32
    %c0_i32_0 = arith.constant 0 : i32
    %c0_i32_1 = arith.constant 0 : i32
    return %arg0, %c0_i32, %c0_i32_0 : i32, i32, i32
  }
  func.func @transform_1(%arg0: i32) -> (i32, i32) {
    %c0_i32 = arith.constant 0 : i32
    %c0_i32_0 = arith.constant 0 : i32
    %c0_i32_1 = arith.constant 0 : i32
    return %c0_i32, %c0_i32_0 : i32, i32
  }
  func.func @transform_2(%arg0: i32) -> (i32, i32, i32) {
    %c0_i32 = arith.constant 0 : i32
    %c0_i32_0 = arith.constant 0 : i32
    %c0_i32_1 = arith.constant 0 : i32
    return %arg0, %c0_i32, %c0_i32_0 : i32, i32, i32
  }
  func.func @transform_3(%arg0: i32) -> (i32, i32) {
    %c0_i32 = arith.constant 0 : i32
    %c0_i32_0 = arith.constant 0 : i32
    %c0_i32_1 = arith.constant 0 : i32
    return %c0_i32, %c0_i32_0 : i32, i32
  }
  func.func @transform_4(%arg0: i32) -> (i32, i32) {
    %c0_i32 = arith.constant 0 : i32
    %c0_i32_0 = arith.constant 0 : i32
    %c0_i32_1 = arith.constant 0 : i32
    return %c0_i32, %c0_i32_0 : i32, i32
  }
  func.func @transform_5(%arg0: i32) -> (i32, i32) {
    %c0_i32 = arith.constant 0 : i32
    %c0_i32_0 = arith.constant 0 : i32
    %c0_i32_1 = arith.constant 0 : i32
    return %c0_i32, %c0_i32_0 : i32, i32
  }
  func.func @transform_6(%arg0: i32) -> (i32, i32, i32) {
    %c0_i32 = arith.constant 0 : i32
    %c0_i32_0 = arith.constant 0 : i32
    %c0_i32_1 = arith.constant 0 : i32
    %c0_i32_2 = arith.constant 0 : i32
    return %c0_i32, %c0_i32_0, %c0_i32_1 : i32, i32, i32
  }
  func.func @transform_7(%arg0: i32) -> (i32, i32, i32) {
    %c0_i32 = arith.constant 0 : i32
    %c0_i32_0 = arith.constant 0 : i32
    %c0_i32_1 = arith.constant 0 : i32
    %c0_i32_2 = arith.constant 0 : i32
    return %c0_i32, %c0_i32_0, %c0_i32_1 : i32, i32, i32
  }
  func.func @transform_8(%arg0: i32) -> (i32, i32, i32) {
    %c0_i32 = arith.constant 0 : i32
    %c0_i32_0 = arith.constant 0 : i32
    %c0_i32_1 = arith.constant 0 : i32
    %c0_i32_2 = arith.constant 0 : i32
    return %c0_i32, %c0_i32_0, %c0_i32_1 : i32, i32, i32
  }
  func.func @transform_9(%arg0: i32) -> (i32, i32, i32) {
    %c0_i32 = arith.constant 0 : i32
    %c0_i32_0 = arith.constant 0 : i32
    %c0_i32_1 = arith.constant 0 : i32
    %c0_i32_2 = arith.constant 0 : i32
    return %c0_i32, %c0_i32_0, %c0_i32_1 : i32, i32, i32
  }
  func.func @transform_10(%arg0: i32) -> (i32, i32, i32) {
    %c0_i32 = arith.constant 0 : i32
    %c0_i32_0 = arith.constant 0 : i32
    %c0_i32_1 = arith.constant 0 : i32
    %c0_i32_2 = arith.constant 0 : i32
    return %c0_i32, %c0_i32_0, %c0_i32_1 : i32, i32, i32
  }
  func.func @transform_11(%arg0: i32) -> (i32, i32, i32) {
    %c0_i32 = arith.constant 0 : i32
    %c0_i32_0 = arith.constant 0 : i32
    %c0_i32_1 = arith.constant 0 : i32
    %c0_i32_2 = arith.constant 0 : i32
    return %c0_i32, %c0_i32_0, %c0_i32_1 : i32, i32, i32
  }
  func.func @transform_12(%arg0: i32) -> (i32, i32, i32) {
    %c0_i32 = arith.constant 0 : i32
    %c0_i32_0 = arith.constant 0 : i32
    %c0_i32_1 = arith.constant 0 : i32
    %c0_i32_2 = arith.constant 0 : i32
    return %c0_i32, %c0_i32_0, %c0_i32_1 : i32, i32, i32
  }
  func.func @transform_13(%arg0: i32) -> (i32, i32, i32) {
    %c0_i32 = arith.constant 0 : i32
    %c0_i32_0 = arith.constant 0 : i32
    %c0_i32_1 = arith.constant 0 : i32
    %c0_i32_2 = arith.constant 0 : i32
    return %c0_i32, %c0_i32_0, %c0_i32_1 : i32, i32, i32
  }
  func.func @transform_14(%arg0: i32) -> (i32, i32, i32) {
    %c0_i32 = arith.constant 0 : i32
    %c0_i32_0 = arith.constant 0 : i32
    %c0_i32_1 = arith.constant 0 : i32
    %c0_i32_2 = arith.constant 0 : i32
    return %c0_i32, %c0_i32_0, %c0_i32_1 : i32, i32, i32
  }
  func.func @transform_15(%arg0: i32) -> (i32, i32) {
    %c0_i32 = arith.constant 0 : i32
    %c0_i32_0 = arith.constant 0 : i32
    %c0_i32_1 = arith.constant 0 : i32
    return %c0_i32, %c0_i32_0 : i32, i32
  }
  func.func @transform_16(%arg0: i32) -> (i32, i32) {
    %c0_i32 = arith.constant 0 : i32
    %c0_i32_0 = arith.constant 0 : i32
    %c0_i32_1 = arith.constant 0 : i32
    return %c0_i32, %c0_i32_0 : i32, i32
  }
  func.func @transform_17(%arg0: i32) -> (i32, i32, i32) {
    %c0_i32 = arith.constant 0 : i32
    %c0_i32_0 = arith.constant 0 : i32
    %c0_i32_1 = arith.constant 0 : i32
    return %arg0, %c0_i32, %c0_i32_0 : i32, i32, i32
  }
}

</mosaic_0001>

<llo_original>
// kernel: tpu_custom_call.1
$region0: #{tpu_custom_call.1}
  #allocation0 [shape = 'u32[]', space=smem, size = 0x4, offset = 0x4, fixed_abs, tag = 'smem constant byte address 0x4 - core index']
  #allocation1 [shape = 'u32[144,128]{1,0:T(1,128)}', space=vmem, size = 0x12000, scoped, tag = 'internal scratch']
  #allocation2 [shape = 'f32[1,1]{1,0:T(1,128)S(6)}', space=smem, size = 0x200, scoped, tag = 'scoped memory for tpu_custom_call.1']
  %s0 = inlined_call_operand.vmem [shape: f32[2,8,32], index: 0, kind: input, shape index: {}]
  %s1 = inlined_call_operand.vmem [shape: f32[8,32], index: 1, kind: input, shape index: {}]
  %s2 = inlined_call_operand.vmem [shape: f32[2,8,32], index: 2, kind: input, shape index: {}]
  %s3 = inlined_call_operand.vmem [shape: f32[32,32], index: 3, kind: input, shape index: {}]
  %s4 = inlined_call_operand.vmem [shape: f32[1,32], index: 4, kind: input, shape index: {}]
  %s5 = inlined_call_operand.<no memory space> [shape: f32[1,1], index: 5, kind: input, shape index: {}]
  %s6 = inlined_call_operand.vmem [shape: f32[2,4,32], index: 6, kind: input, shape index: {}]
  %s7 = inlined_call_operand.vmem [shape: f32[2,32,96], index: 7, kind: input, shape index: {}]
  %s8 = inlined_call_operand.vmem [shape: f32[2,1,96], index: 8, kind: input, shape index: {}]
  %s9 = inlined_call_operand.vmem [shape: f32[2,32,32], index: 9, kind: input, shape index: {}]
  %s10 = inlined_call_operand.vmem [shape: f32[2,1,32], index: 10, kind: input, shape index: {}]
  %s11 = inlined_call_operand.vmem [shape: f32[2,32,128], index: 11, kind: input, shape index: {}]
  %s12 = inlined_call_operand.vmem [shape: f32[2,1,128], index: 12, kind: input, shape index: {}]
  %s13 = inlined_call_operand.vmem [shape: f32[2,128,32], index: 13, kind: input, shape index: {}]
  %s14 = inlined_call_operand.vmem [shape: f32[2,1,32], index: 14, kind: input, shape index: {}]
  %s15 = inlined_call_operand.vmem [shape: f32[2,32], index: 15, kind: input, shape index: {}]
  %s16 = inlined_call_operand.vmem [shape: f32[32,128], index: 16, kind: input, shape index: {}]
  %s17 = inlined_call_operand.hbm [shape: f32[2,8,128], index: 17, kind: output, shape index: {}]
  %s18 = sld [smem:[#allocation0]]
  $region101: #{tpu_custom_call.1} parent=0
    _
  %s20 = ssub.s32 1, %s18
  %s21 = scalar_select 0, %s20, %s18
  %22 = sst [smem:[#allocation2]] %s5
  $region1: #{tpu_custom_call.1} parent=0
    #allocation3 [shape = 'u8[8192]{0}', space=vmem, size = 0x2000, scoped, tag = 'output window, operand 0']
    #allocation4 [shape = 's32[2]{0}', space=sflag, size = 0x8, scoped, tag = 'scoped memory for tpu_custom_call.1']
    %23 = vsyncpa [#allocation4], 0
    %s24 = scalar_lea.sflag [#allocation4], 1
    %25 = vsyncpa %s24, 0
    loop: start=0, step=1, limit=4
    $region2: #{tpu_custom_call.1} parent=1 // loop_pre_header
      _
    $region3: #{tpu_custom_call.1} parent=1 // loop_header
      %s27 = sphi 0, %s31
      %p28 = scmp.ge.s32.totalorder %s27, 4
      %s37 = sphi 0, %s39
      %s40 = sphi 0, %s37
      %s41 = sphi 0, %s40
      %s57 = sphi 0, %s41
      %s61 = sphi 0, %s61
      %s63 = sphi 0, %s61
      %s64 = sphi 0, %s63
      %s78 = sphi 0, %s64
      %s84 = sphi 0, %s86
      %s87 = sphi 0, %s84
      %s88 = sphi 0, %s87
      %s104 = sphi 0, %s88
      %s108 = sphi 0, %s108
      %s110 = sphi 0, %s108
      %s111 = sphi 0, %s110
      %s125 = sphi 0, %s111
      %s129 = sphi 0, %s129
      %s131 = sphi 0, %s129
      %s132 = sphi 0, %s131
      %s146 = sphi 0, %s132
      %s150 = sphi 0, %s150
      %s152 = sphi 0, %s150
      %s153 = sphi 0, %s152
      %s167 = sphi 0, %s153
      %s171 = sphi 0, %s171
      %s173 = sphi 0, %s171
      %s174 = sphi 0, %s173
      %s188 = sphi 0, %s174
      %s192 = sphi 0, %s192
      %s194 = sphi 0, %s192
      %s195 = sphi 0, %s194
      %s209 = sphi 0, %s195
      %s213 = sphi 0, %s213
      %s215 = sphi 0, %s213
      %s216 = sphi 0, %s215
      %s230 = sphi 0, %s216
      %s234 = sphi 0, %s234
      %s236 = sphi 0, %s234
      %s237 = sphi 0, %s236
      %s251 = sphi 0, %s237
      %s255 = sphi 0, %s255
      %s257 = sphi 0, %s255
      %s258 = sphi 0, %s257
      %s272 = sphi 0, %s258
      %s276 = sphi 0, %s276
      %s278 = sphi 0, %s276
      %s279 = sphi 0, %s278
      %s293 = sphi 0, %s279
      %s297 = sphi 0, %s297
      %s299 = sphi 0, %s297
      %s300 = sphi 0, %s299
      %s314 = sphi 0, %s300
      %s318 = sphi 0, %s318
      %s320 = sphi 0, %s318
      %s321 = sphi 0, %s320
      %s335 = sphi 0, %s321
      %s339 = sphi 0, %s339
      %s341 = sphi 0, %s339
      %s342 = sphi 0, %s341
      %s356 = sphi 0, %s342
      %s360 = sphi 0, %s360
      %s362 = sphi 0, %s360
      %s363 = sphi 0, %s362
      %s377 = sphi 0, %s363
      %s381 = sphi 0, %s381
      %s383 = sphi 0, %s381
      %s384 = sphi 0, %s383
      %s398 = sphi 0, %s384
      %s404 = sphi 0, %s406
      %s407 = sphi 0, %s404
      %s408 = sphi 0, %s407
      %s424 = sphi 0, %s408
    $region4: #{tpu_custom_call.1} parent=1 // loop_header_branch
      %30 = sbr.rel (%p28) target = $region8
    $region5: #{tpu_custom_call.1} parent=1 // loop_body
      %s32 = ssub.s32 %s27, 1
      %s33 = ssub.s32 %s27, 2
      %s34 = sadd.s32 %s27, 1
      %s35 = ssub.s32 %s27, %s34
      %p36 = scmp.eq.s32.totalorder %s35, 0
      %s38 = sadd.s32 %s37, 1
      %s39 = scalar_select %p36, %s37, %s38
      %p42 = pneg %p36
      %p43 = scmp.eq.s32.totalorder %s27, 1
      %p44 = por %p42, %p43
      %p45 = scmp.ne.s32.totalorder %s37, %s40
      %p46 = scmp.eq.s32.totalorder %s27, 0
      %p47 = por %p45, %p46
      %p48 = scmp.ne.s32.totalorder %s37, %s40
      %p49 = scmp.eq.s32.totalorder %s32, 1
      %p50 = por %p48, %p49
      %p51 = scmp.ne.s32.totalorder %s40, %s41
      %p52 = scmp.eq.s32.totalorder %s32, 0
      %p53 = por %p51, %p52
      %p54 = scmp.ne.s32.totalorder %s40, %s41
      %p55 = scmp.eq.s32.totalorder %s33, 1
      %p56 = por %p54, %p55
      %p58 = scmp.ne.s32.totalorder %s41, %s57
      %p59 = scmp.eq.s32.totalorder %s33, 0
      %p60 = por %p58, %p59
      %s62 = sadd.s32 %s61, 1
      %p65 = scmp.eq.s32.totalorder %s27, 1
      %p66 = scmp.ne.s32.totalorder %s61, %s63
      %p67 = scmp.eq.s32.totalorder %s27, 0
      %p68 = por %p66, %p67
      %p69 = scmp.ne.s32.totalorder %s61, %s63
      %p70 = scmp.eq.s32.totalorder %s32, 1
      %p71 = por %p69, %p70
      %p72 = scmp.ne.s32.totalorder %s63, %s64
      %p73 = scmp.eq.s32.totalorder %s32, 0
      %p74 = por %p72, %p73
      %p75 = scmp.ne.s32.totalorder %s63, %s64
      %p76 = scmp.eq.s32.totalorder %s33, 1
      %p77 = por %p75, %p76
      %p79 = scmp.ne.s32.totalorder %s64, %s78
      %p80 = scmp.eq.s32.totalorder %s33, 0
      %p81 = por %p79, %p80
      %s82 = ssub.s32 %s27, %s34
      %p83 = scmp.eq.s32.totalorder %s82, 0
      %s85 = sadd.s32 %s84, 1
      %s86 = scalar_select %p83, %s84, %s85
      %p89 = pneg %p83
      %p90 = scmp.eq.s32.totalorder %s27, 1
      %p91 = por %p89, %p90
      %p92 = scmp.ne.s32.totalorder %s84, %s87
      %p93 = scmp.eq.s32.totalorder %s27, 0
      %p94 = por %p92, %p93
      %p95 = scmp.ne.s32.totalorder %s84, %s87
      %p96 = scmp.eq.s32.totalorder %s32, 1
      %p97 = por %p95, %p96
      %p98 = scmp.ne.s32.totalorder %s87, %s88
      %p99 = scmp.eq.s32.totalorder %s32, 0
      %p100 = por %p98, %p99
      %p101 = scmp.ne.s32.totalorder %s87, %s88
      %p102 = scmp.eq.s32.totalorder %s33, 1
      %p103 = por %p101, %p102
      %p105 = scmp.ne.s32.totalorder %s88, %s104
      %p106 = scmp.eq.s32.totalorder %s33, 0
      %p107 = por %p105, %p106
      %s109 = sadd.s32 %s108, 1
      %p112 = scmp.eq.s32.totalorder %s27, 1
      %p113 = scmp.ne.s32.totalorder %s108, %s110
      %p114 = scmp.eq.s32.totalorder %s27, 0
      %p115 = por %p113, %p114
      %p116 = scmp.ne.s32.totalorder %s108, %s110
      %p117 = scmp.eq.s32.totalorder %s32, 1
      %p118 = por %p116, %p117
      %p119 = scmp.ne.s32.totalorder %s110, %s111
      %p120 = scmp.eq.s32.totalorder %s32, 0
      %p121 = por %p119, %p120
      %p122 = scmp.ne.s32.totalorder %s110, %s111
      %p123 = scmp.eq.s32.totalorder %s33, 1
      %p124 = por %p122, %p123
      %p126 = scmp.ne.s32.totalorder %s111, %s125
      %p127 = scmp.eq.s32.totalorder %s33, 0
      %p128 = por %p126, %p127
      %s130 = sadd.s32 %s129, 1
      %p133 = scmp.eq.s32.totalorder %s27, 1
      %p134 = scmp.ne.s32.totalorder %s129, %s131
      %p135 = scmp.eq.s32.totalorder %s27, 0
      %p136 = por %p134, %p135
      %p137 = scmp.ne.s32.totalorder %s129, %s131
      %p138 = scmp.eq.s32.totalorder %s32, 1
      %p139 = por %p137, %p138
      %p140 = scmp.ne.s32.totalorder %s131, %s132
      %p141 = scmp.eq.s32.totalorder %s32, 0
      %p142 = por %p140, %p141
      %p143 = scmp.ne.s32.totalorder %s131, %s132
      %p144 = scmp.eq.s32.totalorder %s33, 1
      %p145 = por %p143, %p144
      %p147 = scmp.ne.s32.totalorder %s132, %s146
      %p148 = scmp.eq.s32.totalorder %s33, 0
      %p149 = por %p147, %p148
      %s151 = sadd.s32 %s150, 1
      %p154 = scmp.eq.s32.totalorder %s27, 1
      %p155 = scmp.ne.s32.totalorder %s150, %s152
      %p156 = scmp.eq.s32.totalorder %s27, 0
      %p157 = por %p155, %p156
      %p158 = scmp.ne.s32.totalorder %s150, %s152
      %p159 = scmp.eq.s32.totalorder %s32, 1
      %p160 = por %p158, %p159
      %p161 = scmp.ne.s32.totalorder %s152, %s153
      %p162 = scmp.eq.s32.totalorder %s32, 0
      %p163 = por %p161, %p162
      %p164 = scmp.ne.s32.totalorder %s152, %s153
      %p165 = scmp.eq.s32.totalorder %s33, 1
      %p166 = por %p164, %p165
      %p168 = scmp.ne.s32.totalorder %s153, %s167
      %p169 = scmp.eq.s32.totalorder %s33, 0
      %p170 = por %p168, %p169
      %s172 = sadd.s32 %s171, 1
      %p175 = scmp.eq.s32.totalorder %s27, 1
      %p176 = scmp.ne.s32.totalorder %s171, %s173
      %p177 = scmp.eq.s32.totalorder %s27, 0
      %p178 = por %p176, %p177
      %p179 = scmp.ne.s32.totalorder %s171, %s173
      %p180 = scmp.eq.s32.totalorder %s32, 1
      %p181 = por %p179, %p180
      %p182 = scmp.ne.s32.totalorder %s173, %s174
      %p183 = scmp.eq.s32.totalorder %s32, 0
      %p184 = por %p182, %p183
      %p185 = scmp.ne.s32.totalorder %s173, %s174
      %p186 = scmp.eq.s32.totalorder %s33, 1
      %p187 = por %p185, %p186
      %p189 = scmp.ne.s32.totalorder %s174, %s188
      %p190 = scmp.eq.s32.totalorder %s33, 0
      %p191 = por %p189, %p190
      %s193 = sadd.s32 %s192, 1
      %p196 = scmp.eq.s32.totalorder %s27, 1
      %p197 = scmp.ne.s32.totalorder %s192, %s194
      %p198 = scmp.eq.s32.totalorder %s27, 0
      %p199 = por %p197, %p198
      %p200 = scmp.ne.s32.totalorder %s192, %s194
      %p201 = scmp.eq.s32.totalorder %s32, 1
      %p202 = por %p200, %p201
      %p203 = scmp.ne.s32.totalorder %s194, %s195
      %p204 = scmp.eq.s32.totalorder %s32, 0
      %p205 = por %p203, %p204
      %p206 = scmp.ne.s32.totalorder %s194, %s195
      %p207 = scmp.eq.s32.totalorder %s33, 1
      %p208 = por %p206, %p207
      %p210 = scmp.ne.s32.totalorder %s195, %s209
      %p211 = scmp.eq.s32.totalorder %s33, 0
      %p212 = por %p210, %p211
      %s214 = sadd.s32 %s213, 1
      %p217 = scmp.eq.s32.totalorder %s27, 1
      %p218 = scmp.ne.s32.totalorder %s213, %s215
      %p219 = scmp.eq.s32.totalorder %s27, 0
      %p220 = por %p218, %p219
      %p221 = scmp.ne.s32.totalorder %s213, %s215
      %p222 = scmp.eq.s32.totalorder %s32, 1
      %p223 = por %p221, %p222
      %p224 = scmp.ne.s32.totalorder %s215, %s216
      %p225 = scmp.eq.s32.totalorder %s32, 0
      %p226 = por %p224, %p225
      %p227 = scmp.ne.s32.totalorder %s215, %s216
      %p228 = scmp.eq.s32.totalorder %s33, 1
      %p229 = por %p227, %p228
      %p231 = scmp.ne.s32.totalorder %s216, %s230
      %p232 = scmp.eq.s32.totalorder %s33, 0
      %p233 = por %p231, %p232
      %s235 = sadd.s32 %s234, 1
      %p238 = scmp.eq.s32.totalorder %s27, 1
      %p239 = scmp.ne.s32.totalorder %s234, %s236
      %p240 = scmp.eq.s32.totalorder %s27, 0
      %p241 = por %p239, %p240
      %p242 = scmp.ne.s32.totalorder %s234, %s236
      %p243 = scmp.eq.s32.totalorder %s32, 1
      %p244 = por %p242, %p243
      %p245 = scmp.ne.s32.totalorder %s236, %s237
      %p246 = scmp.eq.s32.totalorder %s32, 0
      %p247 = por %p245, %p246
      %p248 = scmp.ne.s32.totalorder %s236, %s237
      %p249 = scmp.eq.s32.totalorder %s33, 1
      %p250 = por %p248, %p249
      %p252 = scmp.ne.s32.totalorder %s237, %s251
      %p253 = scmp.eq.s32.totalorder %s33, 0
      %p254 = por %p252, %p253
      %s256 = sadd.s32 %s255, 1
      %p259 = scmp.eq.s32.totalorder %s27, 1
      %p260 = scmp.ne.s32.totalorder %s255, %s257
      %p261 = scmp.eq.s32.totalorder %s27, 0
      %p262 = por %p260, %p261
      %p263 = scmp.ne.s32.totalorder %s255, %s257
      %p264 = scmp.eq.s32.totalorder %s32, 1
      %p265 = por %p263, %p264
      %p266 = scmp.ne.s32.totalorder %s257, %s258
      %p267 = scmp.eq.s32.totalorder %s32, 0
      %p268 = por %p266, %p267
      %p269 = scmp.ne.s32.totalorder %s257, %s258
      %p270 = scmp.eq.s32.totalorder %s33, 1
      %p271 = por %p269, %p270
      %p273 = scmp.ne.s32.totalorder %s258, %s272
      %p274 = scmp.eq.s32.totalorder %s33, 0
      %p275 = por %p273, %p274
      %s277 = sadd.s32 %s276, 1
      %p280 = scmp.eq.s32.totalorder %s27, 1
      %p281 = scmp.ne.s32.totalorder %s276, %s278
      %p282 = scmp.eq.s32.totalorder %s27, 0
      %p283 = por %p281, %p282
      %p284 = scmp.ne.s32.totalorder %s276, %s278
      %p285 = scmp.eq.s32.totalorder %s32, 1
      %p286 = por %p284, %p285
      %p287 = scmp.ne.s32.totalorder %s278, %s279
      %p288 = scmp.eq.s32.totalorder %s32, 0
      %p289 = por %p287, %p288
      %p290 = scmp.ne.s32.totalorder %s278, %s279
      %p291 = scmp.eq.s32.totalorder %s33, 1
      %p292 = por %p290, %p291
      %p294 = scmp.ne.s32.totalorder %s279, %s293
      %p295 = scmp.eq.s32.totalorder %s33, 0
      %p296 = por %p294, %p295
      %s298 = sadd.s32 %s297, 1
      %p301 = scmp.eq.s32.totalorder %s27, 1
      %p302 = scmp.ne.s32.totalorder %s297, %s299
      %p303 = scmp.eq.s32.totalorder %s27, 0
      %p304 = por %p302, %p303
      %p305 = scmp.ne.s32.totalorder %s297, %s299
      %p306 = scmp.eq.s32.totalorder %s32, 1
      %p307 = por %p305, %p306
      %p308 = scmp.ne.s32.totalorder %s299, %s300
      %p309 = scmp.eq.s32.totalorder %s32, 0
      %p310 = por %p308, %p309
      %p311 = scmp.ne.s32.totalorder %s299, %s300
      %p312 = scmp.eq.s32.totalorder %s33, 1
      %p313 = por %p311, %p312
      %p315 = scmp.ne.s32.totalorder %s300, %s314
      %p316 = scmp.eq.s32.totalorder %s33, 0
      %p317 = por %p315, %p316
      %s319 = sadd.s32 %s318, 1
      %p322 = scmp.eq.s32.totalorder %s27, 1
      %p323 = scmp.ne.s32.totalorder %s318, %s320
      %p324 = scmp.eq.s32.totalorder %s27, 0
      %p325 = por %p323, %p324
      %p326 = scmp.ne.s32.totalorder %s318, %s320
      %p327 = scmp.eq.s32.totalorder %s32, 1
      %p328 = por %p326, %p327
      %p329 = scmp.ne.s32.totalorder %s320, %s321
      %p330 = scmp.eq.s32.totalorder %s32, 0
      %p331 = por %p329, %p330
      %p332 = scmp.ne.s32.totalorder %s320, %s321
      %p333 = scmp.eq.s32.totalorder %s33, 1
      %p334 = por %p332, %p333
      %p336 = scmp.ne.s32.totalorder %s321, %s335
      %p337 = scmp.eq.s32.totalorder %s33, 0
      %p338 = por %p336, %p337
      %s340 = sadd.s32 %s339, 1
      %p343 = scmp.eq.s32.totalorder %s27, 1
      %p344 = scmp.ne.s32.totalorder %s339, %s341
      %p345 = scmp.eq.s32.totalorder %s27, 0
      %p346 = por %p344, %p345
      %p347 = scmp.ne.s32.totalorder %s339, %s341
      %p348 = scmp.eq.s32.totalorder %s32, 1
      %p349 = por %p347, %p348
      %p350 = scmp.ne.s32.totalorder %s341, %s342
      %p351 = scmp.eq.s32.totalorder %s32, 0
      %p352 = por %p350, %p351
      %p353 = scmp.ne.s32.totalorder %s341, %s342
      %p354 = scmp.eq.s32.totalorder %s33, 1
      %p355 = por %p353, %p354
      %p357 = scmp.ne.s32.totalorder %s342, %s356
      %p358 = scmp.eq.s32.totalorder %s33, 0
      %p359 = por %p357, %p358
      %s361 = sadd.s32 %s360, 1
      %p364 = scmp.eq.s32.totalorder %s27, 1
      %p365 = scmp.ne.s32.totalorder %s360, %s362
      %p366 = scmp.eq.s32.totalorder %s27, 0
      %p367 = por %p365, %p366
      %p368 = scmp.ne.s32.totalorder %s360, %s362
      %p369 = scmp.eq.s32.totalorder %s32, 1
      %p370 = por %p368, %p369
      %p371 = scmp.ne.s32.totalorder %s362, %s363
      %p372 = scmp.eq.s32.totalorder %s32, 0
      %p373 = por %p371, %p372
      %p374 = scmp.ne.s32.totalorder %s362, %s363
      %p375 = scmp.eq.s32.totalorder %s33, 1
      %p376 = por %p374, %p375
      %p378 = scmp.ne.s32.totalorder %s363, %s377
      %p379 = scmp.eq.s32.totalorder %s33, 0
      %p380 = por %p378, %p379
      %s382 = sadd.s32 %s381, 1
      %p385 = scmp.eq.s32.totalorder %s27, 1
      %p386 = scmp.ne.s32.totalorder %s381, %s383
      %p387 = scmp.eq.s32.totalorder %s27, 0
      %p388 = por %p386, %p387
      %p389 = scmp.ne.s32.totalorder %s381, %s383
      %p390 = scmp.eq.s32.totalorder %s32, 1
      %p391 = por %p389, %p390
      %p392 = scmp.ne.s32.totalorder %s383, %s384
      %p393 = scmp.eq.s32.totalorder %s32, 0
      %p394 = por %p392, %p393
      %p395 = scmp.ne.s32.totalorder %s383, %s384
      %p396 = scmp.eq.s32.totalorder %s33, 1
      %p397 = por %p395, %p396
      %p399 = scmp.ne.s32.totalorder %s384, %s398
      %p400 = scmp.eq.s32.totalorder %s33, 0
      %p401 = por %p399, %p400
      %s402 = ssub.s32 %s27, %s34
      %p403 = scmp.eq.s32.totalorder %s402, 0
      %s405 = sadd.s32 %s404, 1
      %s406 = scalar_select %p403, %s404, %s405
      %p409 = pneg %p403
      %p410 = scmp.eq.s32.totalorder %s27, 1
      %p411 = por %p409, %p410
      %p412 = scmp.ne.s32.totalorder %s404, %s407
      %p413 = scmp.eq.s32.totalorder %s27, 0
      %p414 = por %p412, %p413
      %p415 = scmp.ne.s32.totalorder %s404, %s407
      %p416 = scmp.eq.s32.totalorder %s32, 1
      %p417 = por %p415, %p416
      %p418 = scmp.ne.s32.totalorder %s407, %s408
      %p419 = scmp.eq.s32.totalorder %s32, 0
      %p420 = por %p418, %p419
      %p421 = scmp.ne.s32.totalorder %s407, %s408
      %p422 = scmp.eq.s32.totalorder %s33, 1
      %p423 = por %p421, %p422
      %p425 = scmp.ne.s32.totalorder %s408, %s424
      %p426 = scmp.eq.s32.totalorder %s33, 0
      %p427 = por %p425, %p426
      %p428 = scmp.le.s32.totalorder 1, %s27
      %p429 = scmp.lt.s32.totalorder %s27, 3
      %p430 = pnand %p428, %p429
      %p431 = pneg %p430
      // Predicated region
      $region9: #{tpu_custom_call.1} parent=5 // pred_check
        _
      $region10: #{tpu_custom_call.1} parent=5 // pred_check_branch
        %433 = sbr.rel (%p430) target = $region12
      $region11: #{tpu_custom_call.1} parent=5 // pred_region
        %s434 = ssub.s32 %s27, 1
        // Predicated region
        $region13: #{tpu_custom_call.1} parent=11 // pred_check
          %p435 = pneg %p74
        $region14: #{tpu_custom_call.1} parent=11 // pred_check_branch
          %437 = sbr.rel (%p435) target = $region16
        $region15: #{tpu_custom_call.1} parent=11 // pred_region
          _
        $region16: #{tpu_custom_call.1} parent=11 // pred_fallthru
          _
        // Predicated region
        $region17: #{tpu_custom_call.1} parent=11 // pred_check
          %p438 = pneg %p121
        $region18: #{tpu_custom_call.1} parent=11 // pred_check_branch
          %440 = sbr.rel (%p438) target = $region20
        $region19: #{tpu_custom_call.1} parent=11 // pred_region
          _
        $region20: #{tpu_custom_call.1} parent=11 // pred_fallthru
          _
        // Predicated region
        $region21: #{tpu_custom_call.1} parent=11 // pred_check
          %p441 = pneg %p142
        $region22: #{tpu_custom_call.1} parent=11 // pred_check_branch
          %443 = sbr.rel (%p441) target = $region24
        $region23: #{tpu_custom_call.1} parent=11 // pred_region
          _
        $region24: #{tpu_custom_call.1} parent=11 // pred_fallthru
          _
        // Predicated region
        $region25: #{tpu_custom_call.1} parent=11 // pred_check
          %p444 = pneg %p163
        $region26: #{tpu_custom_call.1} parent=11 // pred_check_branch
          %446 = sbr.rel (%p444) target = $region28
        $region27: #{tpu_custom_call.1} parent=11 // pred_region
          _
        $region28: #{tpu_custom_call.1} parent=11 // pred_fallthru
          _
        // Predicated region
        $region29: #{tpu_custom_call.1} parent=11 // pred_check
          %p447 = pneg %p184
        $region30: #{tpu_custom_call.1} parent=11 // pred_check_branch
          %449 = sbr.rel (%p447) target = $region32
        $region31: #{tpu_custom_call.1} parent=11 // pred_region
          _
        $region32: #{tpu_custom_call.1} parent=11 // pred_fallthru
          _
        // Predicated region
        $region33: #{tpu_custom_call.1} parent=11 // pred_check
          %p450 = pneg %p205
        $region34: #{tpu_custom_call.1} parent=11 // pred_check_branch
          %452 = sbr.rel (%p450) target = $region36
        $region35: #{tpu_custom_call.1} parent=11 // pred_region
          _
        $region36: #{tpu_custom_call.1} parent=11 // pred_fallthru
          _
        // Predicated region
        $region37: #{tpu_custom_call.1} parent=11 // pred_check
          %p453 = pneg %p226
        $region38: #{tpu_custom_call.1} parent=11 // pred_check_branch
          %455 = sbr.rel (%p453) target = $region40
        $region39: #{tpu_custom_call.1} parent=11 // pred_region
          _
        $region40: #{tpu_custom_call.1} parent=11 // pred_fallthru
          _
        // Predicated region
        $region41: #{tpu_custom_call.1} parent=11 // pred_check
          %p456 = pneg %p247
        $region42: #{tpu_custom_call.1} parent=11 // pred_check_branch
          %458 = sbr.rel (%p456) target = $region44
        $region43: #{tpu_custom_call.1} parent=11 // pred_region
          _
        $region44: #{tpu_custom_call.1} parent=11 // pred_fallthru
          _
        // Predicated region
        $region45: #{tpu_custom_call.1} parent=11 // pred_check
          %p459 = pneg %p268
        $region46: #{tpu_custom_call.1} parent=11 // pred_check_branch
          %461 = sbr.rel (%p459) target = $region48
        $region47: #{tpu_custom_call.1} parent=11 // pred_region
          _
        $region48: #{tpu_custom_call.1} parent=11 // pred_fallthru
          _
        // Predicated region
        $region49: #{tpu_custom_call.1} parent=11 // pred_check
          %p462 = pneg %p289
        $region50: #{tpu_custom_call.1} parent=11 // pred_check_branch
          %464 = sbr.rel (%p462) target = $region52
        $region51: #{tpu_custom_call.1} parent=11 // pred_region
          _
        $region52: #{tpu_custom_call.1} parent=11 // pred_fallthru
          _
        // Predicated region
        $region53: #{tpu_custom_call.1} parent=11 // pred_check
          %p465 = pneg %p310
        $region54: #{tpu_custom_call.1} parent=11 // pred_check_branch
          %467 = sbr.rel (%p465) target = $region56
        $region55: #{tpu_custom_call.1} parent=11 // pred_region
          _
        $region56: #{tpu_custom_call.1} parent=11 // pred_fallthru
          _
        // Predicated region
        $region57: #{tpu_custom_call.1} parent=11 // pred_check
          %p468 = pneg %p331
        $region58: #{tpu_custom_call.1} parent=11 // pred_check_branch
          %470 = sbr.rel (%p468) target = $region60
        $region59: #{tpu_custom_call.1} parent=11 // pred_region
          _
        $region60: #{tpu_custom_call.1} parent=11 // pred_fallthru
          _
        // Predicated region
        $region61: #{tpu_custom_call.1} parent=11 // pred_check
          %p471 = pneg %p352
        $region62: #{tpu_custom_call.1} parent=11 // pred_check_branch
          %473 = sbr.rel (%p471) target = $region64
        $region63: #{tpu_custom_call.1} parent=11 // pred_region
          _
        $region64: #{tpu_custom_call.1} parent=11 // pred_fallthru
          _
        // Predicated region
        $region65: #{tpu_custom_call.1} parent=11 // pred_check
          %p474 = pneg %p373
        $region66: #{tpu_custom_call.1} parent=11 // pred_check_branch
          %476 = sbr.rel (%p474) target = $region68
        $region67: #{tpu_custom_call.1} parent=11 // pred_region
          _
        $region68: #{tpu_custom_call.1} parent=11 // pred_fallthru
          _
        // Predicated region
        $region69: #{tpu_custom_call.1} parent=11 // pred_check
          %p477 = pneg %p394
        $region70: #{tpu_custom_call.1} parent=11 // pred_check_branch
          %479 = sbr.rel (%p477) target = $region72
        $region71: #{tpu_custom_call.1} parent=11 // pred_region
          _
        $region72: #{tpu_custom_call.1} parent=11 // pred_fallthru
          _
      $region12: #{tpu_custom_call.1} parent=5 // pred_fallthru
        _
      %p480 = scmp.lt.s32.totalorder %s27, 2
      // Predicated region
      $region73: #{tpu_custom_call.1} parent=5 // pred_check
        %p481 = pneg %p480
      $region74: #{tpu_custom_call.1} parent=5 // pred_check_branch
        %483 = sbr.rel (%p481) target = $region76
      $region75: #{tpu_custom_call.1} parent=5 // pred_region
        // Predicated region
        $region77: #{tpu_custom_call.1} parent=75 // pred_check
          %p484 = pneg %p47
        $region78: #{tpu_custom_call.1} parent=75 // pred_check_branch
          %486 = sbr.rel (%p484) target = $region80
        $region79: #{tpu_custom_call.1} parent=75 // pred_region
          %p487 = scmp.lt.s32.totalorder %s27, 1
          %s488 = scalar_select %p487, %s27, 1
          %s489 = smul.addr %s488, 8
          %s490 = scalar_lea.vmem %s0, %s489
        $region80: #{tpu_custom_call.1} parent=75 // pred_fallthru
          _
        // Predicated region
        $region81: #{tpu_custom_call.1} parent=75 // pred_check
          %p491 = pneg %p94
        $region82: #{tpu_custom_call.1} parent=75 // pred_check_branch
          %493 = sbr.rel (%p491) target = $region84
        $region83: #{tpu_custom_call.1} parent=75 // pred_region
          %p494 = scmp.lt.s32.totalorder %s27, 1
          %s495 = scalar_select %p494, %s27, 1
          %s496 = smul.addr %s495, 8
          %s497 = scalar_lea.vmem %s2, %s496
        $region84: #{tpu_custom_call.1} parent=75 // pred_fallthru
          _
      $region76: #{tpu_custom_call.1} parent=5 // pred_fallthru
        _
      %p498 = scmp.le.s32.totalorder 1, %s27
      %p499 = scmp.lt.s32.totalorder %s27, 3
      %p500 = pnand %p498, %p499
      %p501 = pneg %p500
      // Predicated region
      $region85: #{tpu_custom_call.1} parent=5 // pred_check
        _
      $region86: #{tpu_custom_call.1} parent=5 // pred_check_branch
        %503 = sbr.rel (%p500) target = $region88
      $region87: #{tpu_custom_call.1} parent=5 // pred_region
        %s504 = ssub.s32 %s27, 1
        %p505 = scmp.lt.s32.totalorder %s32, 1
        %s506 = scalar_select %p505, %s32, 1
        %s507 = smul.addr %s506, 8
        %s508 = scalar_lea.vmem %s0, %s507
        %p509 = pneg %p53
        %p510 = pneg %p50
        %p511 = pneg %p74
        %p512 = pneg %p71
        %p513 = scmp.lt.s32.totalorder %s32, 1
        %s514 = scalar_select %p513, %s32, 1
        %s515 = smul.addr %s514, 8
        %s516 = scalar_lea.vmem %s2, %s515
        %p517 = pneg %p100
        %p518 = pneg %p97
        %p519 = pneg %p121
        %p520 = pneg %p118
        %p521 = pneg %p142
        %p522 = pneg %p139
        %p523 = pneg %p163
        %p524 = pneg %p160
        %p525 = pneg %p184
        %p526 = pneg %p181
        %p527 = pneg %p205
        %p528 = pneg %p202
        %p529 = pneg %p226
        %p530 = pneg %p223
        %p531 = pneg %p247
        %p532 = pneg %p244
        %p533 = pneg %p268
        %p534 = pneg %p265
        %p535 = pneg %p289
        %p536 = pneg %p286
        %p537 = pneg %p310
        %p538 = pneg %p307
        %p539 = pneg %p331
        %p540 = pneg %p328
        %p541 = pneg %p352
        %p542 = pneg %p349
        %p543 = pneg %p373
        %p544 = pneg %p370
        %p545 = pneg %p394
        %p546 = pneg %p391
        %p547 = pneg %p420
        %p548 = pneg %p417
        %s549 = sand.u32 %s407, 1
        %s550 = scalar_lea.sflag [#allocation4], %s549
        %s551 = sand.u32 %s407, 1
        %s552 = smul.addr %s551, 8
        %s553 = scalar_lea.vmem [#allocation3], %s552
        %p554 = scmp.lt.s32.totalorder %s32, 1
        %s555 = scalar_select %p554, %s32, 1
        %s556 = smul.addr %s555, 8
        %s557 = scalar_lea.vmem %s0, %s556
        %p558 = scmp.lt.s32.totalorder %s32, 1
        %s559 = scalar_select %p558, %s32, 1
        %s560 = smul.addr %s559, 8
        %s561 = scalar_lea.vmem %s2, %s560
        %v562 = vld [vmem:[%s561] sm:$0xff]
        %v563 = vld [vmem:[%s3] sm:$0xff]
        %v564 = vld [vmem:[%s3 + $0x8] sm:$0xff]
        %v565 = vld [vmem:[%s3 + $0x10] sm:$0xff]
        %v566 = vld [vmem:[%s3 + $0x18] sm:$0xff]
        %v567 = vld [vmem:[%s4] sm:$0x1]
        %v569 = vlaneseq
        %v570 = vshrl.u32 %v569, 7
        %v571 = vsub.s32 0, %v570
        %v572 = vrot.slane %v567, %v571
        %vm574 = vcmask 261120
        %v576 = vsel %vm574, %v562, 0
        %578 = vmatprep.subr.mxu0 0.0
        %579 = vmatpush1.msra.mxu0 %v563
        %580 = vmatprep.subr.mxu0 0.0
        %581 = vmatpush1.msra.mxu0 %v564
        %582 = vmatprep.subr.mxu0 0.0
        %583 = vmatpush1.msra.mxu0 %v565
        %584 = vmatprep.subr.mxu0 0.0
        %585 = vmatpush1.msra.mxu0 %v566
        %586 = vmatprep.subr.mxu0 0.0
        %587 = vmatpush1.msra.mxu0 0.0
        %588 = vmatprep.subr.mxu0 0.0
        %589 = vmatpush1.msra.mxu0 0.0
        %590 = vmatprep.subr.mxu0 0.0
        %591 = vmatpush1.msra.mxu0 0.0
        %592 = vmatprep.subr.mxu0 0.0
        %593 = vmatpush1.msra.mxu0 0.0
        %594 = vmatprep.subr.mxu0 0.0
        %595 = vmatpush1.msra.mxu0 0.0
        %596 = vmatprep.subr.mxu0 0.0
        %597 = vmatpush1.msra.mxu0 0.0
        %598 = vmatprep.subr.mxu0 0.0
        %599 = vmatpush1.msra.mxu0 0.0
        %600 = vmatprep.subr.mxu0 0.0
        %601 = vmatpush1.msra.mxu0 0.0
        %602 = vmatprep.subr.mxu0 0.0
        %603 = vmatpush1.msra.mxu0 0.0
        %604 = vmatprep.subr.mxu0 0.0
        %605 = vmatpush1.msra.mxu0 0.0
        %606 = vmatprep.subr.mxu0 0.0
        %607 = vmatpush1.msra.mxu0 0.0
        %608 = vmatprep.subr.mxu0 0.0
        %609 = vmatpush1.msra.mxu0 0.0
        %610 = vmatprep.subr.mxu0 0.0
        %611 = vmatpush1.msra.mxu0 0.0
        %612 = vmatprep.subr.mxu0 0.0
        %613 = vmatpush1.msra.mxu0 0.0
        %614 = vmatprep.subr.mxu0 0.0
        %615 = vmatpush1.msra.mxu0 0.0
        %616 = vmatprep.subr.mxu0 0.0
        %617 = vmatpush1.msra.mxu0 0.0
        %618 = vmatprep.subr.mxu0 0.0
        %619 = vmatpush1.msra.mxu0 0.0
        %620 = vmatprep.subr.mxu0 0.0
        %621 = vmatpush1.msra.mxu0 0.0
        %622 = vmatprep.subr.mxu0 0.0
        %623 = vmatpush1.msra.mxu0 0.0
        %624 = vmatprep.subr.mxu0 0.0
        %625 = vmatpush1.msra.mxu0 0.0
        %626 = vmatprep.subr.mxu0 0.0
        %627 = vmatpush1.msra.mxu0 0.0
        %628 = vmatprep.subr.mxu0 0.0
        %629 = vmatpush1.msra.mxu0 0.0
        %630 = vmatprep.subr.mxu0 0.0
        %631 = vmatpush1.msra.mxu0 0.0
        %632 = vmatprep.subr.mxu0 0.0
        %633 = vmatpush1.msra.mxu0 0.0
        %634 = vmatprep.subr.mxu0 0.0
        %635 = vmatpush1.msra.mxu0 0.0
        %636 = vmatprep.subr.mxu0 0.0
        %637 = vmatpush1.msra.mxu0 0.0
        %638 = vmatprep.subr.mxu0 0.0
        %639 = vmatpush1.msra.mxu0 0.0
        %640 = vmatprep.subr.mxu0 0.0
        %641 = vmatpush1.msra.mxu0 0.0
        %642 = vmatprep.mubr.f32.mxu0 0.0
        %643 = vmatmul.mubr.f32.gmra.mrb[0].mxu0 %v576
        %v644 = vpop.f32.mrb[0].mxu0
        %v645 = vadd.f32 %v572, %v644
        %v646 = vpop.f32.mrb[0].mxu0
        %647 = vdwg.mxu0
        %v648 = vld [vmem:[%s557] sm:$0xff]
        %v649 = vld [vmem:[%s1] sm:$0xff]
        %v650 = vadd.f32 %v648, %v649
        %s651 = sld [smem:[#allocation2]]
        %v652 = vstv %s651
        %v653 = vmul.f32 %v652, %v645
        %v654 = vadd.f32 %v650, %v653
        %v655 = vlaneseq
        %v656 = vshrl.u32 %v655, 7
        %v657 = vlaneseq
        %v658 = vand.u32 %v657, 127
        %vm659 = vcmp.ge.s32.totalorder %v656, %v658
        %v660 = vsel %vm659, 0.0, -1e+30
        %v661 = vld [vmem:[%s6] sm:$0xf]
        %v662 = vsel %vm574, %v654, 0.0
        %663 = vadd.xlane.f32.xlu0 %v662
        %v664 = vpop.xlane.xlu0 %663
        %v665 = vrcp.pop 32.0
        %v666 = vmul.f32 %v664, %v665
        %v667 = vsub.f32 %v654, %v666
        %v668 = vmul.f32 %v667, %v667
        %v669 = vsel %vm574, %v668, 0.0
        %670 = vadd.xlane.f32.xlu0 %v669
        %v671 = vpop.xlane.xlu0 %670
        %v672 = vmul.f32 %v671, %v665
        %v673 = vadd.f32 %v672, 1e-05
        %v674 = vrsqrt.pop %v673
        %v675 = vmul.f32 %v667, %v674
        %v676 = vlaneseq
        %v677 = vshrl.u32 %v676, 7
        %v678 = vsub.s32 0, %v677
        %v679 = vrot.slane %v661, %v678
        %v680 = vmul.f32 %v675, %v679
        %v681 = vlaneseq
        %v682 = vshrl.u32 %v681, 7
        %v683 = vsub.s32 1, %v682
        %v684 = vrot.slane %v661, %v683
        %v685 = vadd.f32 %v680, %v684
        %v686 = vld [vmem:[%s7] sm:$0xff]
        %v687 = vld [vmem:[%s7 + $0x8] sm:$0xff]
        %v688 = vld [vmem:[%s7 + $0x10] sm:$0xff]
        %v689 = vld [vmem:[%s7 + $0x18] sm:$0xff]
        %v690 = vld [vmem:[%s8] sm:$0x1]
        %v692 = vlaneseq
        %v693 = vshrl.u32 %v692, 7
        %v694 = vsub.s32 0, %v693
        %v695 = vrot.slane %v690, %v694
        %v698 = vsel %vm574, %v685, 0
        %700 = vmatprep.subr.mxu0 0.0
        %701 = vmatpush1.msra.mxu0 %v686
        %702 = vmatprep.subr.mxu0 0.0
        %703 = vmatpush1.msra.mxu0 %v687
        %704 = vmatprep.subr.mxu0 0.0
        %705 = vmatpush1.msra.mxu0 %v688
        %706 = vmatprep.subr.mxu0 0.0
        %707 = vmatpush1.msra.mxu0 %v689
        %708 = vmatprep.subr.mxu0 0.0
        %709 = vmatpush1.msra.mxu0 0.0
        %710 = vmatprep.subr.mxu0 0.0
        %711 = vmatpush1.msra.mxu0 0.0
        %712 = vmatprep.subr.mxu0 0.0
        %713 = vmatpush1.msra.mxu0 0.0
        %714 = vmatprep.subr.mxu0 0.0
        %715 = vmatpush1.msra.mxu0 0.0
        %716 = vmatprep.subr.mxu0 0.0
        %717 = vmatpush1.msra.mxu0 0.0
        %718 = vmatprep.subr.mxu0 0.0
        %719 = vmatpush1.msra.mxu0 0.0
        %720 = vmatprep.subr.mxu0 0.0
        %721 = vmatpush1.msra.mxu0 0.0
        %722 = vmatprep.subr.mxu0 0.0
        %723 = vmatpush1.msra.mxu0 0.0
        %724 = vmatprep.subr.mxu0 0.0
        %725 = vmatpush1.msra.mxu0 0.0
        %726 = vmatprep.subr.mxu0 0.0
        %727 = vmatpush1.msra.mxu0 0.0
        %728 = vmatprep.subr.mxu0 0.0
        %729 = vmatpush1.msra.mxu0 0.0
        %730 = vmatprep.subr.mxu0 0.0
        %731 = vmatpush1.msra.mxu0 0.0
        %732 = vmatprep.subr.mxu0 0.0
        %733 = vmatpush1.msra.mxu0 0.0
        %734 = vmatprep.subr.mxu0 0.0
        %735 = vmatpush1.msra.mxu0 0.0
        %736 = vmatprep.subr.mxu0 0.0
        %737 = vmatpush1.msra.mxu0 0.0
        %738 = vmatprep.subr.mxu0 0.0
        %739 = vmatpush1.msra.mxu0 0.0
        %740 = vmatprep.subr.mxu0 0.0
        %741 = vmatpush1.msra.mxu0 0.0
        %742 = vmatprep.subr.mxu0 0.0
        %743 = vmatpush1.msra.mxu0 0.0
        %744 = vmatprep.subr.mxu0 0.0
        %745 = vmatpush1.msra.mxu0 0.0
        %746 = vmatprep.subr.mxu0 0.0
        %747 = vmatpush1.msra.mxu0 0.0
        %748 = vmatprep.subr.mxu0 0.0
        %749 = vmatpush1.msra.mxu0 0.0
        %750 = vmatprep.subr.mxu0 0.0
        %751 = vmatpush1.msra.mxu0 0.0
        %752 = vmatprep.subr.mxu0 0.0
        %753 = vmatpush1.msra.mxu0 0.0
        %754 = vmatprep.subr.mxu0 0.0
        %755 = vmatpush1.msra.mxu0 0.0
        %756 = vmatprep.subr.mxu0 0.0
        %757 = vmatpush1.msra.mxu0 0.0
        %758 = vmatprep.subr.mxu0 0.0
        %759 = vmatpush1.msra.mxu0 0.0
        %760 = vmatprep.subr.mxu0 0.0
        %761 = vmatpush1.msra.mxu0 0.0
        %762 = vmatprep.subr.mxu0 0.0
        %763 = vmatpush1.msra.mxu0 0.0
        %764 = vmatprep.mubr.f32.mxu0 0.0
        %765 = vmatmul.mubr.f32.gmra.mrb[0].mxu0 %v698
        %v766 = vpop.f32.mrb[0].mxu0
        %v767 = vadd.f32 %v695, %v766
        %v768 = vpop.f32.mrb[0].mxu0
        %769 = vdwg.mxu0
        %771 = vrot.lane.b32.xlu0 %v767, 120
        %v772 = vpop.permute.xlu0 %771
        %773 = vrot.lane.b32.xlu0 %v767, 112
        %v774 = vpop.permute.xlu0 %773
        %775 = vrot.lane.b32.xlu0 %v767, 104
        %v776 = vpop.permute.xlu0 %775
        %777 = vrot.lane.b32.xlu0 %v767, 96
        %v778 = vpop.permute.xlu0 %777
        %779 = vrot.lane.b32.xlu0 %v772, 96
        %v780 = vpop.permute.xlu0 %779
        %781 = vrot.lane.b32.xlu0 %v774, 96
        %v782 = vpop.permute.xlu0 %781
        %783 = vrot.lane.b32.xlu0 %v776, 96
        %v784 = vpop.permute.xlu0 %783
        %789 = vxpose.xlu0.b32.start [1/16] %v778, 128
        %790 = vxpose.xlu0.b32.cont [2/16] 0.0, 128
        %791 = vxpose.xlu0.b32.cont [3/16] 0.0, 128
        %792 = vxpose.xlu0.b32.cont [4/16] 0.0, 128
        %793 = vxpose.xlu0.b32.cont [5/16] 0.0, 128
        %794 = vxpose.xlu0.b32.cont [6/16] 0.0, 128
        %795 = vxpose.xlu0.b32.cont [7/16] 0.0, 128
        %796 = vxpose.xlu0.b32.cont [8/16] 0.0, 128
        %797 = vxpose.xlu0.b32.cont [9/16] 0.0, 128
        %798 = vxpose.xlu0.b32.cont [10/16] 0.0, 128
        %799 = vxpose.xlu0.b32.cont [11/16] 0.0, 128
        %800 = vxpose.xlu0.b32.cont [12/16] 0.0, 128
        %801 = vxpose.xlu0.b32.cont [13/16] 0.0, 128
        %802 = vxpose.xlu0.b32.cont [14/16] 0.0, 128
        %803 = vxpose.xlu0.b32.cont [15/16] 0.0, 128
        %804 = vxpose.xlu0.b32.end [16/16] 0.0, 128
        %v805 = vpop.trf.xlu0
        %v806 = vpop.trf.xlu0
        %v807 = vpop.trf.xlu0
        %v808 = vpop.trf.xlu0
        %v809 = vpop.trf.xlu0
        %v810 = vpop.trf.xlu0
        %v811 = vpop.trf.xlu0
        %v812 = vpop.trf.xlu0
        %v813 = vpop.trf.xlu0
        %v814 = vpop.trf.xlu0
        %v815 = vpop.trf.xlu0
        %v816 = vpop.trf.xlu0
        %v817 = vpop.trf.xlu0
        %v818 = vpop.trf.xlu0
        %v819 = vpop.trf.xlu0
        %v820 = vpop.trf.xlu0
        %821 = vxpose.xlu0.b32.start [1/16] %v780, 128
        %822 = vxpose.xlu0.b32.cont [2/16] 0.0, 128
        %823 = vxpose.xlu0.b32.cont [3/16] 0.0, 128
        %824 = vxpose.xlu0.b32.cont [4/16] 0.0, 128
        %825 = vxpose.xlu0.b32.cont [5/16] 0.0, 128
        %826 = vxpose.xlu0.b32.cont [6/16] 0.0, 128
        %827 = vxpose.xlu0.b32.cont [7/16] 0.0, 128
        %828 = vxpose.xlu0.b32.cont [8/16] 0.0, 128
        %829 = vxpose.xlu0.b32.cont [9/16] 0.0, 128
        %830 = vxpose.xlu0.b32.cont [10/16] 0.0, 128
        %831 = vxpose.xlu0.b32.cont [11/16] 0.0, 128
        %832 = vxpose.xlu0.b32.cont [12/16] 0.0, 128
        %833 = vxpose.xlu0.b32.cont [13/16] 0.0, 128
        %834 = vxpose.xlu0.b32.cont [14/16] 0.0, 128
        %835 = vxpose.xlu0.b32.cont [15/16] 0.0, 128
        %836 = vxpose.xlu0.b32.end [16/16] 0.0, 128
        %v837 = vpop.trf.xlu0
        %v838 = vpop.trf.xlu0
        %v839 = vpop.trf.xlu0
        %v840 = vpop.trf.xlu0
        %v841 = vpop.trf.xlu0
        %v842 = vpop.trf.xlu0
        %v843 = vpop.trf.xlu0
        %v844 = vpop.trf.xlu0
        %v845 = vpop.trf.xlu0
        %v846 = vpop.trf.xlu0
        %v847 = vpop.trf.xlu0
        %v848 = vpop.trf.xlu0
        %v849 = vpop.trf.xlu0
        %v850 = vpop.trf.xlu0
        %v851 = vpop.trf.xlu0
        %v852 = vpop.trf.xlu0
        %853 = vxpose.xlu0.b32.start [1/16] %v782, 128
        %854 = vxpose.xlu0.b32.cont [2/16] 0.0, 128
        %855 = vxpose.xlu0.b32.cont [3/16] 0.0, 128
        %856 = vxpose.xlu0.b32.cont [4/16] 0.0, 128
        %857 = vxpose.xlu0.b32.cont [5/16] 0.0, 128
        %858 = vxpose.xlu0.b32.cont [6/16] 0.0, 128
        %859 = vxpose.xlu0.b32.cont [7/16] 0.0, 128
        %860 = vxpose.xlu0.b32.cont [8/16] 0.0, 128
        %861 = vxpose.xlu0.b32.cont [9/16] 0.0, 128
        %862 = vxpose.xlu0.b32.cont [10/16] 0.0, 128
        %863 = vxpose.xlu0.b32.cont [11/16] 0.0, 128
        %864 = vxpose.xlu0.b32.cont [12/16] 0.0, 128
        %865 = vxpose.xlu0.b32.cont [13/16] 0.0, 128
        %866 = vxpose.xlu0.b32.cont [14/16] 0.0, 128
        %867 = vxpose.xlu0.b32.cont [15/16] 0.0, 128
        %868 = vxpose.xlu0.b32.end [16/16] 0.0, 128
        %v869 = vpop.trf.xlu0
        %v870 = vpop.trf.xlu0
        %v871 = vpop.trf.xlu0
        %v872 = vpop.trf.xlu0
        %v873 = vpop.trf.xlu0
        %v874 = vpop.trf.xlu0
        %v875 = vpop.trf.xlu0
        %v876 = vpop.trf.xlu0
        %v877 = vpop.trf.xlu0
        %v878 = vpop.trf.xlu0
        %v879 = vpop.trf.xlu0
        %v880 = vpop.trf.xlu0
        %v881 = vpop.trf.xlu0
        %v882 = vpop.trf.xlu0
        %v883 = vpop.trf.xlu0
        %v884 = vpop.trf.xlu0
        %885 = vxpose.xlu0.b32.start [1/16] %v784, 128
        %886 = vxpose.xlu0.b32.cont [2/16] 0.0, 128
        %887 = vxpose.xlu0.b32.cont [3/16] 0.0, 128
        %888 = vxpose.xlu0.b32.cont [4/16] 0.0, 128
        %889 = vxpose.xlu0.b32.cont [5/16] 0.0, 128
        %890 = vxpose.xlu0.b32.cont [6/16] 0.0, 128
        %891 = vxpose.xlu0.b32.cont [7/16] 0.0, 128
        %892 = vxpose.xlu0.b32.cont [8/16] 0.0, 128
        %893 = vxpose.xlu0.b32.cont [9/16] 0.0, 128
        %894 = vxpose.xlu0.b32.cont [10/16] 0.0, 128
        %895 = vxpose.xlu0.b32.cont [11/16] 0.0, 128
        %896 = vxpose.xlu0.b32.cont [12/16] 0.0, 128
        %897 = vxpose.xlu0.b32.cont [13/16] 0.0, 128
        %898 = vxpose.xlu0.b32.cont [14/16] 0.0, 128
        %899 = vxpose.xlu0.b32.cont [15/16] 0.0, 128
        %900 = vxpose.xlu0.b32.end [16/16] 0.0, 128
        %v901 = vpop.trf.xlu0
        %v902 = vpop.trf.xlu0
        %v903 = vpop.trf.xlu0
        %v904 = vpop.trf.xlu0
        %v905 = vpop.trf.xlu0
        %v906 = vpop.trf.xlu0
        %v907 = vpop.trf.xlu0
        %v908 = vpop.trf.xlu0
        %v909 = vpop.trf.xlu0
        %v910 = vpop.trf.xlu0
        %v911 = vpop.trf.xlu0
        %v912 = vpop.trf.xlu0
        %v913 = vpop.trf.xlu0
        %v914 = vpop.trf.xlu0
        %v915 = vpop.trf.xlu0
        %v916 = vpop.trf.xlu0
        %vm917 = vcmask 64512
        %v918 = vsel %vm917, %v767, 0
        %920 = vmatprep.subr.mxu0 0.0
        %921 = vmatpush1.msra.mxu0 %v805
        %922 = vmatprep.subr.mxu0 0.0
        %923 = vmatpush1.msra.mxu0 0.0
        %924 = vmatprep.subr.mxu0 0.0
        %925 = vmatpush1.msra.mxu0 0.0
        %926 = vmatprep.subr.mxu0 0.0
        %927 = vmatpush1.msra.mxu0 0.0
        %928 = vmatprep.subr.mxu0 0.0
        %929 = vmatpush1.msra.mxu0 0.0
        %930 = vmatprep.subr.mxu0 0.0
        %931 = vmatpush1.msra.mxu0 0.0
        %932 = vmatprep.subr.mxu0 0.0
        %933 = vmatpush1.msra.mxu0 0.0
        %934 = vmatprep.subr.mxu0 0.0
        %935 = vmatpush1.msra.mxu0 0.0
        %936 = vmatprep.subr.mxu0 0.0
        %937 = vmatpush1.msra.mxu0 0.0
        %938 = vmatprep.subr.mxu0 0.0
        %939 = vmatpush1.msra.mxu0 0.0
        %940 = vmatprep.subr.mxu0 0.0
        %941 = vmatpush1.msra.mxu0 0.0
        %942 = vmatprep.subr.mxu0 0.0
        %943 = vmatpush1.msra.mxu0 0.0
        %944 = vmatprep.subr.mxu0 0.0
        %945 = vmatpush1.msra.mxu0 0.0
        %946 = vmatprep.subr.mxu0 0.0
        %947 = vmatpush1.msra.mxu0 0.0
        %948 = vmatprep.subr.mxu0 0.0
        %949 = vmatpush1.msra.mxu0 0.0
        %950 = vmatprep.subr.mxu0 0.0
        %951 = vmatpush1.msra.mxu0 0.0
        %952 = vmatprep.subr.mxu0 0.0
        %953 = vmatpush1.msra.mxu0 0.0
        %954 = vmatprep.subr.mxu0 0.0
        %955 = vmatpush1.msra.mxu0 0.0
        %956 = vmatprep.subr.mxu0 0.0
        %957 = vmatpush1.msra.mxu0 0.0
        %958 = vmatprep.subr.mxu0 0.0
        %959 = vmatpush1.msra.mxu0 0.0
        %960 = vmatprep.subr.mxu0 0.0
        %961 = vmatpush1.msra.mxu0 0.0
        %962 = vmatprep.subr.mxu0 0.0
        %963 = vmatpush1.msra.mxu0 0.0
        %964 = vmatprep.subr.mxu0 0.0
        %965 = vmatpush1.msra.mxu0 0.0
        %966 = vmatprep.subr.mxu0 0.0
        %967 = vmatpush1.msra.mxu0 0.0
        %968 = vmatprep.subr.mxu0 0.0
        %969 = vmatpush1.msra.mxu0 0.0
        %970 = vmatprep.subr.mxu0 0.0
        %971 = vmatpush1.msra.mxu0 0.0
        %972 = vmatprep.subr.mxu0 0.0
        %973 = vmatpush1.msra.mxu0 0.0
        %974 = vmatprep.subr.mxu0 0.0
        %975 = vmatpush1.msra.mxu0 0.0
        %976 = vmatprep.subr.mxu0 0.0
        %977 = vmatpush1.msra.mxu0 0.0
        %978 = vmatprep.subr.mxu0 0.0
        %979 = vmatpush1.msra.mxu0 0.0
        %980 = vmatprep.subr.mxu0 0.0
        %981 = vmatpush1.msra.mxu0 0.0
        %982 = vmatprep.subr.mxu0 0.0
        %983 = vmatpush1.msra.mxu0 0.0
        %984 = vmatprep.mubr.f32.mxu0 0.0
        %985 = vmatmul.mubr.f32.gmra.mrb[0].mxu0 %v918
        %v986 = vpop.f32.mrb[0].mxu0
        %v987 = vadd.f32 0.0, %v986
        %v988 = vpop.f32.mrb[0].mxu0
        %989 = vdwg.mxu0
        %v990 = vsel %vm917, %v772, 0
        %992 = vmatprep.subr.mxu0 0.0
        %993 = vmatpush1.msra.mxu0 %v837
        %994 = vmatprep.subr.mxu0 0.0
        %995 = vmatpush1.msra.mxu0 0.0
        %996 = vmatprep.subr.mxu0 0.0
        %997 = vmatpush1.msra.mxu0 0.0
        %998 = vmatprep.subr.mxu0 0.0
        %999 = vmatpush1.msra.mxu0 0.0
        %1000 = vmatprep.subr.mxu0 0.0
        %1001 = vmatpush1.msra.mxu0 0.0
        %1002 = vmatprep.subr.mxu0 0.0
        %1003 = vmatpush1.msra.mxu0 0.0
        %1004 = vmatprep.subr.mxu0 0.0
        %1005 = vmatpush1.msra.mxu0 0.0
        %1006 = vmatprep.subr.mxu0 0.0
        %1007 = vmatpush1.msra.mxu0 0.0
        %1008 = vmatprep.subr.mxu0 0.0
        %1009 = vmatpush1.msra.mxu0 0.0
        %1010 = vmatprep.subr.mxu0 0.0
        %1011 = vmatpush1.msra.mxu0 0.0
        %1012 = vmatprep.subr.mxu0 0.0
        %1013 = vmatpush1.msra.mxu0 0.0
        %1014 = vmatprep.subr.mxu0 0.0
        %1015 = vmatpush1.msra.mxu0 0.0
        %1016 = vmatprep.subr.mxu0 0.0
        %1017 = vmatpush1.msra.mxu0 0.0
        %1018 = vmatprep.subr.mxu0 0.0
        %1019 = vmatpush1.msra.mxu0 0.0
        %1020 = vmatprep.subr.mxu0 0.0
        %1021 = vmatpush1.msra.mxu0 0.0
        %1022 = vmatprep.subr.mxu0 0.0
        %1023 = vmatpush1.msra.mxu0 0.0
        %1024 = vmatprep.subr.mxu0 0.0
        %1025 = vmatpush1.msra.mxu0 0.0
        %1026 = vmatprep.subr.mxu0 0.0
        %1027 = vmatpush1.msra.mxu0 0.0
        %1028 = vmatprep.subr.mxu0 0.0
        %1029 = vmatpush1.msra.mxu0 0.0
        %1030 = vmatprep.subr.mxu0 0.0
        %1031 = vmatpush1.msra.mxu0 0.0
        %1032 = vmatprep.subr.mxu0 0.0
        %1033 = vmatpush1.msra.mxu0 0.0
        %1034 = vmatprep.subr.mxu0 0.0
        %1035 = vmatpush1.msra.mxu0 0.0
        %1036 = vmatprep.subr.mxu0 0.0
        %1037 = vmatpush1.msra.mxu0 0.0
        %1038 = vmatprep.subr.mxu0 0.0
        %1039 = vmatpush1.msra.mxu0 0.0
        %1040 = vmatprep.subr.mxu0 0.0
        %1041 = vmatpush1.msra.mxu0 0.0
        %1042 = vmatprep.subr.mxu0 0.0
        %1043 = vmatpush1.msra.mxu0 0.0
        %1044 = vmatprep.subr.mxu0 0.0
        %1045 = vmatpush1.msra.mxu0 0.0
        %1046 = vmatprep.subr.mxu0 0.0
        %1047 = vmatpush1.msra.mxu0 0.0
        %1048 = vmatprep.subr.mxu0 0.0
        %1049 = vmatpush1.msra.mxu0 0.0
        %1050 = vmatprep.subr.mxu0 0.0
        %1051 = vmatpush1.msra.mxu0 0.0
        %1052 = vmatprep.subr.mxu0 0.0
        %1053 = vmatpush1.msra.mxu0 0.0
        %1054 = vmatprep.subr.mxu0 0.0
        %1055 = vmatpush1.msra.mxu0 0.0
        %1056 = vmatprep.mubr.f32.mxu0 0.0
        %1057 = vmatmul.mubr.f32.gmra.mrb[0].mxu0 %v990
        %v1058 = vpop.f32.mrb[0].mxu0
        %v1059 = vadd.f32 0.0, %v1058
        %v1060 = vpop.f32.mrb[0].mxu0
        %1061 = vdwg.mxu0
        %v1062 = vsel %vm917, %v774, 0
        %1064 = vmatprep.subr.mxu0 0.0
        %1065 = vmatpush1.msra.mxu0 %v869
        %1066 = vmatprep.subr.mxu0 0.0
        %1067 = vmatpush1.msra.mxu0 0.0
        %1068 = vmatprep.subr.mxu0 0.0
        %1069 = vmatpush1.msra.mxu0 0.0
        %1070 = vmatprep.subr.mxu0 0.0
        %1071 = vmatpush1.msra.mxu0 0.0
        %1072 = vmatprep.subr.mxu0 0.0
        %1073 = vmatpush1.msra.mxu0 0.0
        %1074 = vmatprep.subr.mxu0 0.0
        %1075 = vmatpush1.msra.mxu0 0.0
        %1076 = vmatprep.subr.mxu0 0.0
        %1077 = vmatpush1.msra.mxu0 0.0
        %1078 = vmatprep.subr.mxu0 0.0
        %1079 = vmatpush1.msra.mxu0 0.0
        %1080 = vmatprep.subr.mxu0 0.0
        %1081 = vmatpush1.msra.mxu0 0.0
        %1082 = vmatprep.subr.mxu0 0.0
        %1083 = vmatpush1.msra.mxu0 0.0
        %1084 = vmatprep.subr.mxu0 0.0
        %1085 = vmatpush1.msra.mxu0 0.0
        %1086 = vmatprep.subr.mxu0 0.0
        %1087 = vmatpush1.msra.mxu0 0.0
        %1088 = vmatprep.subr.mxu0 0.0
        %1089 = vmatpush1.msra.mxu0 0.0
        %1090 = vmatprep.subr.mxu0 0.0
        %1091 = vmatpush1.msra.mxu0 0.0
        %1092 = vmatprep.subr.mxu0 0.0
        %1093 = vmatpush1.msra.mxu0 0.0
        %1094 = vmatprep.subr.mxu0 0.0
        %1095 = vmatpush1.msra.mxu0 0.0
        %1096 = vmatprep.subr.mxu0 0.0
        %1097 = vmatpush1.msra.mxu0 0.0
        %1098 = vmatprep.subr.mxu0 0.0
        %1099 = vmatpush1.msra.mxu0 0.0
        %1100 = vmatprep.subr.mxu0 0.0
        %1101 = vmatpush1.msra.mxu0 0.0
        %1102 = vmatprep.subr.mxu0 0.0
        %1103 = vmatpush1.msra.mxu0 0.0
        %1104 = vmatprep.subr.mxu0 0.0
        %1105 = vmatpush1.msra.mxu0 0.0
        %1106 = vmatprep.subr.mxu0 0.0
        %1107 = vmatpush1.msra.mxu0 0.0
        %1108 = vmatprep.subr.mxu0 0.0
        %1109 = vmatpush1.msra.mxu0 0.0
        %1110 = vmatprep.subr.mxu0 0.0
        %1111 = vmatpush1.msra.mxu0 0.0
        %1112 = vmatprep.subr.mxu0 0.0
        %1113 = vmatpush1.msra.mxu0 0.0
        %1114 = vmatprep.subr.mxu0 0.0
        %1115 = vmatpush1.msra.mxu0 0.0
        %1116 = vmatprep.subr.mxu0 0.0
        %1117 = vmatpush1.msra.mxu0 0.0
        %1118 = vmatprep.subr.mxu0 0.0
        %1119 = vmatpush1.msra.mxu0 0.0
        %1120 = vmatprep.subr.mxu0 0.0
        %1121 = vmatpush1.msra.mxu0 0.0
        %1122 = vmatprep.subr.mxu0 0.0
        %1123 = vmatpush1.msra.mxu0 0.0
        %1124 = vmatprep.subr.mxu0 0.0
        %1125 = vmatpush1.msra.mxu0 0.0
        %1126 = vmatprep.subr.mxu0 0.0
        %1127 = vmatpush1.msra.mxu0 0.0
        %1128 = vmatprep.mubr.f32.mxu0 0.0
        %1129 = vmatmul.mubr.f32.gmra.mrb[0].mxu0 %v1062
        %v1130 = vpop.f32.mrb[0].mxu0
        %v1131 = vadd.f32 0.0, %v1130
        %v1132 = vpop.f32.mrb[0].mxu0
        %1133 = vdwg.mxu0
        %v1134 = vsel %vm917, %v776, 0
        %1136 = vmatprep.subr.mxu0 0.0
        %1137 = vmatpush1.msra.mxu0 %v901
        %1138 = vmatprep.subr.mxu0 0.0
        %1139 = vmatpush1.msra.mxu0 0.0
        %1140 = vmatprep.subr.mxu0 0.0
        %1141 = vmatpush1.msra.mxu0 0.0
        %1142 = vmatprep.subr.mxu0 0.0
        %1143 = vmatpush1.msra.mxu0 0.0
        %1144 = vmatprep.subr.mxu0 0.0
        %1145 = vmatpush1.msra.mxu0 0.0
        %1146 = vmatprep.subr.mxu0 0.0
        %1147 = vmatpush1.msra.mxu0 0.0
        %1148 = vmatprep.subr.mxu0 0.0
        %1149 = vmatpush1.msra.mxu0 0.0
        %1150 = vmatprep.subr.mxu0 0.0
        %1151 = vmatpush1.msra.mxu0 0.0
        %1152 = vmatprep.subr.mxu0 0.0
        %1153 = vmatpush1.msra.mxu0 0.0
        %1154 = vmatprep.subr.mxu0 0.0
        %1155 = vmatpush1.msra.mxu0 0.0
        %1156 = vmatprep.subr.mxu0 0.0
        %1157 = vmatpush1.msra.mxu0 0.0
        %1158 = vmatprep.subr.mxu0 0.0
        %1159 = vmatpush1.msra.mxu0 0.0
        %1160 = vmatprep.subr.mxu0 0.0
        %1161 = vmatpush1.msra.mxu0 0.0
        %1162 = vmatprep.subr.mxu0 0.0
        %1163 = vmatpush1.msra.mxu0 0.0
        %1164 = vmatprep.subr.mxu0 0.0
        %1165 = vmatpush1.msra.mxu0 0.0
        %1166 = vmatprep.subr.mxu0 0.0
        %1167 = vmatpush1.msra.mxu0 0.0
        %1168 = vmatprep.subr.mxu0 0.0
        %1169 = vmatpush1.msra.mxu0 0.0
        %1170 = vmatprep.subr.mxu0 0.0
        %1171 = vmatpush1.msra.mxu0 0.0
        %1172 = vmatprep.subr.mxu0 0.0
        %1173 = vmatpush1.msra.mxu0 0.0
        %1174 = vmatprep.subr.mxu0 0.0
        %1175 = vmatpush1.msra.mxu0 0.0
        %1176 = vmatprep.subr.mxu0 0.0
        %1177 = vmatpush1.msra.mxu0 0.0
        %1178 = vmatprep.subr.mxu0 0.0
        %1179 = vmatpush1.msra.mxu0 0.0
        %1180 = vmatprep.subr.mxu0 0.0
        %1181 = vmatpush1.msra.mxu0 0.0
        %1182 = vmatprep.subr.mxu0 0.0
        %1183 = vmatpush1.msra.mxu0 0.0
        %1184 = vmatprep.subr.mxu0 0.0
        %1185 = vmatpush1.msra.mxu0 0.0
        %1186 = vmatprep.subr.mxu0 0.0
        %1187 = vmatpush1.msra.mxu0 0.0
        %1188 = vmatprep.subr.mxu0 0.0
        %1189 = vmatpush1.msra.mxu0 0.0
        %1190 = vmatprep.subr.mxu0 0.0
        %1191 = vmatpush1.msra.mxu0 0.0
        %1192 = vmatprep.subr.mxu0 0.0
        %1193 = vmatpush1.msra.mxu0 0.0
        %1194 = vmatprep.subr.mxu0 0.0
        %1195 = vmatpush1.msra.mxu0 0.0
        %1196 = vmatprep.subr.mxu0 0.0
        %1197 = vmatpush1.msra.mxu0 0.0
        %1198 = vmatprep.subr.mxu0 0.0
        %1199 = vmatpush1.msra.mxu0 0.0
        %1200 = vmatprep.mubr.f32.mxu0 0.0
        %1201 = vmatmul.mubr.f32.gmra.mrb[0].mxu0 %v1134
        %v1202 = vpop.f32.mrb[0].mxu0
        %v1203 = vadd.f32 0.0, %v1202
        %v1204 = vpop.f32.mrb[0].mxu0
        %1205 = vdwg.mxu0
        %v1206 = vmul.f32 %v987, 0.35355338
        %v1207 = vmul.f32 %v1059, 0.35355338
        %v1208 = vmul.f32 %v1131, 0.35355338
        %v1209 = vmul.f32 %v1203, 0.35355338
        %v1210 = vadd.f32 %v1206, %v660
        %v1211 = vadd.f32 %v1207, %v660
        %v1212 = vadd.f32 %v1208, %v660
        %v1213 = vadd.f32 %v1209, %v660
        %v1214 = vsel %vm917, %v1210, -inf
        %1215 = vmax.xlane.f32.xlu0 %v1214
        %v1216 = vpop.xlane.xlu0 %1215
        %v1217 = vsel %vm917, %v1211, -inf
        %1218 = vmax.xlane.f32.xlu0 %v1217
        %v1219 = vpop.xlane.xlu0 %1218
        %v1220 = vsel %vm917, %v1212, -inf
        %1221 = vmax.xlane.f32.xlu0 %v1220
        %v1222 = vpop.xlane.xlu0 %1221
        %v1223 = vsel %vm917, %v1213, -inf
        %1224 = vmax.xlane.f32.xlu0 %v1223
        %v1225 = vpop.xlane.xlu0 %1224
        %v1226 = vsub.f32 %v1210, %v1216
        %v1227 = vsub.f32 %v1211, %v1219
        %v1228 = vsub.f32 %v1212, %v1222
        %v1229 = vsub.f32 %v1213, %v1225
        %v1230 = vmul.f32 %v1226, 1.442695
        %v1231 = vpow.pop %v1230
        %v1232 = vmul.f32 %v1227, 1.442695
        %v1233 = vpow.pop %v1232
        %v1234 = vmul.f32 %v1228, 1.442695
        %v1235 = vpow.pop %v1234
        %v1236 = vmul.f32 %v1229, 1.442695
        %v1237 = vpow.pop %v1236
        %v1238 = vsel %vm917, %v1231, 0.0
        %1239 = vadd.xlane.f32.xlu0 %v1238
        %v1240 = vpop.xlane.xlu0 %1239
        %v1241 = vsel %vm917, %v1233, 0.0
        %1242 = vadd.xlane.f32.xlu0 %v1241
        %v1243 = vpop.xlane.xlu0 %1242
        %v1244 = vsel %vm917, %v1235, 0.0
        %1245 = vadd.xlane.f32.xlu0 %v1244
        %v1246 = vpop.xlane.xlu0 %1245
        %v1247 = vsel %vm917, %v1237, 0.0
        %1248 = vadd.xlane.f32.xlu0 %v1247
        %v1249 = vpop.xlane.xlu0 %1248
        %v1250 = vrcp.pop %v1240
        %v1251 = vmul.f32 %v1231, %v1250
        %v1252 = vrcp.pop %v1243
        %v1253 = vmul.f32 %v1233, %v1252
        %v1254 = vrcp.pop %v1246
        %v1255 = vmul.f32 %v1235, %v1254
        %v1256 = vrcp.pop %v1249
        %v1257 = vmul.f32 %v1237, %v1256
        %1258 = vrot.lane.b32.xlu0 %v767, 64
        %v1259 = vpop.permute.xlu0 %1258
        %1260 = vrot.lane.b32.xlu0 %v772, 64
        %v1261 = vpop.permute.xlu0 %1260
        %1262 = vrot.lane.b32.xlu0 %v774, 64
        %v1263 = vpop.permute.xlu0 %1262
        %1264 = vrot.lane.b32.xlu0 %v776, 64
        %v1265 = vpop.permute.xlu0 %1264
        %1270 = vxpose.xlu0.b32.start [1/16] %v1259, 128
        %1271 = vxpose.xlu0.b32.cont [2/16] 0.0, 128
        %1272 = vxpose.xlu0.b32.cont [3/16] 0.0, 128
        %1273 = vxpose.xlu0.b32.cont [4/16] 0.0, 128
        %1274 = vxpose.xlu0.b32.cont [5/16] 0.0, 128
        %1275 = vxpose.xlu0.b32.cont [6/16] 0.0, 128
        %1276 = vxpose.xlu0.b32.cont [7/16] 0.0, 128
        %1277 = vxpose.xlu0.b32.cont [8/16] 0.0, 128
        %1278 = vxpose.xlu0.b32.cont [9/16] 0.0, 128
        %1279 = vxpose.xlu0.b32.cont [10/16] 0.0, 128
        %1280 = vxpose.xlu0.b32.cont [11/16] 0.0, 128
        %1281 = vxpose.xlu0.b32.cont [12/16] 0.0, 128
        %1282 = vxpose.xlu0.b32.cont [13/16] 0.0, 128
        %1283 = vxpose.xlu0.b32.cont [14/16] 0.0, 128
        %1284 = vxpose.xlu0.b32.cont [15/16] 0.0, 128
        %1285 = vxpose.xlu0.b32.end [16/16] 0.0, 128
        %v1286 = vpop.trf.xlu0
        %v1287 = vpop.trf.xlu0
        %v1288 = vpop.trf.xlu0
        %v1289 = vpop.trf.xlu0
        %v1290 = vpop.trf.xlu0
        %v1291 = vpop.trf.xlu0
        %v1292 = vpop.trf.xlu0
        %v1293 = vpop.trf.xlu0
        %v1294 = vpop.trf.xlu0
        %v1295 = vpop.trf.xlu0
        %v1296 = vpop.trf.xlu0
        %v1297 = vpop.trf.xlu0
        %v1298 = vpop.trf.xlu0
        %v1299 = vpop.trf.xlu0
        %v1300 = vpop.trf.xlu0
        %v1301 = vpop.trf.xlu0
        %1302 = vxpose.xlu0.b32.start [1/16] %v1261, 128
        %1303 = vxpose.xlu0.b32.cont [2/16] 0.0, 128
        %1304 = vxpose.xlu0.b32.cont [3/16] 0.0, 128
        %1305 = vxpose.xlu0.b32.cont [4/16] 0.0, 128
        %1306 = vxpose.xlu0.b32.cont [5/16] 0.0, 128
        %1307 = vxpose.xlu0.b32.cont [6/16] 0.0, 128
        %1308 = vxpose.xlu0.b32.cont [7/16] 0.0, 128
        %1309 = vxpose.xlu0.b32.cont [8/16] 0.0, 128
        %1310 = vxpose.xlu0.b32.cont [9/16] 0.0, 128
        %1311 = vxpose.xlu0.b32.cont [10/16] 0.0, 128
        %1312 = vxpose.xlu0.b32.cont [11/16] 0.0, 128
        %1313 = vxpose.xlu0.b32.cont [12/16] 0.0, 128
        %1314 = vxpose.xlu0.b32.cont [13/16] 0.0, 128
        %1315 = vxpose.xlu0.b32.cont [14/16] 0.0, 128
        %1316 = vxpose.xlu0.b32.cont [15/16] 0.0, 128
        %1317 = vxpose.xlu0.b32.end [16/16] 0.0, 128
        %v1318 = vpop.trf.xlu0
        %v1319 = vpop.trf.xlu0
        %v1320 = vpop.trf.xlu0
        %v1321 = vpop.trf.xlu0
        %v1322 = vpop.trf.xlu0
        %v1323 = vpop.trf.xlu0
        %v1324 = vpop.trf.xlu0
        %v1325 = vpop.trf.xlu0
        %v1326 = vpop.trf.xlu0
        %v1327 = vpop.trf.xlu0
        %v1328 = vpop.trf.xlu0
        %v1329 = vpop.trf.xlu0
        %v1330 = vpop.trf.xlu0
        %v1331 = vpop.trf.xlu0
        %v1332 = vpop.trf.xlu0
        %v1333 = vpop.trf.xlu0
        %1334 = vxpose.xlu0.b32.start [1/16] %v1263, 128
        %1335 = vxpose.xlu0.b32.cont [2/16] 0.0, 128
        %1336 = vxpose.xlu0.b32.cont [3/16] 0.0, 128
        %1337 = vxpose.xlu0.b32.cont [4/16] 0.0, 128
        %1338 = vxpose.xlu0.b32.cont [5/16] 0.0, 128
        %1339 = vxpose.xlu0.b32.cont [6/16] 0.0, 128
        %1340 = vxpose.xlu0.b32.cont [7/16] 0.0, 128
        %1341 = vxpose.xlu0.b32.cont [8/16] 0.0, 128
        %1342 = vxpose.xlu0.b32.cont [9/16] 0.0, 128
        %1343 = vxpose.xlu0.b32.cont [10/16] 0.0, 128
        %1344 = vxpose.xlu0.b32.cont [11/16] 0.0, 128
        %1345 = vxpose.xlu0.b32.cont [12/16] 0.0, 128
        %1346 = vxpose.xlu0.b32.cont [13/16] 0.0, 128
        %1347 = vxpose.xlu0.b32.cont [14/16] 0.0, 128
        %1348 = vxpose.xlu0.b32.cont [15/16] 0.0, 128
        %1349 = vxpose.xlu0.b32.end [16/16] 0.0, 128
        %v1350 = vpop.trf.xlu0
        %v1351 = vpop.trf.xlu0
        %v1352 = vpop.trf.xlu0
        %v1353 = vpop.trf.xlu0
        %v1354 = vpop.trf.xlu0
        %v1355 = vpop.trf.xlu0
        %v1356 = vpop.trf.xlu0
        %v1357 = vpop.trf.xlu0
        %v1358 = vpop.trf.xlu0
        %v1359 = vpop.trf.xlu0
        %v1360 = vpop.trf.xlu0
        %v1361 = vpop.trf.xlu0
        %v1362 = vpop.trf.xlu0
        %v1363 = vpop.trf.xlu0
        %v1364 = vpop.trf.xlu0
        %v1365 = vpop.trf.xlu0
        %1366 = vxpose.xlu0.b32.start [1/16] %v1265, 128
        %1367 = vxpose.xlu0.b32.cont [2/16] 0.0, 128
        %1368 = vxpose.xlu0.b32.cont [3/16] 0.0, 128
        %1369 = vxpose.xlu0.b32.cont [4/16] 0.0, 128
        %1370 = vxpose.xlu0.b32.cont [5/16] 0.0, 128
        %1371 = vxpose.xlu0.b32.cont [6/16] 0.0, 128
        %1372 = vxpose.xlu0.b32.cont [7/16] 0.0, 128
        %1373 = vxpose.xlu0.b32.cont [8/16] 0.0, 128
        %1374 = vxpose.xlu0.b32.cont [9/16] 0.0, 128
        %1375 = vxpose.xlu0.b32.cont [10/16] 0.0, 128
        %1376 = vxpose.xlu0.b32.cont [11/16] 0.0, 128
        %1377 = vxpose.xlu0.b32.cont [12/16] 0.0, 128
        %1378 = vxpose.xlu0.b32.cont [13/16] 0.0, 128
        %1379 = vxpose.xlu0.b32.cont [14/16] 0.0, 128
        %1380 = vxpose.xlu0.b32.cont [15/16] 0.0, 128
        %1381 = vxpose.xlu0.b32.end [16/16] 0.0, 128
        %v1382 = vpop.trf.xlu0
        %v1383 = vpop.trf.xlu0
        %v1384 = vpop.trf.xlu0
        %v1385 = vpop.trf.xlu0
        %v1386 = vpop.trf.xlu0
        %v1387 = vpop.trf.xlu0
        %v1388 = vpop.trf.xlu0
        %v1389 = vpop.trf.xlu0
        %v1390 = vpop.trf.xlu0
        %v1391 = vpop.trf.xlu0
        %v1392 = vpop.trf.xlu0
        %v1393 = vpop.trf.xlu0
        %v1394 = vpop.trf.xlu0
        %v1395 = vpop.trf.xlu0
        %v1396 = vpop.trf.xlu0
        %v1397 = vpop.trf.xlu0
        %v1399 = vsel %vm917, %v1286, 0
        %v1402 = vsel %vm917, %v1251, 0
        %1404 = vmatprep.subr.mxu0 0.0
        %1405 = vmatpush1.xpose.msra.mxu0 %v1402
        %1406 = vmatprep.subr.mxu0 0.0
        %1407 = vmatpush1.xpose.msra.mxu0 0.0
        %1408 = vmatprep.subr.mxu0 0.0
        %1409 = vmatpush1.xpose.msra.mxu0 0.0
        %1410 = vmatprep.subr.mxu0 0.0
        %1411 = vmatpush1.xpose.msra.mxu0 0.0
        %1412 = vmatprep.subr.mxu0 0.0
        %1413 = vmatpush1.xpose.msra.mxu0 0.0
        %1414 = vmatprep.subr.mxu0 0.0
        %1415 = vmatpush1.xpose.msra.mxu0 0.0
        %1416 = vmatprep.subr.mxu0 0.0
        %1417 = vmatpush1.xpose.msra.mxu0 0.0
        %1418 = vmatprep.subr.mxu0 0.0
        %1419 = vmatpush1.xpose.msra.mxu0 0.0
        %1420 = vmatprep.subr.mxu0 0.0
        %1421 = vmatpush1.xpose.msra.mxu0 0.0
        %1422 = vmatprep.subr.mxu0 0.0
        %1423 = vmatpush1.xpose.msra.mxu0 0.0
        %1424 = vmatprep.subr.mxu0 0.0
        %1425 = vmatpush1.xpose.msra.mxu0 0.0
        %1426 = vmatprep.subr.mxu0 0.0
        %1427 = vmatpush1.xpose.msra.mxu0 0.0
        %1428 = vmatprep.subr.mxu0 0.0
        %1429 = vmatpush1.xpose.msra.mxu0 0.0
        %1430 = vmatprep.subr.mxu0 0.0
        %1431 = vmatpush1.xpose.msra.mxu0 0.0
        %1432 = vmatprep.subr.mxu0 0.0
        %1433 = vmatpush1.xpose.msra.mxu0 0.0
        %1434 = vmatprep.subr.mxu0 0.0
        %1435 = vmatpush1.xpose.msra.mxu0 0.0
        %1436 = vmatprep.subr.mxu0 0.0
        %1437 = vmatpush1.xpose.msra.mxu0 0.0
        %1438 = vmatprep.subr.mxu0 0.0
        %1439 = vmatpush1.xpose.msra.mxu0 0.0
        %1440 = vmatprep.subr.mxu0 0.0
        %1441 = vmatpush1.xpose.msra.mxu0 0.0
        %1442 = vmatprep.subr.mxu0 0.0
        %1443 = vmatpush1.xpose.msra.mxu0 0.0
        %1444 = vmatprep.subr.mxu0 0.0
        %1445 = vmatpush1.xpose.msra.mxu0 0.0
        %1446 = vmatprep.subr.mxu0 0.0
        %1447 = vmatpush1.xpose.msra.mxu0 0.0
        %1448 = vmatprep.subr.mxu0 0.0
        %1449 = vmatpush1.xpose.msra.mxu0 0.0
        %1450 = vmatprep.subr.mxu0 0.0
        %1451 = vmatpush1.xpose.msra.mxu0 0.0
        %1452 = vmatprep.subr.mxu0 0.0
        %1453 = vmatpush1.xpose.msra.mxu0 0.0
        %1454 = vmatprep.subr.mxu0 0.0
        %1455 = vmatpush1.xpose.msra.mxu0 0.0
        %1456 = vmatprep.subr.mxu0 0.0
        %1457 = vmatpush1.xpose.msra.mxu0 0.0
        %1458 = vmatprep.subr.mxu0 0.0
        %1459 = vmatpush1.xpose.msra.mxu0 0.0
        %1460 = vmatprep.subr.mxu0 0.0
        %1461 = vmatpush1.xpose.msra.mxu0 0.0
        %1462 = vmatprep.subr.mxu0 0.0
        %1463 = vmatpush1.xpose.msra.mxu0 0.0
        %1464 = vmatprep.subr.mxu0 0.0
        %1465 = vmatpush1.xpose.msra.mxu0 0.0
        %1466 = vmatprep.subr.mxu0 0.0
        %1467 = vmatpush1.xpose.msra.mxu0 0.0
        %1468 = vmatprep.mubr.f32.mxu0 0.0
        %1469 = vmatmul.mubr.f32.gmra.mrb[0].mxu0 %v1399
        %v1470 = vpop.f32.mrb[0].mxu0
        %v1471 = vadd.f32 0.0, %v1470
        %v1472 = vpop.f32.mrb[0].mxu0
        %1473 = vdwg.mxu0
        %v1475 = vsel %vm917, %v1318, 0
        %v1478 = vsel %vm917, %v1253, 0
        %1480 = vmatprep.subr.mxu0 0.0
        %1481 = vmatpush1.xpose.msra.mxu0 %v1478
        %1482 = vmatprep.subr.mxu0 0.0
        %1483 = vmatpush1.xpose.msra.mxu0 0.0
        %1484 = vmatprep.subr.mxu0 0.0
        %1485 = vmatpush1.xpose.msra.mxu0 0.0
        %1486 = vmatprep.subr.mxu0 0.0
        %1487 = vmatpush1.xpose.msra.mxu0 0.0
        %1488 = vmatprep.subr.mxu0 0.0
        %1489 = vmatpush1.xpose.msra.mxu0 0.0
        %1490 = vmatprep.subr.mxu0 0.0
        %1491 = vmatpush1.xpose.msra.mxu0 0.0
        %1492 = vmatprep.subr.mxu0 0.0
        %1493 = vmatpush1.xpose.msra.mxu0 0.0
        %1494 = vmatprep.subr.mxu0 0.0
        %1495 = vmatpush1.xpose.msra.mxu0 0.0
        %1496 = vmatprep.subr.mxu0 0.0
        %1497 = vmatpush1.xpose.msra.mxu0 0.0
        %1498 = vmatprep.subr.mxu0 0.0
        %1499 = vmatpush1.xpose.msra.mxu0 0.0
        %1500 = vmatprep.subr.mxu0 0.0
        %1501 = vmatpush1.xpose.msra.mxu0 0.0
        %1502 = vmatprep.subr.mxu0 0.0
        %1503 = vmatpush1.xpose.msra.mxu0 0.0
        %1504 = vmatprep.subr.mxu0 0.0
        %1505 = vmatpush1.xpose.msra.mxu0 0.0
        %1506 = vmatprep.subr.mxu0 0.0
        %1507 = vmatpush1.xpose.msra.mxu0 0.0
        %1508 = vmatprep.subr.mxu0 0.0
        %1509 = vmatpush1.xpose.msra.mxu0 0.0
        %1510 = vmatprep.subr.mxu0 0.0
        %1511 = vmatpush1.xpose.msra.mxu0 0.0
        %1512 = vmatprep.subr.mxu0 0.0
        %1513 = vmatpush1.xpose.msra.mxu0 0.0
        %1514 = vmatprep.subr.mxu0 0.0
        %1515 = vmatpush1.xpose.msra.mxu0 0.0
        %1516 = vmatprep.subr.mxu0 0.0
        %1517 = vmatpush1.xpose.msra.mxu0 0.0
        %1518 = vmatprep.subr.mxu0 0.0
        %1519 = vmatpush1.xpose.msra.mxu0 0.0
        %1520 = vmatprep.subr.mxu0 0.0
        %1521 = vmatpush1.xpose.msra.mxu0 0.0
        %1522 = vmatprep.subr.mxu0 0.0
        %1523 = vmatpush1.xpose.msra.mxu0 0.0
        %1524 = vmatprep.subr.mxu0 0.0
        %1525 = vmatpush1.xpose.msra.mxu0 0.0
        %1526 = vmatprep.subr.mxu0 0.0
        %1527 = vmatpush1.xpose.msra.mxu0 0.0
        %1528 = vmatprep.subr.mxu0 0.0
        %1529 = vmatpush1.xpose.msra.mxu0 0.0
        %1530 = vmatprep.subr.mxu0 0.0
        %1531 = vmatpush1.xpose.msra.mxu0 0.0
        %1532 = vmatprep.subr.mxu0 0.0
        %1533 = vmatpush1.xpose.msra.mxu0 0.0
        %1534 = vmatprep.subr.mxu0 0.0
        %1535 = vmatpush1.xpose.msra.mxu0 0.0
        %1536 = vmatprep.subr.mxu0 0.0
        %1537 = vmatpush1.xpose.msra.mxu0 0.0
        %1538 = vmatprep.subr.mxu0 0.0
        %1539 = vmatpush1.xpose.msra.mxu0 0.0
        %1540 = vmatprep.subr.mxu0 0.0
        %1541 = vmatpush1.xpose.msra.mxu0 0.0
        %1542 = vmatprep.subr.mxu0 0.0
        %1543 = vmatpush1.xpose.msra.mxu0 0.0
        %1544 = vmatprep.mubr.f32.mxu0 0.0
        %1545 = vmatmul.mubr.f32.gmra.mrb[0].mxu0 %v1475
        %v1546 = vpop.f32.mrb[0].mxu0
        %v1547 = vadd.f32 0.0, %v1546
        %v1548 = vpop.f32.mrb[0].mxu0
        %1549 = vdwg.mxu0
        %v1551 = vsel %vm917, %v1350, 0
        %v1554 = vsel %vm917, %v1255, 0
        %1556 = vmatprep.subr.mxu0 0.0
        %1557 = vmatpush1.xpose.msra.mxu0 %v1554
        %1558 = vmatprep.subr.mxu0 0.0
        %1559 = vmatpush1.xpose.msra.mxu0 0.0
        %1560 = vmatprep.subr.mxu0 0.0
        %1561 = vmatpush1.xpose.msra.mxu0 0.0
        %1562 = vmatprep.subr.mxu0 0.0
        %1563 = vmatpush1.xpose.msra.mxu0 0.0
        %1564 = vmatprep.subr.mxu0 0.0
        %1565 = vmatpush1.xpose.msra.mxu0 0.0
        %1566 = vmatprep.subr.mxu0 0.0
        %1567 = vmatpush1.xpose.msra.mxu0 0.0
        %1568 = vmatprep.subr.mxu0 0.0
        %1569 = vmatpush1.xpose.msra.mxu0 0.0
        %1570 = vmatprep.subr.mxu0 0.0
        %1571 = vmatpush1.xpose.msra.mxu0 0.0
        %1572 = vmatprep.subr.mxu0 0.0
        %1573 = vmatpush1.xpose.msra.mxu0 0.0
        %1574 = vmatprep.subr.mxu0 0.0
        %1575 = vmatpush1.xpose.msra.mxu0 0.0
        %1576 = vmatprep.subr.mxu0 0.0
        %1577 = vmatpush1.xpose.msra.mxu0 0.0
        %1578 = vmatprep.subr.mxu0 0.0
        %1579 = vmatpush1.xpose.msra.mxu0 0.0
        %1580 = vmatprep.subr.mxu0 0.0
        %1581 = vmatpush1.xpose.msra.mxu0 0.0
        %1582 = vmatprep.subr.mxu0 0.0
        %1583 = vmatpush1.xpose.msra.mxu0 0.0
        %1584 = vmatprep.subr.mxu0 0.0
        %1585 = vmatpush1.xpose.msra.mxu0 0.0
        %1586 = vmatprep.subr.mxu0 0.0
        %1587 = vmatpush1.xpose.msra.mxu0 0.0
        %1588 = vmatprep.subr.mxu0 0.0
        %1589 = vmatpush1.xpose.msra.mxu0 0.0
        %1590 = vmatprep.subr.mxu0 0.0
        %1591 = vmatpush1.xpose.msra.mxu0 0.0
        %1592 = vmatprep.subr.mxu0 0.0
        %1593 = vmatpush1.xpose.msra.mxu0 0.0
        %1594 = vmatprep.subr.mxu0 0.0
        %1595 = vmatpush1.xpose.msra.mxu0 0.0
        %1596 = vmatprep.subr.mxu0 0.0
        %1597 = vmatpush1.xpose.msra.mxu0 0.0
        %1598 = vmatprep.subr.mxu0 0.0
        %1599 = vmatpush1.xpose.msra.mxu0 0.0
        %1600 = vmatprep.subr.mxu0 0.0
        %1601 = vmatpush1.xpose.msra.mxu0 0.0
        %1602 = vmatprep.subr.mxu0 0.0
        %1603 = vmatpush1.xpose.msra.mxu0 0.0
        %1604 = vmatprep.subr.mxu0 0.0
        %1605 = vmatpush1.xpose.msra.mxu0 0.0
        %1606 = vmatprep.subr.mxu0 0.0
        %1607 = vmatpush1.xpose.msra.mxu0 0.0
        %1608 = vmatprep.subr.mxu0 0.0
        %1609 = vmatpush1.xpose.msra.mxu0 0.0
        %1610 = vmatprep.subr.mxu0 0.0
        %1611 = vmatpush1.xpose.msra.mxu0 0.0
        %1612 = vmatprep.subr.mxu0 0.0
        %1613 = vmatpush1.xpose.msra.mxu0 0.0
        %1614 = vmatprep.subr.mxu0 0.0
        %1615 = vmatpush1.xpose.msra.mxu0 0.0
        %1616 = vmatprep.subr.mxu0 0.0
        %1617 = vmatpush1.xpose.msra.mxu0 0.0
        %1618 = vmatprep.subr.mxu0 0.0
        %1619 = vmatpush1.xpose.msra.mxu0 0.0
        %1620 = vmatprep.mubr.f32.mxu0 0.0
        %1621 = vmatmul.mubr.f32.gmra.mrb[0].mxu0 %v1551
        %v1622 = vpop.f32.mrb[0].mxu0
        %v1623 = vadd.f32 0.0, %v1622
        %v1624 = vpop.f32.mrb[0].mxu0
        %1625 = vdwg.mxu0
        %v1627 = vsel %vm917, %v1382, 0
        %v1630 = vsel %vm917, %v1257, 0
        %1632 = vmatprep.subr.mxu0 0.0
        %1633 = vmatpush1.xpose.msra.mxu0 %v1630
        %1634 = vmatprep.subr.mxu0 0.0
        %1635 = vmatpush1.xpose.msra.mxu0 0.0
        %1636 = vmatprep.subr.mxu0 0.0
        %1637 = vmatpush1.xpose.msra.mxu0 0.0
        %1638 = vmatprep.subr.mxu0 0.0
        %1639 = vmatpush1.xpose.msra.mxu0 0.0
        %1640 = vmatprep.subr.mxu0 0.0
        %1641 = vmatpush1.xpose.msra.mxu0 0.0
        %1642 = vmatprep.subr.mxu0 0.0
        %1643 = vmatpush1.xpose.msra.mxu0 0.0
        %1644 = vmatprep.subr.mxu0 0.0
        %1645 = vmatpush1.xpose.msra.mxu0 0.0
        %1646 = vmatprep.subr.mxu0 0.0
        %1647 = vmatpush1.xpose.msra.mxu0 0.0
        %1648 = vmatprep.subr.mxu0 0.0
        %1649 = vmatpush1.xpose.msra.mxu0 0.0
        %1650 = vmatprep.subr.mxu0 0.0
        %1651 = vmatpush1.xpose.msra.mxu0 0.0
        %1652 = vmatprep.subr.mxu0 0.0
        %1653 = vmatpush1.xpose.msra.mxu0 0.0
        %1654 = vmatprep.subr.mxu0 0.0
        %1655 = vmatpush1.xpose.msra.mxu0 0.0
        %1656 = vmatprep.subr.mxu0 0.0
        %1657 = vmatpush1.xpose.msra.mxu0 0.0
        %1658 = vmatprep.subr.mxu0 0.0
        %1659 = vmatpush1.xpose.msra.mxu0 0.0
        %1660 = vmatprep.subr.mxu0 0.0
        %1661 = vmatpush1.xpose.msra.mxu0 0.0
        %1662 = vmatprep.subr.mxu0 0.0
        %1663 = vmatpush1.xpose.msra.mxu0 0.0
        %1664 = vmatprep.subr.mxu0 0.0
        %1665 = vmatpush1.xpose.msra.mxu0 0.0
        %1666 = vmatprep.subr.mxu0 0.0
        %1667 = vmatpush1.xpose.msra.mxu0 0.0
        %1668 = vmatprep.subr.mxu0 0.0
        %1669 = vmatpush1.xpose.msra.mxu0 0.0
        %1670 = vmatprep.subr.mxu0 0.0
        %1671 = vmatpush1.xpose.msra.mxu0 0.0
        %1672 = vmatprep.subr.mxu0 0.0
        %1673 = vmatpush1.xpose.msra.mxu0 0.0
        %1674 = vmatprep.subr.mxu0 0.0
        %1675 = vmatpush1.xpose.msra.mxu0 0.0
        %1676 = vmatprep.subr.mxu0 0.0
        %1677 = vmatpush1.xpose.msra.mxu0 0.0
        %1678 = vmatprep.subr.mxu0 0.0
        %1679 = vmatpush1.xpose.msra.mxu0 0.0
        %1680 = vmatprep.subr.mxu0 0.0
        %1681 = vmatpush1.xpose.msra.mxu0 0.0
        %1682 = vmatprep.subr.mxu0 0.0
        %1683 = vmatpush1.xpose.msra.mxu0 0.0
        %1684 = vmatprep.subr.mxu0 0.0
        %1685 = vmatpush1.xpose.msra.mxu0 0.0
        %1686 = vmatprep.subr.mxu0 0.0
        %1687 = vmatpush1.xpose.msra.mxu0 0.0
        %1688 = vmatprep.subr.mxu0 0.0
        %1689 = vmatpush1.xpose.msra.mxu0 0.0
        %1690 = vmatprep.subr.mxu0 0.0
        %1691 = vmatpush1.xpose.msra.mxu0 0.0
        %1692 = vmatprep.subr.mxu0 0.0
        %1693 = vmatpush1.xpose.msra.mxu0 0.0
        %1694 = vmatprep.subr.mxu0 0.0
        %1695 = vmatpush1.xpose.msra.mxu0 0.0
        %1696 = vmatprep.mubr.f32.mxu0 0.0
        %1697 = vmatmul.mubr.f32.gmra.mrb[0].mxu0 %v1627
        %v1698 = vpop.f32.mrb[0].mxu0
        %v1699 = vadd.f32 0.0, %v1698
        %v1700 = vpop.f32.mrb[0].mxu0
        %1701 = vdwg.mxu0
        %1702 = vxpose.xlu0.b32.start [1/16] %v1471, 128
        %1703 = vxpose.xlu0.b32.cont [2/16] 0.0, 128
        %1704 = vxpose.xlu0.b32.cont [3/16] 0.0, 128
        %1705 = vxpose.xlu0.b32.cont [4/16] 0.0, 128
        %1706 = vxpose.xlu0.b32.cont [5/16] 0.0, 128
        %1707 = vxpose.xlu0.b32.cont [6/16] 0.0, 128
        %1708 = vxpose.xlu0.b32.cont [7/16] 0.0, 128
        %1709 = vxpose.xlu0.b32.cont [8/16] 0.0, 128
        %1710 = vxpose.xlu0.b32.cont [9/16] 0.0, 128
        %1711 = vxpose.xlu0.b32.cont [10/16] 0.0, 128
        %1712 = vxpose.xlu0.b32.cont [11/16] 0.0, 128
        %1713 = vxpose.xlu0.b32.cont [12/16] 0.0, 128
        %1714 = vxpose.xlu0.b32.cont [13/16] 0.0, 128
        %1715 = vxpose.xlu0.b32.cont [14/16] 0.0, 128
        %1716 = vxpose.xlu0.b32.cont [15/16] 0.0, 128
        %1717 = vxpose.xlu0.b32.end [16/16] 0.0, 128
        %v1718 = vpop.trf.xlu0
        %v1719 = vpop.trf.xlu0
        %v1720 = vpop.trf.xlu0
        %v1721 = vpop.trf.xlu0
        %v1722 = vpop.trf.xlu0
        %v1723 = vpop.trf.xlu0
        %v1724 = vpop.trf.xlu0
        %v1725 = vpop.trf.xlu0
        %v1726 = vpop.trf.xlu0
        %v1727 = vpop.trf.xlu0
        %v1728 = vpop.trf.xlu0
        %v1729 = vpop.trf.xlu0
        %v1730 = vpop.trf.xlu0
        %v1731 = vpop.trf.xlu0
        %v1732 = vpop.trf.xlu0
        %v1733 = vpop.trf.xlu0
        %1734 = vxpose.xlu0.b32.start [1/16] %v1547, 128
        %1735 = vxpose.xlu0.b32.cont [2/16] 0.0, 128
        %1736 = vxpose.xlu0.b32.cont [3/16] 0.0, 128
        %1737 = vxpose.xlu0.b32.cont [4/16] 0.0, 128
        %1738 = vxpose.xlu0.b32.cont [5/16] 0.0, 128
        %1739 = vxpose.xlu0.b32.cont [6/16] 0.0, 128
        %1740 = vxpose.xlu0.b32.cont [7/16] 0.0, 128
        %1741 = vxpose.xlu0.b32.cont [8/16] 0.0, 128
        %1742 = vxpose.xlu0.b32.cont [9/16] 0.0, 128
        %1743 = vxpose.xlu0.b32.cont [10/16] 0.0, 128
        %1744 = vxpose.xlu0.b32.cont [11/16] 0.0, 128
        %1745 = vxpose.xlu0.b32.cont [12/16] 0.0, 128
        %1746 = vxpose.xlu0.b32.cont [13/16] 0.0, 128
        %1747 = vxpose.xlu0.b32.cont [14/16] 0.0, 128
        %1748 = vxpose.xlu0.b32.cont [15/16] 0.0, 128
        %1749 = vxpose.xlu0.b32.end [16/16] 0.0, 128
        %v1750 = vpop.trf.xlu0
        %v1751 = vpop.trf.xlu0
        %v1752 = vpop.trf.xlu0
        %v1753 = vpop.trf.xlu0
        %v1754 = vpop.trf.xlu0
        %v1755 = vpop.trf.xlu0
        %v1756 = vpop.trf.xlu0
        %v1757 = vpop.trf.xlu0
        %v1758 = vpop.trf.xlu0
        %v1759 = vpop.trf.xlu0
        %v1760 = vpop.trf.xlu0
        %v1761 = vpop.trf.xlu0
        %v1762 = vpop.trf.xlu0
        %v1763 = vpop.trf.xlu0
        %v1764 = vpop.trf.xlu0
        %v1765 = vpop.trf.xlu0
        %1766 = vxpose.xlu0.b32.start [1/16] %v1623, 128
        %1767 = vxpose.xlu0.b32.cont [2/16] 0.0, 128
        %1768 = vxpose.xlu0.b32.cont [3/16] 0.0, 128
        %1769 = vxpose.xlu0.b32.cont [4/16] 0.0, 128
        %1770 = vxpose.xlu0.b32.cont [5/16] 0.0, 128
        %1771 = vxpose.xlu0.b32.cont [6/16] 0.0, 128
        %1772 = vxpose.xlu0.b32.cont [7/16] 0.0, 128
        %1773 = vxpose.xlu0.b32.cont [8/16] 0.0, 128
        %1774 = vxpose.xlu0.b32.cont [9/16] 0.0, 128
        %1775 = vxpose.xlu0.b32.cont [10/16] 0.0, 128
        %1776 = vxpose.xlu0.b32.cont [11/16] 0.0, 128
        %1777 = vxpose.xlu0.b32.cont [12/16] 0.0, 128
        %1778 = vxpose.xlu0.b32.cont [13/16] 0.0, 128
        %1779 = vxpose.xlu0.b32.cont [14/16] 0.0, 128
        %1780 = vxpose.xlu0.b32.cont [15/16] 0.0, 128
        %1781 = vxpose.xlu0.b32.end [16/16] 0.0, 128
        %v1782 = vpop.trf.xlu0
        %v1783 = vpop.trf.xlu0
        %v1784 = vpop.trf.xlu0
        %v1785 = vpop.trf.xlu0
        %v1786 = vpop.trf.xlu0
        %v1787 = vpop.trf.xlu0
        %v1788 = vpop.trf.xlu0
        %v1789 = vpop.trf.xlu0
        %v1790 = vpop.trf.xlu0
        %v1791 = vpop.trf.xlu0
        %v1792 = vpop.trf.xlu0
        %v1793 = vpop.trf.xlu0
        %v1794 = vpop.trf.xlu0
        %v1795 = vpop.trf.xlu0
        %v1796 = vpop.trf.xlu0
        %v1797 = vpop.trf.xlu0
        %1798 = vxpose.xlu0.b32.start [1/16] %v1699, 128
        %1799 = vxpose.xlu0.b32.cont [2/16] 0.0, 128
        %1800 = vxpose.xlu0.b32.cont [3/16] 0.0, 128
        %1801 = vxpose.xlu0.b32.cont [4/16] 0.0, 128
        %1802 = vxpose.xlu0.b32.cont [5/16] 0.0, 128
        %1803 = vxpose.xlu0.b32.cont [6/16] 0.0, 128
        %1804 = vxpose.xlu0.b32.cont [7/16] 0.0, 128
        %1805 = vxpose.xlu0.b32.cont [8/16] 0.0, 128
        %1806 = vxpose.xlu0.b32.cont [9/16] 0.0, 128
        %1807 = vxpose.xlu0.b32.cont [10/16] 0.0, 128
        %1808 = vxpose.xlu0.b32.cont [11/16] 0.0, 128
        %1809 = vxpose.xlu0.b32.cont [12/16] 0.0, 128
        %1810 = vxpose.xlu0.b32.cont [13/16] 0.0, 128
        %1811 = vxpose.xlu0.b32.cont [14/16] 0.0, 128
        %1812 = vxpose.xlu0.b32.cont [15/16] 0.0, 128
        %1813 = vxpose.xlu0.b32.end [16/16] 0.0, 128
        %v1814 = vpop.trf.xlu0
        %v1815 = vpop.trf.xlu0
        %v1816 = vpop.trf.xlu0
        %v1817 = vpop.trf.xlu0
        %v1818 = vpop.trf.xlu0
        %v1819 = vpop.trf.xlu0
        %v1820 = vpop.trf.xlu0
        %v1821 = vpop.trf.xlu0
        %v1822 = vpop.trf.xlu0
        %v1823 = vpop.trf.xlu0
        %v1824 = vpop.trf.xlu0
        %v1825 = vpop.trf.xlu0
        %v1826 = vpop.trf.xlu0
        %v1827 = vpop.trf.xlu0
        %v1828 = vpop.trf.xlu0
        %v1829 = vpop.trf.xlu0
        %v1830 = vcombine.low %v1718, %v1782
        %v1831 = vcombine.high %v1718, %v1782
        %v1833 = vunpack.c.l.s4 1983009808
        %v1834 = vunpack.c.0.s8 %v1833
        %v1835 = vlaneseq
        %v1836 = vshrl.u32 %v1835, 7
        %v1837 = vsub.s32 %v1834, %v1836
        %v1838 = vrot.slane %v1830, %v1837
        %v1840 = vunpack.c.l.s4 1983009808
        %v1841 = vunpack.c.0.s8 %v1840
        %v1842 = vlaneseq
        %v1843 = vshrl.u32 %v1842, 7
        %v1844 = vsub.s32 %v1841, %v1843
        %v1845 = vrot.slane %v1831, %v1844
        %v1846 = vcombine.low %v1750, %v1814
        %v1847 = vcombine.high %v1750, %v1814
        %v1849 = vunpack.c.l.s4 1983009808
        %v1850 = vunpack.c.0.s8 %v1849
        %v1851 = vlaneseq
        %v1852 = vshrl.u32 %v1851, 7
        %v1853 = vsub.s32 %v1850, %v1852
        %v1854 = vrot.slane %v1846, %v1853
        %v1856 = vunpack.c.l.s4 1983009808
        %v1857 = vunpack.c.0.s8 %v1856
        %v1858 = vlaneseq
        %v1859 = vshrl.u32 %v1858, 7
        %v1860 = vsub.s32 %v1857, %v1859
        %v1861 = vrot.slane %v1847, %v1860
        %v1862 = vcombine.low %v1838, %v1854
        %v1863 = vcombine.high %v1838, %v1854
        %v1865 = vunpack.c.l.s4 1934713408
        %v1866 = vunpack.c.0.s8 %v1865
        %v1867 = vlaneseq
        %v1868 = vshrl.u32 %v1867, 7
        %v1869 = vsub.s32 %v1866, %v1868
        %v1870 = vrot.slane %v1862, %v1869
        %v1872 = vunpack.c.l.s4 1934713408
        %v1873 = vunpack.c.0.s8 %v1872
        %v1874 = vlaneseq
        %v1875 = vshrl.u32 %v1874, 7
        %v1876 = vsub.s32 %v1873, %v1875
        %v1877 = vrot.slane %v1863, %v1876
        %v1878 = vcombine.low %v1845, %v1861
        %v1879 = vcombine.high %v1845, %v1861
        %v1881 = vunpack.c.l.s4 1934713408
        %v1882 = vunpack.c.0.s8 %v1881
        %v1883 = vlaneseq
        %v1884 = vshrl.u32 %v1883, 7
        %v1885 = vsub.s32 %v1882, %v1884
        %v1886 = vrot.slane %v1878, %v1885
        %v1888 = vunpack.c.l.s4 1934713408
        %v1889 = vunpack.c.0.s8 %v1888
        %v1890 = vlaneseq
        %v1891 = vshrl.u32 %v1890, 7
        %v1892 = vsub.s32 %v1889, %v1891
        %v1893 = vrot.slane %v1879, %v1892
        %v1894 = vcombine.high %v1870, 0.0
        %v1895 = vcombine.high %v1877, 0.0
        %v1896 = vcombine.high %v1886, 0.0
        %v1897 = vcombine.high %v1893, 0.0
        %v1898 = vcombine.low %v1870, %v1877
        %v1900 = vunpack.c.l.s4 1983009808
        %v1901 = vunpack.c.0.s8 %v1900
        %v1902 = vlaneseq
        %v1903 = vshrl.u32 %v1902, 7
        %v1904 = vsub.s32 %v1901, %v1903
        %v1905 = vrot.slane %v1898, %v1904
        %v1906 = vcombine.low %v1894, %v1895
        %v1908 = vunpack.c.l.s4 1983009808
        %v1909 = vunpack.c.0.s8 %v1908
        %v1910 = vlaneseq
        %v1911 = vshrl.u32 %v1910, 7
        %v1912 = vsub.s32 %v1909, %v1911
        %v1913 = vrot.slane %v1906, %v1912
        %v1914 = vcombine.low %v1886, %v1893
        %v1916 = vunpack.c.l.s4 1983009808
        %v1917 = vunpack.c.0.s8 %v1916
        %v1918 = vlaneseq
        %v1919 = vshrl.u32 %v1918, 7
        %v1920 = vsub.s32 %v1917, %v1919
        %v1921 = vrot.slane %v1914, %v1920
        %v1922 = vcombine.low %v1896, %v1897
        %v1924 = vunpack.c.l.s4 1983009808
        %v1925 = vunpack.c.0.s8 %v1924
        %v1926 = vlaneseq
        %v1927 = vshrl.u32 %v1926, 7
        %v1928 = vsub.s32 %v1925, %v1927
        %v1929 = vrot.slane %v1922, %v1928
        %v1930 = vcombine.low %v1905, %v1913
        %v1931 = vcombine.high %v1905, %v1913
        %v1933 = vunpack.c.l.s4 1934713408
        %v1934 = vunpack.c.0.s8 %v1933
        %v1935 = vlaneseq
        %v1936 = vshrl.u32 %v1935, 7
        %v1937 = vsub.s32 %v1934, %v1936
        %v1938 = vrot.slane %v1930, %v1937
        %v1940 = vunpack.c.l.s4 1934713408
        %v1941 = vunpack.c.0.s8 %v1940
        %v1942 = vlaneseq
        %v1943 = vshrl.u32 %v1942, 7
        %v1944 = vsub.s32 %v1941, %v1943
        %v1945 = vrot.slane %v1931, %v1944
        %v1946 = vcombine.low %v1921, %v1929
        %v1947 = vcombine.high %v1921, %v1929
        %v1949 = vunpack.c.l.s4 1934713408
        %v1950 = vunpack.c.0.s8 %v1949
        %v1951 = vlaneseq
        %v1952 = vshrl.u32 %v1951, 7
        %v1953 = vsub.s32 %v1950, %v1952
        %v1954 = vrot.slane %v1946, %v1953
        %v1956 = vunpack.c.l.s4 1934713408
        %v1957 = vunpack.c.0.s8 %v1956
        %v1958 = vlaneseq
        %v1959 = vshrl.u32 %v1958, 7
        %v1960 = vsub.s32 %v1957, %v1959
        %v1961 = vrot.slane %v1947, %v1960
        %v1962 = vcombine.low %v1938, %v1954
        %v1963 = vcombine.high %v1938, %v1954
        %v1964 = vcombine.low %v1945, %v1961
        %v1965 = vcombine.high %v1945, %v1961
        %1967 = vrot.lane.b32.xlu0 %v1963, 8
        %v1968 = vpop.permute.xlu0 %1967
        %1971 = vrot.lane.b32.xlu0 %v1964, 16
        %v1972 = vpop.permute.xlu0 %1971
        %1975 = vrot.lane.b32.xlu0 %v1965, 24
        %v1976 = vpop.permute.xlu0 %1975
        %v1978 = vsel %vm917, %v1962, %v1968
        %vm1979 = vcmask 130048
        %v1980 = vsel %vm1979, %v1978, %v1972
        %vm1981 = vcmask 195584
        %v1982 = vsel %vm1981, %v1980, %v1976
        %v1983 = vld [vmem:[%s9] sm:$0xff]
        %v1984 = vld [vmem:[%s9 + $0x8] sm:$0xff]
        %v1985 = vld [vmem:[%s9 + $0x10] sm:$0xff]
        %v1986 = vld [vmem:[%s9 + $0x18] sm:$0xff]
        %v1987 = vld [vmem:[%s10] sm:$0x1]
        %v1989 = vlaneseq
        %v1990 = vshrl.u32 %v1989, 7
        %v1991 = vsub.s32 0, %v1990
        %v1992 = vrot.slane %v1987, %v1991
        %v1995 = vsel %vm574, %v1982, 0
        %1997 = vmatprep.subr.mxu0 0.0
        %1998 = vmatpush1.msra.mxu0 %v1983
        %1999 = vmatprep.subr.mxu0 0.0
        %2000 = vmatpush1.msra.mxu0 %v1984
        %2001 = vmatprep.subr.mxu0 0.0
        %2002 = vmatpush1.msra.mxu0 %v1985
        %2003 = vmatprep.subr.mxu0 0.0
        %2004 = vmatpush1.msra.mxu0 %v1986
        %2005 = vmatprep.subr.mxu0 0.0
        %2006 = vmatpush1.msra.mxu0 0.0
        %2007 = vmatprep.subr.mxu0 0.0
        %2008 = vmatpush1.msra.mxu0 0.0
        %2009 = vmatprep.subr.mxu0 0.0
        %2010 = vmatpush1.msra.mxu0 0.0
        %2011 = vmatprep.subr.mxu0 0.0
        %2012 = vmatpush1.msra.mxu0 0.0
        %2013 = vmatprep.subr.mxu0 0.0
        %2014 = vmatpush1.msra.mxu0 0.0
        %2015 = vmatprep.subr.mxu0 0.0
        %2016 = vmatpush1.msra.mxu0 0.0
        %2017 = vmatprep.subr.mxu0 0.0
        %2018 = vmatpush1.msra.mxu0 0.0
        %2019 = vmatprep.subr.mxu0 0.0
        %2020 = vmatpush1.msra.mxu0 0.0
        %2021 = vmatprep.subr.mxu0 0.0
        %2022 = vmatpush1.msra.mxu0 0.0
        %2023 = vmatprep.subr.mxu0 0.0
        %2024 = vmatpush1.msra.mxu0 0.0
        %2025 = vmatprep.subr.mxu0 0.0
        %2026 = vmatpush1.msra.mxu0 0.0
        %2027 = vmatprep.subr.mxu0 0.0
        %2028 = vmatpush1.msra.mxu0 0.0
        %2029 = vmatprep.subr.mxu0 0.0
        %2030 = vmatpush1.msra.mxu0 0.0
        %2031 = vmatprep.subr.mxu0 0.0
        %2032 = vmatpush1.msra.mxu0 0.0
        %2033 = vmatprep.subr.mxu0 0.0
        %2034 = vmatpush1.msra.mxu0 0.0
        %2035 = vmatprep.subr.mxu0 0.0
        %2036 = vmatpush1.msra.mxu0 0.0
        %2037 = vmatprep.subr.mxu0 0.0
        %2038 = vmatpush1.msra.mxu0 0.0
        %2039 = vmatprep.subr.mxu0 0.0
        %2040 = vmatpush1.msra.mxu0 0.0
        %2041 = vmatprep.subr.mxu0 0.0
        %2042 = vmatpush1.msra.mxu0 0.0
        %2043 = vmatprep.subr.mxu0 0.0
        %2044 = vmatpush1.msra.mxu0 0.0
        %2045 = vmatprep.subr.mxu0 0.0
        %2046 = vmatpush1.msra.mxu0 0.0
        %2047 = vmatprep.subr.mxu0 0.0
        %2048 = vmatpush1.msra.mxu0 0.0
        %2049 = vmatprep.subr.mxu0 0.0
        %2050 = vmatpush1.msra.mxu0 0.0
        %2051 = vmatprep.subr.mxu0 0.0
        %2052 = vmatpush1.msra.mxu0 0.0
        %2053 = vmatprep.subr.mxu0 0.0
        %2054 = vmatpush1.msra.mxu0 0.0
        %2055 = vmatprep.subr.mxu0 0.0
        %2056 = vmatpush1.msra.mxu0 0.0
        %2057 = vmatprep.subr.mxu0 0.0
        %2058 = vmatpush1.msra.mxu0 0.0
        %2059 = vmatprep.subr.mxu0 0.0
        %2060 = vmatpush1.msra.mxu0 0.0
        %2061 = vmatprep.mubr.f32.mxu0 0.0
        %2062 = vmatmul.mubr.f32.gmra.mrb[0].mxu0 %v1995
        %v2063 = vpop.f32.mrb[0].mxu0
        %v2064 = vadd.f32 %v1992, %v2063
        %v2065 = vpop.f32.mrb[0].mxu0
        %2066 = vdwg.mxu0
        %v2067 = vadd.f32 %v654, %v2064
        %v2068 = vsel %vm574, %v2067, 0.0
        %2069 = vadd.xlane.f32.xlu0 %v2068
        %v2070 = vpop.xlane.xlu0 %2069
        %v2071 = vmul.f32 %v2070, %v665
        %v2072 = vsub.f32 %v2067, %v2071
        %v2073 = vmul.f32 %v2072, %v2072
        %v2074 = vsel %vm574, %v2073, 0.0
        %2075 = vadd.xlane.f32.xlu0 %v2074
        %v2076 = vpop.xlane.xlu0 %2075
        %v2077 = vmul.f32 %v2076, %v665
        %v2078 = vadd.f32 %v2077, 1e-05
        %v2079 = vrsqrt.pop %v2078
        %v2080 = vmul.f32 %v2072, %v2079
        %v2081 = vlaneseq
        %v2082 = vshrl.u32 %v2081, 7
        %v2083 = vsub.s32 2, %v2082
        %v2084 = vrot.slane %v661, %v2083
        %v2085 = vmul.f32 %v2080, %v2084
        %v2086 = vlaneseq
        %v2087 = vshrl.u32 %v2086, 7
        %v2088 = vsub.s32 3, %v2087
        %v2089 = vrot.slane %v661, %v2088
        %v2090 = vadd.f32 %v2085, %v2089
        %v2091 = vld [vmem:[%s11] sm:$0xff]
        %v2092 = vld [vmem:[%s11 + $0x8] sm:$0xff]
        %v2093 = vld [vmem:[%s11 + $0x10] sm:$0xff]
        %v2094 = vld [vmem:[%s11 + $0x18] sm:$0xff]
        %v2095 = vld [vmem:[%s12] sm:$0x1]
        %v2097 = vlaneseq
        %v2098 = vshrl.u32 %v2097, 7
        %v2099 = vsub.s32 0, %v2098
        %v2100 = vrot.slane %v2095, %v2099
        %v2103 = vsel %vm574, %v2090, 0
        %2105 = vmatprep.subr.mxu0 0.0
        %2106 = vmatpush1.msra.mxu0 %v2091
        %2107 = vmatprep.subr.mxu0 0.0
        %2108 = vmatpush1.msra.mxu0 %v2092
        %2109 = vmatprep.subr.mxu0 0.0
        %2110 = vmatpush1.msra.mxu0 %v2093
        %2111 = vmatprep.subr.mxu0 0.0
        %2112 = vmatpush1.msra.mxu0 %v2094
        %2113 = vmatprep.subr.mxu0 0.0
        %2114 = vmatpush1.msra.mxu0 0.0
        %2115 = vmatprep.subr.mxu0 0.0
        %2116 = vmatpush1.msra.mxu0 0.0
        %2117 = vmatprep.subr.mxu0 0.0
        %2118 = vmatpush1.msra.mxu0 0.0
        %2119 = vmatprep.subr.mxu0 0.0
        %2120 = vmatpush1.msra.mxu0 0.0
        %2121 = vmatprep.subr.mxu0 0.0
        %2122 = vmatpush1.msra.mxu0 0.0
        %2123 = vmatprep.subr.mxu0 0.0
        %2124 = vmatpush1.msra.mxu0 0.0
        %2125 = vmatprep.subr.mxu0 0.0
        %2126 = vmatpush1.msra.mxu0 0.0
        %2127 = vmatprep.subr.mxu0 0.0
        %2128 = vmatpush1.msra.mxu0 0.0
        %2129 = vmatprep.subr.mxu0 0.0
        %2130 = vmatpush1.msra.mxu0 0.0
        %2131 = vmatprep.subr.mxu0 0.0
        %2132 = vmatpush1.msra.mxu0 0.0
        %2133 = vmatprep.subr.mxu0 0.0
        %2134 = vmatpush1.msra.mxu0 0.0
        %2135 = vmatprep.subr.mxu0 0.0
        %2136 = vmatpush1.msra.mxu0 0.0
        %2137 = vmatprep.subr.mxu0 0.0
        %2138 = vmatpush1.msra.mxu0 0.0
        %2139 = vmatprep.subr.mxu0 0.0
        %2140 = vmatpush1.msra.mxu0 0.0
        %2141 = vmatprep.subr.mxu0 0.0
        %2142 = vmatpush1.msra.mxu0 0.0
        %2143 = vmatprep.subr.mxu0 0.0
        %2144 = vmatpush1.msra.mxu0 0.0
        %2145 = vmatprep.subr.mxu0 0.0
        %2146 = vmatpush1.msra.mxu0 0.0
        %2147 = vmatprep.subr.mxu0 0.0
        %2148 = vmatpush1.msra.mxu0 0.0
        %2149 = vmatprep.subr.mxu0 0.0
        %2150 = vmatpush1.msra.mxu0 0.0
        %2151 = vmatprep.subr.mxu0 0.0
        %2152 = vmatpush1.msra.mxu0 0.0
        %2153 = vmatprep.subr.mxu0 0.0
        %2154 = vmatpush1.msra.mxu0 0.0
        %2155 = vmatprep.subr.mxu0 0.0
        %2156 = vmatpush1.msra.mxu0 0.0
        %2157 = vmatprep.subr.mxu0 0.0
        %2158 = vmatpush1.msra.mxu0 0.0
        %2159 = vmatprep.subr.mxu0 0.0
        %2160 = vmatpush1.msra.mxu0 0.0
        %2161 = vmatprep.subr.mxu0 0.0
        %2162 = vmatpush1.msra.mxu0 0.0
        %2163 = vmatprep.subr.mxu0 0.0
        %2164 = vmatpush1.msra.mxu0 0.0
        %2165 = vmatprep.subr.mxu0 0.0
        %2166 = vmatpush1.msra.mxu0 0.0
        %2167 = vmatprep.subr.mxu0 0.0
        %2168 = vmatpush1.msra.mxu0 0.0
        %2169 = vmatprep.mubr.f32.mxu0 0.0
        %2170 = vmatmul.mubr.f32.gmra.mrb[0].mxu0 %v2103
        %v2171 = vpop.f32.mrb[0].mxu0
        %v2172 = vadd.f32 %v2100, %v2171
        %v2173 = vpop.f32.mrb[0].mxu0
        %2174 = vdwg.mxu0
        %v2175 = vmul.f32 %v2172, 0.5
        %v2176 = vmul.f32 %v2172, 0.044715
        %v2177 = vmul.f32 %v2176, %v2172
        %v2178 = vmul.f32 %v2177, %v2172
        %v2179 = vadd.f32 %v2172, %v2178
        %v2180 = vmul.f32 %v2179, 0.7978846
        %v2181 = vtanh.pop %v2180
        %v2182 = vadd.f32 %v2181, 1.0
        %v2183 = vmul.f32 %v2175, %v2182
        %v2184 = vld [vmem:[%s13] sm:$0xff]
        %v2185 = vld [vmem:[%s13 + $0x8] sm:$0xff]
        %v2186 = vld [vmem:[%s13 + $0x10] sm:$0xff]
        %v2187 = vld [vmem:[%s13 + $0x18] sm:$0xff]
        %v2188 = vld [vmem:[%s13 + $0x20] sm:$0xff]
        %v2189 = vld [vmem:[%s13 + $0x28] sm:$0xff]
        %v2190 = vld [vmem:[%s13 + $0x30] sm:$0xff]
        %v2191 = vld [vmem:[%s13 + $0x38] sm:$0xff]
        %v2192 = vld [vmem:[%s13 + $0x40] sm:$0xff]
        %v2193 = vld [vmem:[%s13 + $0x48] sm:$0xff]
        %v2194 = vld [vmem:[%s13 + $0x50] sm:$0xff]
        %v2195 = vld [vmem:[%s13 + $0x58] sm:$0xff]
        %v2196 = vld [vmem:[%s13 + $0x60] sm:$0xff]
        %v2197 = vld [vmem:[%s13 + $0x68] sm:$0xff]
        %v2198 = vld [vmem:[%s13 + $0x70] sm:$0xff]
        %v2199 = vld [vmem:[%s13 + $0x78] sm:$0xff]
        %v2200 = vld [vmem:[%s14] sm:$0x1]
        %v2202 = vlaneseq
        %v2203 = vshrl.u32 %v2202, 7
        %v2204 = vsub.s32 0, %v2203
        %v2205 = vrot.slane %v2200, %v2204
        %2207 = vmatprep.subr.mxu0 0.0
        %2208 = vmatpush1.msra.mxu0 %v2184
        %2209 = vmatprep.subr.mxu0 0.0
        %2210 = vmatpush1.msra.mxu0 %v2185
        %2211 = vmatprep.subr.mxu0 0.0
        %2212 = vmatpush1.msra.mxu0 %v2186
        %2213 = vmatprep.subr.mxu0 0.0
        %2214 = vmatpush1.msra.mxu0 %v2187
        %2215 = vmatprep.subr.mxu0 0.0
        %2216 = vmatpush1.msra.mxu0 %v2188
        %2217 = vmatprep.subr.mxu0 0.0
        %2218 = vmatpush1.msra.mxu0 %v2189
        %2219 = vmatprep.subr.mxu0 0.0
        %2220 = vmatpush1.msra.mxu0 %v2190
        %2221 = vmatprep.subr.mxu0 0.0
        %2222 = vmatpush1.msra.mxu0 %v2191
        %2223 = vmatprep.subr.mxu0 0.0
        %2224 = vmatpush1.msra.mxu0 %v2192
        %2225 = vmatprep.subr.mxu0 0.0
        %2226 = vmatpush1.msra.mxu0 %v2193
        %2227 = vmatprep.subr.mxu0 0.0
        %2228 = vmatpush1.msra.mxu0 %v2194
        %2229 = vmatprep.subr.mxu0 0.0
        %2230 = vmatpush1.msra.mxu0 %v2195
        %2231 = vmatprep.subr.mxu0 0.0
        %2232 = vmatpush1.msra.mxu0 %v2196
        %2233 = vmatprep.subr.mxu0 0.0
        %2234 = vmatpush1.msra.mxu0 %v2197
        %2235 = vmatprep.subr.mxu0 0.0
        %2236 = vmatpush1.msra.mxu0 %v2198
        %2237 = vmatprep.subr.mxu0 0.0
        %2238 = vmatpush1.msra.mxu0 %v2199
        %2239 = vmatprep.subr.mxu0 0.0
        %2240 = vmatpush1.msra.mxu0 0.0
        %2241 = vmatprep.subr.mxu0 0.0
        %2242 = vmatpush1.msra.mxu0 0.0
        %2243 = vmatprep.subr.mxu0 0.0
        %2244 = vmatpush1.msra.mxu0 0.0
        %2245 = vmatprep.subr.mxu0 0.0
        %2246 = vmatpush1.msra.mxu0 0.0
        %2247 = vmatprep.subr.mxu0 0.0
        %2248 = vmatpush1.msra.mxu0 0.0
        %2249 = vmatprep.subr.mxu0 0.0
        %2250 = vmatpush1.msra.mxu0 0.0
        %2251 = vmatprep.subr.mxu0 0.0
        %2252 = vmatpush1.msra.mxu0 0.0
        %2253 = vmatprep.subr.mxu0 0.0
        %2254 = vmatpush1.msra.mxu0 0.0
        %2255 = vmatprep.subr.mxu0 0.0
        %2256 = vmatpush1.msra.mxu0 0.0
        %2257 = vmatprep.subr.mxu0 0.0
        %2258 = vmatpush1.msra.mxu0 0.0
        %2259 = vmatprep.subr.mxu0 0.0
        %2260 = vmatpush1.msra.mxu0 0.0
        %2261 = vmatprep.subr.mxu0 0.0
        %2262 = vmatpush1.msra.mxu0 0.0
        %2263 = vmatprep.subr.mxu0 0.0
        %2264 = vmatpush1.msra.mxu0 0.0
        %2265 = vmatprep.subr.mxu0 0.0
        %2266 = vmatpush1.msra.mxu0 0.0
        %2267 = vmatprep.subr.mxu0 0.0
        %2268 = vmatpush1.msra.mxu0 0.0
        %2269 = vmatprep.subr.mxu0 0.0
        %2270 = vmatpush1.msra.mxu0 0.0
        %2271 = vmatprep.mubr.f32.mxu0 0.0
        %2272 = vmatmul.mubr.f32.gmra.mrb[0].mxu0 %v2183
        %v2273 = vpop.f32.mrb[0].mxu0
        %v2274 = vadd.f32 %v2205, %v2273
        %v2275 = vpop.f32.mrb[0].mxu0
        %2276 = vdwg.mxu0
        %v2277 = vadd.f32 %v2067, %v2274
        %s2278 = scalar_lea.vmem %s6, 4
        %v2279 = vld [vmem:[%s2278] sm:$0xf]
        %v2280 = vsel %vm574, %v2277, 0.0
        %2281 = vadd.xlane.f32.xlu0 %v2280
        %v2282 = vpop.xlane.xlu0 %2281
        %v2283 = vmul.f32 %v2282, %v665
        %v2284 = vsub.f32 %v2277, %v2283
        %v2285 = vmul.f32 %v2284, %v2284
        %v2286 = vsel %vm574, %v2285, 0.0
        %2287 = vadd.xlane.f32.xlu0 %v2286
        %v2288 = vpop.xlane.xlu0 %2287
        %v2289 = vmul.f32 %v2288, %v665
        %v2290 = vadd.f32 %v2289, 1e-05
        %v2291 = vrsqrt.pop %v2290
        %v2292 = vmul.f32 %v2284, %v2291
        %v2293 = vlaneseq
        %v2294 = vshrl.u32 %v2293, 7
        %v2295 = vsub.s32 0, %v2294
        %v2296 = vrot.slane %v2279, %v2295
        %v2297 = vmul.f32 %v2292, %v2296
        %v2298 = vlaneseq
        %v2299 = vshrl.u32 %v2298, 7
        %v2300 = vsub.s32 1, %v2299
        %v2301 = vrot.slane %v2279, %v2300
        %v2302 = vadd.f32 %v2297, %v2301
        %s2303 = scalar_lea.vmem %s7, 32
        %v2304 = vld [vmem:[%s2303] sm:$0xff]
        %v2305 = vld [vmem:[%s2303 + $0x8] sm:$0xff]
        %v2306 = vld [vmem:[%s2303 + $0x10] sm:$0xff]
        %v2307 = vld [vmem:[%s2303 + $0x18] sm:$0xff]
        %s2308 = scalar_lea.vmem %s8, 1
        %v2309 = vld [vmem:[%s2308] sm:$0x1]
        %v2311 = vlaneseq
        %v2312 = vshrl.u32 %v2311, 7
        %v2313 = vsub.s32 0, %v2312
        %v2314 = vrot.slane %v2309, %v2313
        %v2317 = vsel %vm574, %v2302, 0
        %2319 = vmatprep.subr.mxu0 0.0
        %2320 = vmatpush1.msra.mxu0 %v2304
        %2321 = vmatprep.subr.mxu0 0.0
        %2322 = vmatpush1.msra.mxu0 %v2305
        %2323 = vmatprep.subr.mxu0 0.0
        %2324 = vmatpush1.msra.mxu0 %v2306
        %2325 = vmatprep.subr.mxu0 0.0
        %2326 = vmatpush1.msra.mxu0 %v2307
        %2327 = vmatprep.subr.mxu0 0.0
        %2328 = vmatpush1.msra.mxu0 0.0
        %2329 = vmatprep.subr.mxu0 0.0
        %2330 = vmatpush1.msra.mxu0 0.0
        %2331 = vmatprep.subr.mxu0 0.0
        %2332 = vmatpush1.msra.mxu0 0.0
        %2333 = vmatprep.subr.mxu0 0.0
        %2334 = vmatpush1.msra.mxu0 0.0
        %2335 = vmatprep.subr.mxu0 0.0
        %2336 = vmatpush1.msra.mxu0 0.0
        %2337 = vmatprep.subr.mxu0 0.0
        %2338 = vmatpush1.msra.mxu0 0.0
        %2339 = vmatprep.subr.mxu0 0.0
        %2340 = vmatpush1.msra.mxu0 0.0
        %2341 = vmatprep.subr.mxu0 0.0
        %2342 = vmatpush1.msra.mxu0 0.0
        %2343 = vmatprep.subr.mxu0 0.0
        %2344 = vmatpush1.msra.mxu0 0.0
        %2345 = vmatprep.subr.mxu0 0.0
        %2346 = vmatpush1.msra.mxu0 0.0
        %2347 = vmatprep.subr.mxu0 0.0
        %2348 = vmatpush1.msra.mxu0 0.0
        %2349 = vmatprep.subr.mxu0 0.0
        %2350 = vmatpush1.msra.mxu0 0.0
        %2351 = vmatprep.subr.mxu0 0.0
        %2352 = vmatpush1.msra.mxu0 0.0
        %2353 = vmatprep.subr.mxu0 0.0
        %2354 = vmatpush1.msra.mxu0 0.0
        %2355 = vmatprep.subr.mxu0 0.0
        %2356 = vmatpush1.msra.mxu0 0.0
        %2357 = vmatprep.subr.mxu0 0.0
        %2358 = vmatpush1.msra.mxu0 0.0
        %2359 = vmatprep.subr.mxu0 0.0
        %2360 = vmatpush1.msra.mxu0 0.0
        %2361 = vmatprep.subr.mxu0 0.0
        %2362 = vmatpush1.msra.mxu0 0.0
        %2363 = vmatprep.subr.mxu0 0.0
        %2364 = vmatpush1.msra.mxu0 0.0
        %2365 = vmatprep.subr.mxu0 0.0
        %2366 = vmatpush1.msra.mxu0 0.0
        %2367 = vmatprep.subr.mxu0 0.0
        %2368 = vmatpush1.msra.mxu0 0.0
        %2369 = vmatprep.subr.mxu0 0.0
        %2370 = vmatpush1.msra.mxu0 0.0
        %2371 = vmatprep.subr.mxu0 0.0
        %2372 = vmatpush1.msra.mxu0 0.0
        %2373 = vmatprep.subr.mxu0 0.0
        %2374 = vmatpush1.msra.mxu0 0.0
        %2375 = vmatprep.subr.mxu0 0.0
        %2376 = vmatpush1.msra.mxu0 0.0
        %2377 = vmatprep.subr.mxu0 0.0
        %2378 = vmatpush1.msra.mxu0 0.0
        %2379 = vmatprep.subr.mxu0 0.0
        %2380 = vmatpush1.msra.mxu0 0.0
        %2381 = vmatprep.subr.mxu0 0.0
        %2382 = vmatpush1.msra.mxu0 0.0
        %2383 = vmatprep.mubr.f32.mxu0 0.0
        %2384 = vmatmul.mubr.f32.gmra.mrb[0].mxu0 %v2317
        %v2385 = vpop.f32.mrb[0].mxu0
        %v2386 = vadd.f32 %v2314, %v2385
        %v2387 = vpop.f32.mrb[0].mxu0
        %2388 = vdwg.mxu0
        %2390 = vrot.lane.b32.xlu0 %v2386, 120
        %v2391 = vpop.permute.xlu0 %2390
        %2392 = vrot.lane.b32.xlu0 %v2386, 112
        %v2393 = vpop.permute.xlu0 %2392
        %2394 = vrot.lane.b32.xlu0 %v2386, 104
        %v2395 = vpop.permute.xlu0 %2394
        %2396 = vrot.lane.b32.xlu0 %v2386, 96
        %v2397 = vpop.permute.xlu0 %2396
        %2398 = vrot.lane.b32.xlu0 %v2391, 96
        %v2399 = vpop.permute.xlu0 %2398
        %2400 = vrot.lane.b32.xlu0 %v2393, 96
        %v2401 = vpop.permute.xlu0 %2400
        %2402 = vrot.lane.b32.xlu0 %v2395, 96
        %v2403 = vpop.permute.xlu0 %2402
        %2408 = vxpose.xlu0.b32.start [1/16] %v2397, 128
        %2409 = vxpose.xlu0.b32.cont [2/16] 0.0, 128
        %2410 = vxpose.xlu0.b32.cont [3/16] 0.0, 128
        %2411 = vxpose.xlu0.b32.cont [4/16] 0.0, 128
        %2412 = vxpose.xlu0.b32.cont [5/16] 0.0, 128
        %2413 = vxpose.xlu0.b32.cont [6/16] 0.0, 128
        %2414 = vxpose.xlu0.b32.cont [7/16] 0.0, 128
        %2415 = vxpose.xlu0.b32.cont [8/16] 0.0, 128
        %2416 = vxpose.xlu0.b32.cont [9/16] 0.0, 128
        %2417 = vxpose.xlu0.b32.cont [10/16] 0.0, 128
        %2418 = vxpose.xlu0.b32.cont [11/16] 0.0, 128
        %2419 = vxpose.xlu0.b32.cont [12/16] 0.0, 128
        %2420 = vxpose.xlu0.b32.cont [13/16] 0.0, 128
        %2421 = vxpose.xlu0.b32.cont [14/16] 0.0, 128
        %2422 = vxpose.xlu0.b32.cont [15/16] 0.0, 128
        %2423 = vxpose.xlu0.b32.end [16/16] 0.0, 128
        %v2424 = vpop.trf.xlu0
        %v2425 = vpop.trf.xlu0
        %v2426 = vpop.trf.xlu0
        %v2427 = vpop.trf.xlu0
        %v2428 = vpop.trf.xlu0
        %v2429 = vpop.trf.xlu0
        %v2430 = vpop.trf.xlu0
        %v2431 = vpop.trf.xlu0
        %v2432 = vpop.trf.xlu0
        %v2433 = vpop.trf.xlu0
        %v2434 = vpop.trf.xlu0
        %v2435 = vpop.trf.xlu0
        %v2436 = vpop.trf.xlu0
        %v2437 = vpop.trf.xlu0
        %v2438 = vpop.trf.xlu0
        %v2439 = vpop.trf.xlu0
        %2440 = vxpose.xlu0.b32.start [1/16] %v2399, 128
        %2441 = vxpose.xlu0.b32.cont [2/16] 0.0, 128
        %2442 = vxpose.xlu0.b32.cont [3/16] 0.0, 128
        %2443 = vxpose.xlu0.b32.cont [4/16] 0.0, 128
        %2444 = vxpose.xlu0.b32.cont [5/16] 0.0, 128
        %2445 = vxpose.xlu0.b32.cont [6/16] 0.0, 128
        %2446 = vxpose.xlu0.b32.cont [7/16] 0.0, 128
        %2447 = vxpose.xlu0.b32.cont [8/16] 0.0, 128
        %2448 = vxpose.xlu0.b32.cont [9/16] 0.0, 128
        %2449 = vxpose.xlu0.b32.cont [10/16] 0.0, 128
        %2450 = vxpose.xlu0.b32.cont [11/16] 0.0, 128
        %2451 = vxpose.xlu0.b32.cont [12/16] 0.0, 128
        %2452 = vxpose.xlu0.b32.cont [13/16] 0.0, 128
        %2453 = vxpose.xlu0.b32.cont [14/16] 0.0, 128
        %2454 = vxpose.xlu0.b32.cont [15/16] 0.0, 128
        %2455 = vxpose.xlu0.b32.end [16/16] 0.0, 128
        %v2456 = vpop.trf.xlu0
        %v2457 = vpop.trf.xlu0
        %v2458 = vpop.trf.xlu0
        %v2459 = vpop.trf.xlu0
        %v2460 = vpop.trf.xlu0
        %v2461 = vpop.trf.xlu0
        %v2462 = vpop.trf.xlu0
        %v2463 = vpop.trf.xlu0
        %v2464 = vpop.trf.xlu0
        %v2465 = vpop.trf.xlu0
        %v2466 = vpop.trf.xlu0
        %v2467 = vpop.trf.xlu0
        %v2468 = vpop.trf.xlu0
        %v2469 = vpop.trf.xlu0
        %v2470 = vpop.trf.xlu0
        %v2471 = vpop.trf.xlu0
        %2472 = vxpose.xlu0.b32.start [1/16] %v2401, 128
        %2473 = vxpose.xlu0.b32.cont [2/16] 0.0, 128
        %2474 = vxpose.xlu0.b32.cont [3/16] 0.0, 128
        %2475 = vxpose.xlu0.b32.cont [4/16] 0.0, 128
        %2476 = vxpose.xlu0.b32.cont [5/16] 0.0, 128
        %2477 = vxpose.xlu0.b32.cont [6/16] 0.0, 128
        %2478 = vxpose.xlu0.b32.cont [7/16] 0.0, 128
        %2479 = vxpose.xlu0.b32.cont [8/16] 0.0, 128
        %2480 = vxpose.xlu0.b32.cont [9/16] 0.0, 128
        %2481 = vxpose.xlu0.b32.cont [10/16] 0.0, 128
        %2482 = vxpose.xlu0.b32.cont [11/16] 0.0, 128
        %2483 = vxpose.xlu0.b32.cont [12/16] 0.0, 128
        %2484 = vxpose.xlu0.b32.cont [13/16] 0.0, 128
        %2485 = vxpose.xlu0.b32.cont [14/16] 0.0, 128
        %2486 = vxpose.xlu0.b32.cont [15/16] 0.0, 128
        %2487 = vxpose.xlu0.b32.end [16/16] 0.0, 128
        %v2488 = vpop.trf.xlu0
        %v2489 = vpop.trf.xlu0
        %v2490 = vpop.trf.xlu0
        %v2491 = vpop.trf.xlu0
        %v2492 = vpop.trf.xlu0
        %v2493 = vpop.trf.xlu0
        %v2494 = vpop.trf.xlu0
        %v2495 = vpop.trf.xlu0
        %v2496 = vpop.trf.xlu0
        %v2497 = vpop.trf.xlu0
        %v2498 = vpop.trf.xlu0
        %v2499 = vpop.trf.xlu0
        %v2500 = vpop.trf.xlu0
        %v2501 = vpop.trf.xlu0
        %v2502 = vpop.trf.xlu0
        %v2503 = vpop.trf.xlu0
        %2504 = vxpose.xlu0.b32.start [1/16] %v2403, 128
        %2505 = vxpose.xlu0.b32.cont [2/16] 0.0, 128
        %2506 = vxpose.xlu0.b32.cont [3/16] 0.0, 128
        %2507 = vxpose.xlu0.b32.cont [4/16] 0.0, 128
        %2508 = vxpose.xlu0.b32.cont [5/16] 0.0, 128
        %2509 = vxpose.xlu0.b32.cont [6/16] 0.0, 128
        %2510 = vxpose.xlu0.b32.cont [7/16] 0.0, 128
        %2511 = vxpose.xlu0.b32.cont [8/16] 0.0, 128
        %2512 = vxpose.xlu0.b32.cont [9/16] 0.0, 128
        %2513 = vxpose.xlu0.b32.cont [10/16] 0.0, 128
        %2514 = vxpose.xlu0.b32.cont [11/16] 0.0, 128
        %2515 = vxpose.xlu0.b32.cont [12/16] 0.0, 128
        %2516 = vxpose.xlu0.b32.cont [13/16] 0.0, 128
        %2517 = vxpose.xlu0.b32.cont [14/16] 0.0, 128
        %2518 = vxpose.xlu0.b32.cont [15/16] 0.0, 128
        %2519 = vxpose.xlu0.b32.end [16/16] 0.0, 128
        %v2520 = vpop.trf.xlu0
        %v2521 = vpop.trf.xlu0
        %v2522 = vpop.trf.xlu0
        %v2523 = vpop.trf.xlu0
        %v2524 = vpop.trf.xlu0
        %v2525 = vpop.trf.xlu0
        %v2526 = vpop.trf.xlu0
        %v2527 = vpop.trf.xlu0
        %v2528 = vpop.trf.xlu0
        %v2529 = vpop.trf.xlu0
        %v2530 = vpop.trf.xlu0
        %v2531 = vpop.trf.xlu0
        %v2532 = vpop.trf.xlu0
        %v2533 = vpop.trf.xlu0
        %v2534 = vpop.trf.xlu0
        %v2535 = vpop.trf.xlu0
        %v2536 = vsel %vm917, %v2386, 0
        %2538 = vmatprep.subr.mxu0 0.0
        %2539 = vmatpush1.msra.mxu0 %v2424
        %2540 = vmatprep.subr.mxu0 0.0
        %2541 = vmatpush1.msra.mxu0 0.0
        %2542 = vmatprep.subr.mxu0 0.0
        %2543 = vmatpush1.msra.mxu0 0.0
        %2544 = vmatprep.subr.mxu0 0.0
        %2545 = vmatpush1.msra.mxu0 0.0
        %2546 = vmatprep.subr.mxu0 0.0
        %2547 = vmatpush1.msra.mxu0 0.0
        %2548 = vmatprep.subr.mxu0 0.0
        %2549 = vmatpush1.msra.mxu0 0.0
        %2550 = vmatprep.subr.mxu0 0.0
        %2551 = vmatpush1.msra.mxu0 0.0
        %2552 = vmatprep.subr.mxu0 0.0
        %2553 = vmatpush1.msra.mxu0 0.0
        %2554 = vmatprep.subr.mxu0 0.0
        %2555 = vmatpush1.msra.mxu0 0.0
        %2556 = vmatprep.subr.mxu0 0.0
        %2557 = vmatpush1.msra.mxu0 0.0
        %2558 = vmatprep.subr.mxu0 0.0
        %2559 = vmatpush1.msra.mxu0 0.0
        %2560 = vmatprep.subr.mxu0 0.0
        %2561 = vmatpush1.msra.mxu0 0.0
        %2562 = vmatprep.subr.mxu0 0.0
        %2563 = vmatpush1.msra.mxu0 0.0
        %2564 = vmatprep.subr.mxu0 0.0
        %2565 = vmatpush1.msra.mxu0 0.0
        %2566 = vmatprep.subr.mxu0 0.0
        %2567 = vmatpush1.msra.mxu0 0.0
        %2568 = vmatprep.subr.mxu0 0.0
        %2569 = vmatpush1.msra.mxu0 0.0
        %2570 = vmatprep.subr.mxu0 0.0
        %2571 = vmatpush1.msra.mxu0 0.0
        %2572 = vmatprep.subr.mxu0 0.0
        %2573 = vmatpush1.msra.mxu0 0.0
        %2574 = vmatprep.subr.mxu0 0.0
        %2575 = vmatpush1.msra.mxu0 0.0
        %2576 = vmatprep.subr.mxu0 0.0
        %2577 = vmatpush1.msra.mxu0 0.0
        %2578 = vmatprep.subr.mxu0 0.0
        %2579 = vmatpush1.msra.mxu0 0.0
        %2580 = vmatprep.subr.mxu0 0.0
        %2581 = vmatpush1.msra.mxu0 0.0
        %2582 = vmatprep.subr.mxu0 0.0
        %2583 = vmatpush1.msra.mxu0 0.0
        %2584 = vmatprep.subr.mxu0 0.0
        %2585 = vmatpush1.msra.mxu0 0.0
        %2586 = vmatprep.subr.mxu0 0.0
        %2587 = vmatpush1.msra.mxu0 0.0
        %2588 = vmatprep.subr.mxu0 0.0
        %2589 = vmatpush1.msra.mxu0 0.0
        %2590 = vmatprep.subr.mxu0 0.0
        %2591 = vmatpush1.msra.mxu0 0.0
        %2592 = vmatprep.subr.mxu0 0.0
        %2593 = vmatpush1.msra.mxu0 0.0
        %2594 = vmatprep.subr.mxu0 0.0
        %2595 = vmatpush1.msra.mxu0 0.0
        %2596 = vmatprep.subr.mxu0 0.0
        %2597 = vmatpush1.msra.mxu0 0.0
        %2598 = vmatprep.subr.mxu0 0.0
        %2599 = vmatpush1.msra.mxu0 0.0
        %2600 = vmatprep.subr.mxu0 0.0
        %2601 = vmatpush1.msra.mxu0 0.0
        %2602 = vmatprep.mubr.f32.mxu0 0.0
        %2603 = vmatmul.mubr.f32.gmra.mrb[0].mxu0 %v2536
        %v2604 = vpop.f32.mrb[0].mxu0
        %v2605 = vadd.f32 0.0, %v2604
        %v2606 = vpop.f32.mrb[0].mxu0
        %2607 = vdwg.mxu0
        %v2608 = vsel %vm917, %v2391, 0
        %2610 = vmatprep.subr.mxu0 0.0
        %2611 = vmatpush1.msra.mxu0 %v2456
        %2612 = vmatprep.subr.mxu0 0.0
        %2613 = vmatpush1.msra.mxu0 0.0
        %2614 = vmatprep.subr.mxu0 0.0
        %2615 = vmatpush1.msra.mxu0 0.0
        %2616 = vmatprep.subr.mxu0 0.0
        %2617 = vmatpush1.msra.mxu0 0.0
        %2618 = vmatprep.subr.mxu0 0.0
        %2619 = vmatpush1.msra.mxu0 0.0
        %2620 = vmatprep.subr.mxu0 0.0
        %2621 = vmatpush1.msra.mxu0 0.0
        %2622 = vmatprep.subr.mxu0 0.0
        %2623 = vmatpush1.msra.mxu0 0.0
        %2624 = vmatprep.subr.mxu0 0.0
        %2625 = vmatpush1.msra.mxu0 0.0
        %2626 = vmatprep.subr.mxu0 0.0
        %2627 = vmatpush1.msra.mxu0 0.0
        %2628 = vmatprep.subr.mxu0 0.0
        %2629 = vmatpush1.msra.mxu0 0.0
        %2630 = vmatprep.subr.mxu0 0.0
        %2631 = vmatpush1.msra.mxu0 0.0
        %2632 = vmatprep.subr.mxu0 0.0
        %2633 = vmatpush1.msra.mxu0 0.0
        %2634 = vmatprep.subr.mxu0 0.0
        %2635 = vmatpush1.msra.mxu0 0.0
        %2636 = vmatprep.subr.mxu0 0.0
        %2637 = vmatpush1.msra.mxu0 0.0
        %2638 = vmatprep.subr.mxu0 0.0
        %2639 = vmatpush1.msra.mxu0 0.0
        %2640 = vmatprep.subr.mxu0 0.0
        %2641 = vmatpush1.msra.mxu0 0.0
        %2642 = vmatprep.subr.mxu0 0.0
        %2643 = vmatpush1.msra.mxu0 0.0
        %2644 = vmatprep.subr.mxu0 0.0
        %2645 = vmatpush1.msra.mxu0 0.0
        %2646 = vmatprep.subr.mxu0 0.0
        %2647 = vmatpush1.msra.mxu0 0.0
        %2648 = vmatprep.subr.mxu0 0.0
        %2649 = vmatpush1.msra.mxu0 0.0
        %2650 = vmatprep.subr.mxu0 0.0
        %2651 = vmatpush1.msra.mxu0 0.0
        %2652 = vmatprep.subr.mxu0 0.0
        %2653 = vmatpush1.msra.mxu0 0.0
        %2654 = vmatprep.subr.mxu0 0.0
        %2655 = vmatpush1.msra.mxu0 0.0
        %2656 = vmatprep.subr.mxu0 0.0
        %2657 = vmatpush1.msra.mxu0 0.0
        %2658 = vmatprep.subr.mxu0 0.0
        %2659 = vmatpush1.msra.mxu0 0.0
        %2660 = vmatprep.subr.mxu0 0.0
        %2661 = vmatpush1.msra.mxu0 0.0
        %2662 = vmatprep.subr.mxu0 0.0
        %2663 = vmatpush1.msra.mxu0 0.0
        %2664 = vmatprep.subr.mxu0 0.0
        %2665 = vmatpush1.msra.mxu0 0.0
        %2666 = vmatprep.subr.mxu0 0.0
        %2667 = vmatpush1.msra.mxu0 0.0
        %2668 = vmatprep.subr.mxu0 0.0
        %2669 = vmatpush1.msra.mxu0 0.0
        %2670 = vmatprep.subr.mxu0 0.0
        %2671 = vmatpush1.msra.mxu0 0.0
        %2672 = vmatprep.subr.mxu0 0.0
        %2673 = vmatpush1.msra.mxu0 0.0
        %2674 = vmatprep.mubr.f32.mxu0 0.0
        %2675 = vmatmul.mubr.f32.gmra.mrb[0].mxu0 %v2608
        %v2676 = vpop.f32.mrb[0].mxu0
        %v2677 = vadd.f32 0.0, %v2676
        %v2678 = vpop.f32.mrb[0].mxu0
        %2679 = vdwg.mxu0
        %v2680 = vsel %vm917, %v2393, 0
        %2682 = vmatprep.subr.mxu0 0.0
        %2683 = vmatpush1.msra.mxu0 %v2488
        %2684 = vmatprep.subr.mxu0 0.0
        %2685 = vmatpush1.msra.mxu0 0.0
        %2686 = vmatprep.subr.mxu0 0.0
        %2687 = vmatpush1.msra.mxu0 0.0
        %2688 = vmatprep.subr.mxu0 0.0
        %2689 = vmatpush1.msra.mxu0 0.0
        %2690 = vmatprep.subr.mxu0 0.0
        %2691 = vmatpush1.msra.mxu0 0.0
        %2692 = vmatprep.subr.mxu0 0.0
        %2693 = vmatpush1.msra.mxu0 0.0
        %2694 = vmatprep.subr.mxu0 0.0
        %2695 = vmatpush1.msra.mxu0 0.0
        %2696 = vmatprep.subr.mxu0 0.0
        %2697 = vmatpush1.msra.mxu0 0.0
        %2698 = vmatprep.subr.mxu0 0.0
        %2699 = vmatpush1.msra.mxu0 0.0
        %2700 = vmatprep.subr.mxu0 0.0
        %2701 = vmatpush1.msra.mxu0 0.0
        %2702 = vmatprep.subr.mxu0 0.0
        %2703 = vmatpush1.msra.mxu0 0.0
        %2704 = vmatprep.subr.mxu0 0.0
        %2705 = vmatpush1.msra.mxu0 0.0
        %2706 = vmatprep.subr.mxu0 0.0
        %2707 = vmatpush1.msra.mxu0 0.0
        %2708 = vmatprep.subr.mxu0 0.0
        %2709 = vmatpush1.msra.mxu0 0.0
        %2710 = vmatprep.subr.mxu0 0.0
        %2711 = vmatpush1.msra.mxu0 0.0
        %2712 = vmatprep.subr.mxu0 0.0
        %2713 = vmatpush1.msra.mxu0 0.0
        %2714 = vmatprep.subr.mxu0 0.0
        %2715 = vmatpush1.msra.mxu0 0.0
        %2716 = vmatprep.subr.mxu0 0.0
        %2717 = vmatpush1.msra.mxu0 0.0
        %2718 = vmatprep.subr.mxu0 0.0
        %2719 = vmatpush1.msra.mxu0 0.0
        %2720 = vmatprep.subr.mxu0 0.0
        %2721 = vmatpush1.msra.mxu0 0.0
        %2722 = vmatprep.subr.mxu0 0.0
        %2723 = vmatpush1.msra.mxu0 0.0
        %2724 = vmatprep.subr.mxu0 0.0
        %2725 = vmatpush1.msra.mxu0 0.0
        %2726 = vmatprep.subr.mxu0 0.0
        %2727 = vmatpush1.msra.mxu0 0.0
        %2728 = vmatprep.subr.mxu0 0.0
        %2729 = vmatpush1.msra.mxu0 0.0
        %2730 = vmatprep.subr.mxu0 0.0
        %2731 = vmatpush1.msra.mxu0 0.0
        %2732 = vmatprep.subr.mxu0 0.0
        %2733 = vmatpush1.msra.mxu0 0.0
        %2734 = vmatprep.subr.mxu0 0.0
        %2735 = vmatpush1.msra.mxu0 0.0
        %2736 = vmatprep.subr.mxu0 0.0
        %2737 = vmatpush1.msra.mxu0 0.0
        %2738 = vmatprep.subr.mxu0 0.0
        %2739 = vmatpush1.msra.mxu0 0.0
        %2740 = vmatprep.subr.mxu0 0.0
        %2741 = vmatpush1.msra.mxu0 0.0
        %2742 = vmatprep.subr.mxu0 0.0
        %2743 = vmatpush1.msra.mxu0 0.0
        %2744 = vmatprep.subr.mxu0 0.0
        %2745 = vmatpush1.msra.mxu0 0.0
        %2746 = vmatprep.mubr.f32.mxu0 0.0
        %2747 = vmatmul.mubr.f32.gmra.mrb[0].mxu0 %v2680
        %v2748 = vpop.f32.mrb[0].mxu0
        %v2749 = vadd.f32 0.0, %v2748
        %v2750 = vpop.f32.mrb[0].mxu0
        %2751 = vdwg.mxu0
        %v2752 = vsel %vm917, %v2395, 0
        %2754 = vmatprep.subr.mxu0 0.0
        %2755 = vmatpush1.msra.mxu0 %v2520
        %2756 = vmatprep.subr.mxu0 0.0
        %2757 = vmatpush1.msra.mxu0 0.0
        %2758 = vmatprep.subr.mxu0 0.0
        %2759 = vmatpush1.msra.mxu0 0.0
        %2760 = vmatprep.subr.mxu0 0.0
        %2761 = vmatpush1.msra.mxu0 0.0
        %2762 = vmatprep.subr.mxu0 0.0
        %2763 = vmatpush1.msra.mxu0 0.0
        %2764 = vmatprep.subr.mxu0 0.0
        %2765 = vmatpush1.msra.mxu0 0.0
        %2766 = vmatprep.subr.mxu0 0.0
        %2767 = vmatpush1.msra.mxu0 0.0
        %2768 = vmatprep.subr.mxu0 0.0
        %2769 = vmatpush1.msra.mxu0 0.0
        %2770 = vmatprep.subr.mxu0 0.0
        %2771 = vmatpush1.msra.mxu0 0.0
        %2772 = vmatprep.subr.mxu0 0.0
        %2773 = vmatpush1.msra.mxu0 0.0
        %2774 = vmatprep.subr.mxu0 0.0
        %2775 = vmatpush1.msra.mxu0 0.0
        %2776 = vmatprep.subr.mxu0 0.0
        %2777 = vmatpush1.msra.mxu0 0.0
        %2778 = vmatprep.subr.mxu0 0.0
        %2779 = vmatpush1.msra.mxu0 0.0
        %2780 = vmatprep.subr.mxu0 0.0
        %2781 = vmatpush1.msra.mxu0 0.0
        %2782 = vmatprep.subr.mxu0 0.0
        %2783 = vmatpush1.msra.mxu0 0.0
        %2784 = vmatprep.subr.mxu0 0.0
        %2785 = vmatpush1.msra.mxu0 0.0
        %2786 = vmatprep.subr.mxu0 0.0
        %2787 = vmatpush1.msra.mxu0 0.0
        %2788 = vmatprep.subr.mxu0 0.0
        %2789 = vmatpush1.msra.mxu0 0.0
        %2790 = vmatprep.subr.mxu0 0.0
        %2791 = vmatpush1.msra.mxu0 0.0
        %2792 = vmatprep.subr.mxu0 0.0
        %2793 = vmatpush1.msra.mxu0 0.0
        %2794 = vmatprep.subr.mxu0 0.0
        %2795 = vmatpush1.msra.mxu0 0.0
        %2796 = vmatprep.subr.mxu0 0.0
        %2797 = vmatpush1.msra.mxu0 0.0
        %2798 = vmatprep.subr.mxu0 0.0
        %2799 = vmatpush1.msra.mxu0 0.0
        %2800 = vmatprep.subr.mxu0 0.0
        %2801 = vmatpush1.msra.mxu0 0.0
        %2802 = vmatprep.subr.mxu0 0.0
        %2803 = vmatpush1.msra.mxu0 0.0
        %2804 = vmatprep.subr.mxu0 0.0
        %2805 = vmatpush1.msra.mxu0 0.0
        %2806 = vmatprep.subr.mxu0 0.0
        %2807 = vmatpush1.msra.mxu0 0.0
        %2808 = vmatprep.subr.mxu0 0.0
        %2809 = vmatpush1.msra.mxu0 0.0
        %2810 = vmatprep.subr.mxu0 0.0
        %2811 = vmatpush1.msra.mxu0 0.0
        %2812 = vmatprep.subr.mxu0 0.0
        %2813 = vmatpush1.msra.mxu0 0.0
        %2814 = vmatprep.subr.mxu0 0.0
        %2815 = vmatpush1.msra.mxu0 0.0
        %2816 = vmatprep.subr.mxu0 0.0
        %2817 = vmatpush1.msra.mxu0 0.0
        %2818 = vmatprep.mubr.f32.mxu0 0.0
        %2819 = vmatmul.mubr.f32.gmra.mrb[0].mxu0 %v2752
        %v2820 = vpop.f32.mrb[0].mxu0
        %v2821 = vadd.f32 0.0, %v2820
        %v2822 = vpop.f32.mrb[0].mxu0
        %2823 = vdwg.mxu0
        %v2824 = vmul.f32 %v2605, 0.35355338
        %v2825 = vmul.f32 %v2677, 0.35355338
        %v2826 = vmul.f32 %v2749, 0.35355338
        %v2827 = vmul.f32 %v2821, 0.35355338
        %v2828 = vadd.f32 %v2824, %v660
        %v2829 = vadd.f32 %v2825, %v660
        %v2830 = vadd.f32 %v2826, %v660
        %v2831 = vadd.f32 %v2827, %v660
        %v2832 = vsel %vm917, %v2828, -inf
        %2833 = vmax.xlane.f32.xlu0 %v2832
        %v2834 = vpop.xlane.xlu0 %2833
        %v2835 = vsel %vm917, %v2829, -inf
        %2836 = vmax.xlane.f32.xlu0 %v2835
        %v2837 = vpop.xlane.xlu0 %2836
        %v2838 = vsel %vm917, %v2830, -inf
        %2839 = vmax.xlane.f32.xlu0 %v2838
        %v2840 = vpop.xlane.xlu0 %2839
        %v2841 = vsel %vm917, %v2831, -inf
        %2842 = vmax.xlane.f32.xlu0 %v2841
        %v2843 = vpop.xlane.xlu0 %2842
        %v2844 = vsub.f32 %v2828, %v2834
        %v2845 = vsub.f32 %v2829, %v2837
        %v2846 = vsub.f32 %v2830, %v2840
        %v2847 = vsub.f32 %v2831, %v2843
        %v2848 = vmul.f32 %v2844, 1.442695
        %v2849 = vpow.pop %v2848
        %v2850 = vmul.f32 %v2845, 1.442695
        %v2851 = vpow.pop %v2850
        %v2852 = vmul.f32 %v2846, 1.442695
        %v2853 = vpow.pop %v2852
        %v2854 = vmul.f32 %v2847, 1.442695
        %v2855 = vpow.pop %v2854
        %v2856 = vsel %vm917, %v2849, 0.0
        %2857 = vadd.xlane.f32.xlu0 %v2856
        %v2858 = vpop.xlane.xlu0 %2857
        %v2859 = vsel %vm917, %v2851, 0.0
        %2860 = vadd.xlane.f32.xlu0 %v2859
        %v2861 = vpop.xlane.xlu0 %2860
        %v2862 = vsel %vm917, %v2853, 0.0
        %2863 = vadd.xlane.f32.xlu0 %v2862
        %v2864 = vpop.xlane.xlu0 %2863
        %v2865 = vsel %vm917, %v2855, 0.0
        %2866 = vadd.xlane.f32.xlu0 %v2865
        %v2867 = vpop.xlane.xlu0 %2866
        %v2868 = vrcp.pop %v2858
        %v2869 = vmul.f32 %v2849, %v2868
        %v2870 = vrcp.pop %v2861
        %v2871 = vmul.f32 %v2851, %v2870
        %v2872 = vrcp.pop %v2864
        %v2873 = vmul.f32 %v2853, %v2872
        %v2874 = vrcp.pop %v2867
        %v2875 = vmul.f32 %v2855, %v2874
        %2876 = vrot.lane.b32.xlu0 %v2386, 64
        %v2877 = vpop.permute.xlu0 %2876
        %2878 = vrot.lane.b32.xlu0 %v2391, 64
        %v2879 = vpop.permute.xlu0 %2878
        %2880 = vrot.lane.b32.xlu0 %v2393, 64
        %v2881 = vpop.permute.xlu0 %2880
        %2882 = vrot.lane.b32.xlu0 %v2395, 64
        %v2883 = vpop.permute.xlu0 %2882
        %2888 = vxpose.xlu0.b32.start [1/16] %v2877, 128
        %2889 = vxpose.xlu0.b32.cont [2/16] 0.0, 128
        %2890 = vxpose.xlu0.b32.cont [3/16] 0.0, 128
        %2891 = vxpose.xlu0.b32.cont [4/16] 0.0, 128
        %2892 = vxpose.xlu0.b32.cont [5/16] 0.0, 128
        %2893 = vxpose.xlu0.b32.cont [6/16] 0.0, 128
        %2894 = vxpose.xlu0.b32.cont [7/16] 0.0, 128
        %2895 = vxpose.xlu0.b32.cont [8/16] 0.0, 128
        %2896 = vxpose.xlu0.b32.cont [9/16] 0.0, 128
        %2897 = vxpose.xlu0.b32.cont [10/16] 0.0, 128
        %2898 = vxpose.xlu0.b32.cont [11/16] 0.0, 128
        %2899 = vxpose.xlu0.b32.cont [12/16] 0.0, 128
        %2900 = vxpose.xlu0.b32.cont [13/16] 0.0, 128
        %2901 = vxpose.xlu0.b32.cont [14/16] 0.0, 128
        %2902 = vxpose.xlu0.b32.cont [15/16] 0.0, 128
        %2903 = vxpose.xlu0.b32.end [16/16] 0.0, 128
        %v2904 = vpop.trf.xlu0
        %v2905 = vpop.trf.xlu0
        %v2906 = vpop.trf.xlu0
        %v2907 = vpop.trf.xlu0
        %v2908 = vpop.trf.xlu0
        %v2909 = vpop.trf.xlu0
        %v2910 = vpop.trf.xlu0
        %v2911 = vpop.trf.xlu0
        %v2912 = vpop.trf.xlu0
        %v2913 = vpop.trf.xlu0
        %v2914 = vpop.trf.xlu0
        %v2915 = vpop.trf.xlu0
        %v2916 = vpop.trf.xlu0
        %v2917 = vpop.trf.xlu0
        %v2918 = vpop.trf.xlu0
        %v2919 = vpop.trf.xlu0
        %2920 = vxpose.xlu0.b32.start [1/16] %v2879, 128
        %2921 = vxpose.xlu0.b32.cont [2/16] 0.0, 128
        %2922 = vxpose.xlu0.b32.cont [3/16] 0.0, 128
        %2923 = vxpose.xlu0.b32.cont [4/16] 0.0, 128
        %2924 = vxpose.xlu0.b32.cont [5/16] 0.0, 128
        %2925 = vxpose.xlu0.b32.cont [6/16] 0.0, 128
        %2926 = vxpose.xlu0.b32.cont [7/16] 0.0, 128
        %2927 = vxpose.xlu0.b32.cont [8/16] 0.0, 128
        %2928 = vxpose.xlu0.b32.cont [9/16] 0.0, 128
        %2929 = vxpose.xlu0.b32.cont [10/16] 0.0, 128
        %2930 = vxpose.xlu0.b32.cont [11/16] 0.0, 128
        %2931 = vxpose.xlu0.b32.cont [12/16] 0.0, 128
        %2932 = vxpose.xlu0.b32.cont [13/16] 0.0, 128
        %2933 = vxpose.xlu0.b32.cont [14/16] 0.0, 128
        %2934 = vxpose.xlu0.b32.cont [15/16] 0.0, 128
        %2935 = vxpose.xlu0.b32.end [16/16] 0.0, 128
        %v2936 = vpop.trf.xlu0
        %v2937 = vpop.trf.xlu0
        %v2938 = vpop.trf.xlu0
        %v2939 = vpop.trf.xlu0
        %v2940 = vpop.trf.xlu0
        %v2941 = vpop.trf.xlu0
        %v2942 = vpop.trf.xlu0
        %v2943 = vpop.trf.xlu0
        %v2944 = vpop.trf.xlu0
        %v2945 = vpop.trf.xlu0
        %v2946 = vpop.trf.xlu0
        %v2947 = vpop.trf.xlu0
        %v2948 = vpop.trf.xlu0
        %v2949 = vpop.trf.xlu0
        %v2950 = vpop.trf.xlu0
        %v2951 = vpop.trf.xlu0
        %2952 = vxpose.xlu0.b32.start [1/16] %v2881, 128
        %2953 = vxpose.xlu0.b32.cont [2/16] 0.0, 128
        %2954 = vxpose.xlu0.b32.cont [3/16] 0.0, 128
        %2955 = vxpose.xlu0.b32.cont [4/16] 0.0, 128
        %2956 = vxpose.xlu0.b32.cont [5/16] 0.0, 128
        %2957 = vxpose.xlu0.b32.cont [6/16] 0.0, 128
        %2958 = vxpose.xlu0.b32.cont [7/16] 0.0, 128
        %2959 = vxpose.xlu0.b32.cont [8/16] 0.0, 128
        %2960 = vxpose.xlu0.b32.cont [9/16] 0.0, 128
        %2961 = vxpose.xlu0.b32.cont [10/16] 0.0, 128
        %2962 = vxpose.xlu0.b32.cont [11/16] 0.0, 128
        %2963 = vxpose.xlu0.b32.cont [12/16] 0.0, 128
        %2964 = vxpose.xlu0.b32.cont [13/16] 0.0, 128
        %2965 = vxpose.xlu0.b32.cont [14/16] 0.0, 128
        %2966 = vxpose.xlu0.b32.cont [15/16] 0.0, 128
        %2967 = vxpose.xlu0.b32.end [16/16] 0.0, 128
        %v2968 = vpop.trf.xlu0
        %v2969 = vpop.trf.xlu0
        %v2970 = vpop.trf.xlu0
        %v2971 = vpop.trf.xlu0
        %v2972 = vpop.trf.xlu0
        %v2973 = vpop.trf.xlu0
        %v2974 = vpop.trf.xlu0
        %v2975 = vpop.trf.xlu0
        %v2976 = vpop.trf.xlu0
        %v2977 = vpop.trf.xlu0
        %v2978 = vpop.trf.xlu0
        %v2979 = vpop.trf.xlu0
        %v2980 = vpop.trf.xlu0
        %v2981 = vpop.trf.xlu0
        %v2982 = vpop.trf.xlu0
        %v2983 = vpop.trf.xlu0
        %2984 = vxpose.xlu0.b32.start [1/16] %v2883, 128
        %2985 = vxpose.xlu0.b32.cont [2/16] 0.0, 128
        %2986 = vxpose.xlu0.b32.cont [3/16] 0.0, 128
        %2987 = vxpose.xlu0.b32.cont [4/16] 0.0, 128
        %2988 = vxpose.xlu0.b32.cont [5/16] 0.0, 128
        %2989 = vxpose.xlu0.b32.cont [6/16] 0.0, 128
        %2990 = vxpose.xlu0.b32.cont [7/16] 0.0, 128
        %2991 = vxpose.xlu0.b32.cont [8/16] 0.0, 128
        %2992 = vxpose.xlu0.b32.cont [9/16] 0.0, 128
        %2993 = vxpose.xlu0.b32.cont [10/16] 0.0, 128
        %2994 = vxpose.xlu0.b32.cont [11/16] 0.0, 128
        %2995 = vxpose.xlu0.b32.cont [12/16] 0.0, 128
        %2996 = vxpose.xlu0.b32.cont [13/16] 0.0, 128
        %2997 = vxpose.xlu0.b32.cont [14/16] 0.0, 128
        %2998 = vxpose.xlu0.b32.cont [15/16] 0.0, 128
        %2999 = vxpose.xlu0.b32.end [16/16] 0.0, 128
        %v3000 = vpop.trf.xlu0
        %v3001 = vpop.trf.xlu0
        %v3002 = vpop.trf.xlu0
        %v3003 = vpop.trf.xlu0
        %v3004 = vpop.trf.xlu0
        %v3005 = vpop.trf.xlu0
        %v3006 = vpop.trf.xlu0
        %v3007 = vpop.trf.xlu0
        %v3008 = vpop.trf.xlu0
        %v3009 = vpop.trf.xlu0
        %v3010 = vpop.trf.xlu0
        %v3011 = vpop.trf.xlu0
        %v3012 = vpop.trf.xlu0
        %v3013 = vpop.trf.xlu0
        %v3014 = vpop.trf.xlu0
        %v3015 = vpop.trf.xlu0
        %v3017 = vsel %vm917, %v2904, 0
        %v3020 = vsel %vm917, %v2869, 0
        %3022 = vmatprep.subr.mxu0 0.0
        %3023 = vmatpush1.xpose.msra.mxu0 %v3020
        %3024 = vmatprep.subr.mxu0 0.0
        %3025 = vmatpush1.xpose.msra.mxu0 0.0
        %3026 = vmatprep.subr.mxu0 0.0
        %3027 = vmatpush1.xpose.msra.mxu0 0.0
        %3028 = vmatprep.subr.mxu0 0.0
        %3029 = vmatpush1.xpose.msra.mxu0 0.0
        %3030 = vmatprep.subr.mxu0 0.0
        %3031 = vmatpush1.xpose.msra.mxu0 0.0
        %3032 = vmatprep.subr.mxu0 0.0
        %3033 = vmatpush1.xpose.msra.mxu0 0.0
        %3034 = vmatprep.subr.mxu0 0.0
        %3035 = vmatpush1.xpose.msra.mxu0 0.0
        %3036 = vmatprep.subr.mxu0 0.0
        %3037 = vmatpush1.xpose.msra.mxu0 0.0
        %3038 = vmatprep.subr.mxu0 0.0
        %3039 = vmatpush1.xpose.msra.mxu0 0.0
        %3040 = vmatprep.subr.mxu0 0.0
        %3041 = vmatpush1.xpose.msra.mxu0 0.0
        %3042 = vmatprep.subr.mxu0 0.0
        %3043 = vmatpush1.xpose.msra.mxu0 0.0
        %3044 = vmatprep.subr.mxu0 0.0
        %3045 = vmatpush1.xpose.msra.mxu0 0.0
        %3046 = vmatprep.subr.mxu0 0.0
        %3047 = vmatpush1.xpose.msra.mxu0 0.0
        %3048 = vmatprep.subr.mxu0 0.0
        %3049 = vmatpush1.xpose.msra.mxu0 0.0
        %3050 = vmatprep.subr.mxu0 0.0
        %3051 = vmatpush1.xpose.msra.mxu0 0.0
        %3052 = vmatprep.subr.mxu0 0.0
        %3053 = vmatpush1.xpose.msra.mxu0 0.0
        %3054 = vmatprep.subr.mxu0 0.0
        %3055 = vmatpush1.xpose.msra.mxu0 0.0
        %3056 = vmatprep.subr.mxu0 0.0
        %3057 = vmatpush1.xpose.msra.mxu0 0.0
        %3058 = vmatprep.subr.mxu0 0.0
        %3059 = vmatpush1.xpose.msra.mxu0 0.0
        %3060 = vmatprep.subr.mxu0 0.0
        %3061 = vmatpush1.xpose.msra.mxu0 0.0
        %3062 = vmatprep.subr.mxu0 0.0
        %3063 = vmatpush1.xpose.msra.mxu0 0.0
        %3064 = vmatprep.subr.mxu0 0.0
        %3065 = vmatpush1.xpose.msra.mxu0 0.0
        %3066 = vmatprep.subr.mxu0 0.0
        %3067 = vmatpush1.xpose.msra.mxu0 0.0
        %3068 = vmatprep.subr.mxu0 0.0
        %3069 = vmatpush1.xpose.msra.mxu0 0.0
        %3070 = vmatprep.subr.mxu0 0.0
        %3071 = vmatpush1.xpose.msra.mxu0 0.0
        %3072 = vmatprep.subr.mxu0 0.0
        %3073 = vmatpush1.xpose.msra.mxu0 0.0
        %3074 = vmatprep.subr.mxu0 0.0
        %3075 = vmatpush1.xpose.msra.mxu0 0.0
        %3076 = vmatprep.subr.mxu0 0.0
        %3077 = vmatpush1.xpose.msra.mxu0 0.0
        %3078 = vmatprep.subr.mxu0 0.0
        %3079 = vmatpush1.xpose.msra.mxu0 0.0
        %3080 = vmatprep.subr.mxu0 0.0
        %3081 = vmatpush1.xpose.msra.mxu0 0.0
        %3082 = vmatprep.subr.mxu0 0.0
        %3083 = vmatpush1.xpose.msra.mxu0 0.0
        %3084 = vmatprep.subr.mxu0 0.0
        %3085 = vmatpush1.xpose.msra.mxu0 0.0
        %3086 = vmatprep.mubr.f32.mxu0 0.0
        %3087 = vmatmul.mubr.f32.gmra.mrb[0].mxu0 %v3017
        %v3088 = vpop.f32.mrb[0].mxu0
        %v3089 = vadd.f32 0.0, %v3088
        %v3090 = vpop.f32.mrb[0].mxu0
        %3091 = vdwg.mxu0
        %v3093 = vsel %vm917, %v2936, 0
        %v3096 = vsel %vm917, %v2871, 0
        %3098 = vmatprep.subr.mxu0 0.0
        %3099 = vmatpush1.xpose.msra.mxu0 %v3096
        %3100 = vmatprep.subr.mxu0 0.0
        %3101 = vmatpush1.xpose.msra.mxu0 0.0
        %3102 = vmatprep.subr.mxu0 0.0
        %3103 = vmatpush1.xpose.msra.mxu0 0.0
        %3104 = vmatprep.subr.mxu0 0.0
        %3105 = vmatpush1.xpose.msra.mxu0 0.0
        %3106 = vmatprep.subr.mxu0 0.0
        %3107 = vmatpush1.xpose.msra.mxu0 0.0
        %3108 = vmatprep.subr.mxu0 0.0
        %3109 = vmatpush1.xpose.msra.mxu0 0.0
        %3110 = vmatprep.subr.mxu0 0.0
        %3111 = vmatpush1.xpose.msra.mxu0 0.0
        %3112 = vmatprep.subr.mxu0 0.0
        %3113 = vmatpush1.xpose.msra.mxu0 0.0
        %3114 = vmatprep.subr.mxu0 0.0
        %3115 = vmatpush1.xpose.msra.mxu0 0.0
        %3116 = vmatprep.subr.mxu0 0.0
        %3117 = vmatpush1.xpose.msra.mxu0 0.0
        %3118 = vmatprep.subr.mxu0 0.0
        %3119 = vmatpush1.xpose.msra.mxu0 0.0
        %3120 = vmatprep.subr.mxu0 0.0
        %3121 = vmatpush1.xpose.msra.mxu0 0.0
        %3122 = vmatprep.subr.mxu0 0.0
        %3123 = vmatpush1.xpose.msra.mxu0 0.0
        %3124 = vmatprep.subr.mxu0 0.0
        %3125 = vmatpush1.xpose.msra.mxu0 0.0
        %3126 = vmatprep.subr.mxu0 0.0
        %3127 = vmatpush1.xpose.msra.mxu0 0.0
        %3128 = vmatprep.subr.mxu0 0.0
        %3129 = vmatpush1.xpose.msra.mxu0 0.0
        %3130 = vmatprep.subr.mxu0 0.0
        %3131 = vmatpush1.xpose.msra.mxu0 0.0
        %3132 = vmatprep.subr.mxu0 0.0
        %3133 = vmatpush1.xpose.msra.mxu0 0.0
        %3134 = vmatprep.subr.mxu0 0.0
        %3135 = vmatpush1.xpose.msra.mxu0 0.0
        %3136 = vmatprep.subr.mxu0 0.0
        %3137 = vmatpush1.xpose.msra.mxu0 0.0
        %3138 = vmatprep.subr.mxu0 0.0
        %3139 = vmatpush1.xpose.msra.mxu0 0.0
        %3140 = vmatprep.subr.mxu0 0.0
        %3141 = vmatpush1.xpose.msra.mxu0 0.0
        %3142 = vmatprep.subr.mxu0 0.0
        %3143 = vmatpush1.xpose.msra.mxu0 0.0
        %3144 = vmatprep.subr.mxu0 0.0
        %3145 = vmatpush1.xpose.msra.mxu0 0.0
        %3146 = vmatprep.subr.mxu0 0.0
        %3147 = vmatpush1.xpose.msra.mxu0 0.0
        %3148 = vmatprep.subr.mxu0 0.0
        %3149 = vmatpush1.xpose.msra.mxu0 0.0
        %3150 = vmatprep.subr.mxu0 0.0
        %3151 = vmatpush1.xpose.msra.mxu0 0.0
        %3152 = vmatprep.subr.mxu0 0.0
        %3153 = vmatpush1.xpose.msra.mxu0 0.0
        %3154 = vmatprep.subr.mxu0 0.0
        %3155 = vmatpush1.xpose.msra.mxu0 0.0
        %3156 = vmatprep.subr.mxu0 0.0
        %3157 = vmatpush1.xpose.msra.mxu0 0.0
        %3158 = vmatprep.subr.mxu0 0.0
        %3159 = vmatpush1.xpose.msra.mxu0 0.0
        %3160 = vmatprep.subr.mxu0 0.0
        %3161 = vmatpush1.xpose.msra.mxu0 0.0
        %3162 = vmatprep.mubr.f32.mxu0 0.0
        %3163 = vmatmul.mubr.f32.gmra.mrb[0].mxu0 %v3093
        %v3164 = vpop.f32.mrb[0].mxu0
        %v3165 = vadd.f32 0.0, %v3164
        %v3166 = vpop.f32.mrb[0].mxu0
        %3167 = vdwg.mxu0
        %v3169 = vsel %vm917, %v2968, 0
        %v3172 = vsel %vm917, %v2873, 0
        %3174 = vmatprep.subr.mxu0 0.0
        %3175 = vmatpush1.xpose.msra.mxu0 %v3172
        %3176 = vmatprep.subr.mxu0 0.0
        %3177 = vmatpush1.xpose.msra.mxu0 0.0
        %3178 = vmatprep.subr.mxu0 0.0
        %3179 = vmatpush1.xpose.msra.mxu0 0.0
        %3180 = vmatprep.subr.mxu0 0.0
        %3181 = vmatpush1.xpose.msra.mxu0 0.0
        %3182 = vmatprep.subr.mxu0 0.0
        %3183 = vmatpush1.xpose.msra.mxu0 0.0
        %3184 = vmatprep.subr.mxu0 0.0
        %3185 = vmatpush1.xpose.msra.mxu0 0.0
        %3186 = vmatprep.subr.mxu0 0.0
        %3187 = vmatpush1.xpose.msra.mxu0 0.0
        %3188 = vmatprep.subr.mxu0 0.0
        %3189 = vmatpush1.xpose.msra.mxu0 0.0
        %3190 = vmatprep.subr.mxu0 0.0
        %3191 = vmatpush1.xpose.msra.mxu0 0.0
        %3192 = vmatprep.subr.mxu0 0.0
        %3193 = vmatpush1.xpose.msra.mxu0 0.0
        %3194 = vmatprep.subr.mxu0 0.0
        %3195 = vmatpush1.xpose.msra.mxu0 0.0
        %3196 = vmatprep.subr.mxu0 0.0
        %3197 = vmatpush1.xpose.msra.mxu0 0.0
        %3198 = vmatprep.subr.mxu0 0.0
        %3199 = vmatpush1.xpose.msra.mxu0 0.0
        %3200 = vmatprep.subr.mxu0 0.0
        %3201 = vmatpush1.xpose.msra.mxu0 0.0
        %3202 = vmatprep.subr.mxu0 0.0
        %3203 = vmatpush1.xpose.msra.mxu0 0.0
        %3204 = vmatprep.subr.mxu0 0.0
        %3205 = vmatpush1.xpose.msra.mxu0 0.0
        %3206 = vmatprep.subr.mxu0 0.0
        %3207 = vmatpush1.xpose.msra.mxu0 0.0
        %3208 = vmatprep.subr.mxu0 0.0
        %3209 = vmatpush1.xpose.msra.mxu0 0.0
        %3210 = vmatprep.subr.mxu0 0.0
        %3211 = vmatpush1.xpose.msra.mxu0 0.0
        %3212 = vmatprep.subr.mxu0 0.0
        %3213 = vmatpush1.xpose.msra.mxu0 0.0
        %3214 = vmatprep.subr.mxu0 0.0
        %3215 = vmatpush1.xpose.msra.mxu0 0.0
        %3216 = vmatprep.subr.mxu0 0.0
        %3217 = vmatpush1.xpose.msra.mxu0 0.0
        %3218 = vmatprep.subr.mxu0 0.0
        %3219 = vmatpush1.xpose.msra.mxu0 0.0
        %3220 = vmatprep.subr.mxu0 0.0
        %3221 = vmatpush1.xpose.msra.mxu0 0.0
        %3222 = vmatprep.subr.mxu0 0.0
        %3223 = vmatpush1.xpose.msra.mxu0 0.0
        %3224 = vmatprep.subr.mxu0 0.0
        %3225 = vmatpush1.xpose.msra.mxu0 0.0
        %3226 = vmatprep.subr.mxu0 0.0
        %3227 = vmatpush1.xpose.msra.mxu0 0.0
        %3228 = vmatprep.subr.mxu0 0.0
        %3229 = vmatpush1.xpose.msra.mxu0 0.0
        %3230 = vmatprep.subr.mxu0 0.0
        %3231 = vmatpush1.xpose.msra.mxu0 0.0
        %3232 = vmatprep.subr.mxu0 0.0
        %3233 = vmatpush1.xpose.msra.mxu0 0.0
        %3234 = vmatprep.subr.mxu0 0.0
        %3235 = vmatpush1.xpose.msra.mxu0 0.0
        %3236 = vmatprep.subr.mxu0 0.0
        %3237 = vmatpush1.xpose.msra.mxu0 0.0
        %3238 = vmatprep.mubr.f32.mxu0 0.0
        %3239 = vmatmul.mubr.f32.gmra.mrb[0].mxu0 %v3169
        %v3240 = vpop.f32.mrb[0].mxu0
        %v3241 = vadd.f32 0.0, %v3240
        %v3242 = vpop.f32.mrb[0].mxu0
        %3243 = vdwg.mxu0
        %v3245 = vsel %vm917, %v3000, 0
        %v3248 = vsel %vm917, %v2875, 0
        %3250 = vmatprep.subr.mxu0 0.0
        %3251 = vmatpush1.xpose.msra.mxu0 %v3248
        %3252 = vmatprep.subr.mxu0 0.0
        %3253 = vmatpush1.xpose.msra.mxu0 0.0
        %3254 = vmatprep.subr.mxu0 0.0
        %3255 = vmatpush1.xpose.msra.mxu0 0.0
        %3256 = vmatprep.subr.mxu0 0.0
        %3257 = vmatpush1.xpose.msra.mxu0 0.0
        %3258 = vmatprep.subr.mxu0 0.0
        %3259 = vmatpush1.xpose.msra.mxu0 0.0
        %3260 = vmatprep.subr.mxu0 0.0
        %3261 = vmatpush1.xpose.msra.mxu0 0.0
        %3262 = vmatprep.subr.mxu0 0.0
        %3263 = vmatpush1.xpose.msra.mxu0 0.0
        %3264 = vmatprep.subr.mxu0 0.0
        %3265 = vmatpush1.xpose.msra.mxu0 0.0
        %3266 = vmatprep.subr.mxu0 0.0
        %3267 = vmatpush1.xpose.msra.mxu0 0.0
        %3268 = vmatprep.subr.mxu0 0.0
        %3269 = vmatpush1.xpose.msra.mxu0 0.0
        %3270 = vmatprep.subr.mxu0 0.0
        %3271 = vmatpush1.xpose.msra.mxu0 0.0
        %3272 = vmatprep.subr.mxu0 0.0
        %3273 = vmatpush1.xpose.msra.mxu0 0.0
        %3274 = vmatprep.subr.mxu0 0.0
        %3275 = vmatpush1.xpose.msra.mxu0 0.0
        %3276 = vmatprep.subr.mxu0 0.0
        %3277 = vmatpush1.xpose.msra.mxu0 0.0
        %3278 = vmatprep.subr.mxu0 0.0
        %3279 = vmatpush1.xpose.msra.mxu0 0.0
        %3280 = vmatprep.subr.mxu0 0.0
        %3281 = vmatpush1.xpose.msra.mxu0 0.0
        %3282 = vmatprep.subr.mxu0 0.0
        %3283 = vmatpush1.xpose.msra.mxu0 0.0
        %3284 = vmatprep.subr.mxu0 0.0
        %3285 = vmatpush1.xpose.msra.mxu0 0.0
        %3286 = vmatprep.subr.mxu0 0.0
        %3287 = vmatpush1.xpose.msra.mxu0 0.0
        %3288 = vmatprep.subr.mxu0 0.0
        %3289 = vmatpush1.xpose.msra.mxu0 0.0
        %3290 = vmatprep.subr.mxu0 0.0
        %3291 = vmatpush1.xpose.msra.mxu0 0.0
        %3292 = vmatprep.subr.mxu0 0.0
        %3293 = vmatpush1.xpose.msra.mxu0 0.0
        %3294 = vmatprep.subr.mxu0 0.0
        %3295 = vmatpush1.xpose.msra.mxu0 0.0
        %3296 = vmatprep.subr.mxu0 0.0
        %3297 = vmatpush1.xpose.msra.mxu0 0.0
        %3298 = vmatprep.subr.mxu0 0.0
        %3299 = vmatpush1.xpose.msra.mxu0 0.0
        %3300 = vmatprep.subr.mxu0 0.0
        %3301 = vmatpush1.xpose.msra.mxu0 0.0
        %3302 = vmatprep.subr.mxu0 0.0
        %3303 = vmatpush1.xpose.msra.mxu0 0.0
        %3304 = vmatprep.subr.mxu0 0.0
        %3305 = vmatpush1.xpose.msra.mxu0 0.0
        %3306 = vmatprep.subr.mxu0 0.0
        %3307 = vmatpush1.xpose.msra.mxu0 0.0
        %3308 = vmatprep.subr.mxu0 0.0
        %3309 = vmatpush1.xpose.msra.mxu0 0.0
        %3310 = vmatprep.subr.mxu0 0.0
        %3311 = vmatpush1.xpose.msra.mxu0 0.0
        %3312 = vmatprep.subr.mxu0 0.0
        %3313 = vmatpush1.xpose.msra.mxu0 0.0
        %3314 = vmatprep.mubr.f32.mxu0 0.0
        %3315 = vmatmul.mubr.f32.gmra.mrb[0].mxu0 %v3245
        %v3316 = vpop.f32.mrb[0].mxu0
        %v3317 = vadd.f32 0.0, %v3316
        %v3318 = vpop.f32.mrb[0].mxu0
        %3319 = vdwg.mxu0
        %3320 = vxpose.xlu0.b32.start [1/16] %v3089, 128
        %3321 = vxpose.xlu0.b32.cont [2/16] 0.0, 128
        %3322 = vxpose.xlu0.b32.cont [3/16] 0.0, 128
        %3323 = vxpose.xlu0.b32.cont [4/16] 0.0, 128
        %3324 = vxpose.xlu0.b32.cont [5/16] 0.0, 128
        %3325 = vxpose.xlu0.b32.cont [6/16] 0.0, 128
        %3326 = vxpose.xlu0.b32.cont [7/16] 0.0, 128
        %3327 = vxpose.xlu0.b32.cont [8/16] 0.0, 128
        %3328 = vxpose.xlu0.b32.cont [9/16] 0.0, 128
        %3329 = vxpose.xlu0.b32.cont [10/16] 0.0, 128
        %3330 = vxpose.xlu0.b32.cont [11/16] 0.0, 128
        %3331 = vxpose.xlu0.b32.cont [12/16] 0.0, 128
        %3332 = vxpose.xlu0.b32.cont [13/16] 0.0, 128
        %3333 = vxpose.xlu0.b32.cont [14/16] 0.0, 128
        %3334 = vxpose.xlu0.b32.cont [15/16] 0.0, 128
        %3335 = vxpose.xlu0.b32.end [16/16] 0.0, 128
        %v3336 = vpop.trf.xlu0
        %v3337 = vpop.trf.xlu0
        %v3338 = vpop.trf.xlu0
        %v3339 = vpop.trf.xlu0
        %v3340 = vpop.trf.xlu0
        %v3341 = vpop.trf.xlu0
        %v3342 = vpop.trf.xlu0
        %v3343 = vpop.trf.xlu0
        %v3344 = vpop.trf.xlu0
        %v3345 = vpop.trf.xlu0
        %v3346 = vpop.trf.xlu0
        %v3347 = vpop.trf.xlu0
        %v3348 = vpop.trf.xlu0
        %v3349 = vpop.trf.xlu0
        %v3350 = vpop.trf.xlu0
        %v3351 = vpop.trf.xlu0
        %3352 = vxpose.xlu0.b32.start [1/16] %v3165, 128
        %3353 = vxpose.xlu0.b32.cont [2/16] 0.0, 128
        %3354 = vxpose.xlu0.b32.cont [3/16] 0.0, 128
        %3355 = vxpose.xlu0.b32.cont [4/16] 0.0, 128
        %3356 = vxpose.xlu0.b32.cont [5/16] 0.0, 128
        %3357 = vxpose.xlu0.b32.cont [6/16] 0.0, 128
        %3358 = vxpose.xlu0.b32.cont [7/16] 0.0, 128
        %3359 = vxpose.xlu0.b32.cont [8/16] 0.0, 128
        %3360 = vxpose.xlu0.b32.cont [9/16] 0.0, 128
        %3361 = vxpose.xlu0.b32.cont [10/16] 0.0, 128
        %3362 = vxpose.xlu0.b32.cont [11/16] 0.0, 128
        %3363 = vxpose.xlu0.b32.cont [12/16] 0.0, 128
        %3364 = vxpose.xlu0.b32.cont [13/16] 0.0, 128
        %3365 = vxpose.xlu0.b32.cont [14/16] 0.0, 128
        %3366 = vxpose.xlu0.b32.cont [15/16] 0.0, 128
        %3367 = vxpose.xlu0.b32.end [16/16] 0.0, 128
        %v3368 = vpop.trf.xlu0
        %v3369 = vpop.trf.xlu0
        %v3370 = vpop.trf.xlu0
        %v3371 = vpop.trf.xlu0
        %v3372 = vpop.trf.xlu0
        %v3373 = vpop.trf.xlu0
        %v3374 = vpop.trf.xlu0
        %v3375 = vpop.trf.xlu0
        %v3376 = vpop.trf.xlu0
        %v3377 = vpop.trf.xlu0
        %v3378 = vpop.trf.xlu0
        %v3379 = vpop.trf.xlu0
        %v3380 = vpop.trf.xlu0
        %v3381 = vpop.trf.xlu0
        %v3382 = vpop.trf.xlu0
        %v3383 = vpop.trf.xlu0
        %3384 = vxpose.xlu0.b32.start [1/16] %v3241, 128
        %3385 = vxpose.xlu0.b32.cont [2/16] 0.0, 128
        %3386 = vxpose.xlu0.b32.cont [3/16] 0.0, 128
        %3387 = vxpose.xlu0.b32.cont [4/16] 0.0, 128
        %3388 = vxpose.xlu0.b32.cont [5/16] 0.0, 128
        %3389 = vxpose.xlu0.b32.cont [6/16] 0.0, 128
        %3390 = vxpose.xlu0.b32.cont [7/16] 0.0, 128
        %3391 = vxpose.xlu0.b32.cont [8/16] 0.0, 128
        %3392 = vxpose.xlu0.b32.cont [9/16] 0.0, 128
        %3393 = vxpose.xlu0.b32.cont [10/16] 0.0, 128
        %3394 = vxpose.xlu0.b32.cont [11/16] 0.0, 128
        %3395 = vxpose.xlu0.b32.cont [12/16] 0.0, 128
        %3396 = vxpose.xlu0.b32.cont [13/16] 0.0, 128
        %3397 = vxpose.xlu0.b32.cont [14/16] 0.0, 128
        %3398 = vxpose.xlu0.b32.cont [15/16] 0.0, 128
        %3399 = vxpose.xlu0.b32.end [16/16] 0.0, 128
        %v3400 = vpop.trf.xlu0
        %v3401 = vpop.trf.xlu0
        %v3402 = vpop.trf.xlu0
        %v3403 = vpop.trf.xlu0
        %v3404 = vpop.trf.xlu0
        %v3405 = vpop.trf.xlu0
        %v3406 = vpop.trf.xlu0
        %v3407 = vpop.trf.xlu0
        %v3408 = vpop.trf.xlu0
        %v3409 = vpop.trf.xlu0
        %v3410 = vpop.trf.xlu0
        %v3411 = vpop.trf.xlu0
        %v3412 = vpop.trf.xlu0
        %v3413 = vpop.trf.xlu0
        %v3414 = vpop.trf.xlu0
        %v3415 = vpop.trf.xlu0
        %3416 = vxpose.xlu0.b32.start [1/16] %v3317, 128
        %3417 = vxpose.xlu0.b32.cont [2/16] 0.0, 128
        %3418 = vxpose.xlu0.b32.cont [3/16] 0.0, 128
        %3419 = vxpose.xlu0.b32.cont [4/16] 0.0, 128
        %3420 = vxpose.xlu0.b32.cont [5/16] 0.0, 128
        %3421 = vxpose.xlu0.b32.cont [6/16] 0.0, 128
        %3422 = vxpose.xlu0.b32.cont [7/16] 0.0, 128
        %3423 = vxpose.xlu0.b32.cont [8/16] 0.0, 128
        %3424 = vxpose.xlu0.b32.cont [9/16] 0.0, 128
        %3425 = vxpose.xlu0.b32.cont [10/16] 0.0, 128
        %3426 = vxpose.xlu0.b32.cont [11/16] 0.0, 128
        %3427 = vxpose.xlu0.b32.cont [12/16] 0.0, 128
        %3428 = vxpose.xlu0.b32.cont [13/16] 0.0, 128
        %3429 = vxpose.xlu0.b32.cont [14/16] 0.0, 128
        %3430 = vxpose.xlu0.b32.cont [15/16] 0.0, 128
        %3431 = vxpose.xlu0.b32.end [16/16] 0.0, 128
        %v3432 = vpop.trf.xlu0
        %v3433 = vpop.trf.xlu0
        %v3434 = vpop.trf.xlu0
        %v3435 = vpop.trf.xlu0
        %v3436 = vpop.trf.xlu0
        %v3437 = vpop.trf.xlu0
        %v3438 = vpop.trf.xlu0
        %v3439 = vpop.trf.xlu0
        %v3440 = vpop.trf.xlu0
        %v3441 = vpop.trf.xlu0
        %v3442 = vpop.trf.xlu0
        %v3443 = vpop.trf.xlu0
        %v3444 = vpop.trf.xlu0
        %v3445 = vpop.trf.xlu0
        %v3446 = vpop.trf.xlu0
        %v3447 = vpop.trf.xlu0
        %v3448 = vcombine.low %v3336, %v3400
        %v3449 = vcombine.high %v3336, %v3400
        %v3451 = vunpack.c.l.s4 1983009808
        %v3452 = vunpack.c.0.s8 %v3451
        %v3453 = vlaneseq
        %v3454 = vshrl.u32 %v3453, 7
        %v3455 = vsub.s32 %v3452, %v3454
        %v3456 = vrot.slane %v3448, %v3455
        %v3458 = vunpack.c.l.s4 1983009808
        %v3459 = vunpack.c.0.s8 %v3458
        %v3460 = vlaneseq
        %v3461 = vshrl.u32 %v3460, 7
        %v3462 = vsub.s32 %v3459, %v3461
        %v3463 = vrot.slane %v3449, %v3462
        %v3464 = vcombine.low %v3368, %v3432
        %v3465 = vcombine.high %v3368, %v3432
        %v3467 = vunpack.c.l.s4 1983009808
        %v3468 = vunpack.c.0.s8 %v3467
        %v3469 = vlaneseq
        %v3470 = vshrl.u32 %v3469, 7
        %v3471 = vsub.s32 %v3468, %v3470
        %v3472 = vrot.slane %v3464, %v3471
        %v3474 = vunpack.c.l.s4 1983009808
        %v3475 = vunpack.c.0.s8 %v3474
        %v3476 = vlaneseq
        %v3477 = vshrl.u32 %v3476, 7
        %v3478 = vsub.s32 %v3475, %v3477
        %v3479 = vrot.slane %v3465, %v3478
        %v3480 = vcombine.low %v3456, %v3472
        %v3481 = vcombine.high %v3456, %v3472
        %v3483 = vunpack.c.l.s4 1934713408
        %v3484 = vunpack.c.0.s8 %v3483
        %v3485 = vlaneseq
        %v3486 = vshrl.u32 %v3485, 7
        %v3487 = vsub.s32 %v3484, %v3486
        %v3488 = vrot.slane %v3480, %v3487
        %v3490 = vunpack.c.l.s4 1934713408
        %v3491 = vunpack.c.0.s8 %v3490
        %v3492 = vlaneseq
        %v3493 = vshrl.u32 %v3492, 7
        %v3494 = vsub.s32 %v3491, %v3493
        %v3495 = vrot.slane %v3481, %v3494
        %v3496 = vcombine.low %v3463, %v3479
        %v3497 = vcombine.high %v3463, %v3479
        %v3499 = vunpack.c.l.s4 1934713408
        %v3500 = vunpack.c.0.s8 %v3499
        %v3501 = vlaneseq
        %v3502 = vshrl.u32 %v3501, 7
        %v3503 = vsub.s32 %v3500, %v3502
        %v3504 = vrot.slane %v3496, %v3503
        %v3506 = vunpack.c.l.s4 1934713408
        %v3507 = vunpack.c.0.s8 %v3506
        %v3508 = vlaneseq
        %v3509 = vshrl.u32 %v3508, 7
        %v3510 = vsub.s32 %v3507, %v3509
        %v3511 = vrot.slane %v3497, %v3510
        %v3512 = vcombine.high %v3488, 0.0
        %v3513 = vcombine.high %v3495, 0.0
        %v3514 = vcombine.high %v3504, 0.0
        %v3515 = vcombine.high %v3511, 0.0
        %v3516 = vcombine.low %v3488, %v3495
        %v3518 = vunpack.c.l.s4 1983009808
        %v3519 = vunpack.c.0.s8 %v3518
        %v3520 = vlaneseq
        %v3521 = vshrl.u32 %v3520, 7
        %v3522 = vsub.s32 %v3519, %v3521
        %v3523 = vrot.slane %v3516, %v3522
        %v3524 = vcombine.low %v3512, %v3513
        %v3526 = vunpack.c.l.s4 1983009808
        %v3527 = vunpack.c.0.s8 %v3526
        %v3528 = vlaneseq
        %v3529 = vshrl.u32 %v3528, 7
        %v3530 = vsub.s32 %v3527, %v3529
        %v3531 = vrot.slane %v3524, %v3530
        %v3532 = vcombine.low %v3504, %v3511
        %v3534 = vunpack.c.l.s4 1983009808
        %v3535 = vunpack.c.0.s8 %v3534
        %v3536 = vlaneseq
        %v3537 = vshrl.u32 %v3536, 7
        %v3538 = vsub.s32 %v3535, %v3537
        %v3539 = vrot.slane %v3532, %v3538
        %v3540 = vcombine.low %v3514, %v3515
        %v3542 = vunpack.c.l.s4 1983009808
        %v3543 = vunpack.c.0.s8 %v3542
        %v3544 = vlaneseq
        %v3545 = vshrl.u32 %v3544, 7
        %v3546 = vsub.s32 %v3543, %v3545
        %v3547 = vrot.slane %v3540, %v3546
        %v3548 = vcombine.low %v3523, %v3531
        %v3549 = vcombine.high %v3523, %v3531
        %v3551 = vunpack.c.l.s4 1934713408
        %v3552 = vunpack.c.0.s8 %v3551
        %v3553 = vlaneseq
        %v3554 = vshrl.u32 %v3553, 7
        %v3555 = vsub.s32 %v3552, %v3554
        %v3556 = vrot.slane %v3548, %v3555
        %v3558 = vunpack.c.l.s4 1934713408
        %v3559 = vunpack.c.0.s8 %v3558
        %v3560 = vlaneseq
        %v3561 = vshrl.u32 %v3560, 7
        %v3562 = vsub.s32 %v3559, %v3561
        %v3563 = vrot.slane %v3549, %v3562
        %v3564 = vcombine.low %v3539, %v3547
        %v3565 = vcombine.high %v3539, %v3547
        %v3567 = vunpack.c.l.s4 1934713408
        %v3568 = vunpack.c.0.s8 %v3567
        %v3569 = vlaneseq
        %v3570 = vshrl.u32 %v3569, 7
        %v3571 = vsub.s32 %v3568, %v3570
        %v3572 = vrot.slane %v3564, %v3571
        %v3574 = vunpack.c.l.s4 1934713408
        %v3575 = vunpack.c.0.s8 %v3574
        %v3576 = vlaneseq
        %v3577 = vshrl.u32 %v3576, 7
        %v3578 = vsub.s32 %v3575, %v3577
        %v3579 = vrot.slane %v3565, %v3578
        %v3580 = vcombine.low %v3556, %v3572
        %v3581 = vcombine.high %v3556, %v3572
        %v3582 = vcombine.low %v3563, %v3579
        %v3583 = vcombine.high %v3563, %v3579
        %3585 = vrot.lane.b32.xlu0 %v3581, 8
        %v3586 = vpop.permute.xlu0 %3585
        %3589 = vrot.lane.b32.xlu0 %v3582, 16
        %v3590 = vpop.permute.xlu0 %3589
        %3593 = vrot.lane.b32.xlu0 %v3583, 24
        %v3594 = vpop.permute.xlu0 %3593
        %v3596 = vsel %vm917, %v3580, %v3586
        %v3597 = vsel %vm1979, %v3596, %v3590
        %v3598 = vsel %vm1981, %v3597, %v3594
        %s3599 = scalar_lea.vmem %s9, 32
        %v3600 = vld [vmem:[%s3599] sm:$0xff]
        %v3601 = vld [vmem:[%s3599 + $0x8] sm:$0xff]
        %v3602 = vld [vmem:[%s3599 + $0x10] sm:$0xff]
        %v3603 = vld [vmem:[%s3599 + $0x18] sm:$0xff]
        %s3604 = scalar_lea.vmem %s10, 1
        %v3605 = vld [vmem:[%s3604] sm:$0x1]
        %v3607 = vlaneseq
        %v3608 = vshrl.u32 %v3607, 7
        %v3609 = vsub.s32 0, %v3608
        %v3610 = vrot.slane %v3605, %v3609
        %v3613 = vsel %vm574, %v3598, 0
        %3615 = vmatprep.subr.mxu0 0.0
        %3616 = vmatpush1.msra.mxu0 %v3600
        %3617 = vmatprep.subr.mxu0 0.0
        %3618 = vmatpush1.msra.mxu0 %v3601
        %3619 = vmatprep.subr.mxu0 0.0
        %3620 = vmatpush1.msra.mxu0 %v3602
        %3621 = vmatprep.subr.mxu0 0.0
        %3622 = vmatpush1.msra.mxu0 %v3603
        %3623 = vmatprep.subr.mxu0 0.0
        %3624 = vmatpush1.msra.mxu0 0.0
        %3625 = vmatprep.subr.mxu0 0.0
        %3626 = vmatpush1.msra.mxu0 0.0
        %3627 = vmatprep.subr.mxu0 0.0
        %3628 = vmatpush1.msra.mxu0 0.0
        %3629 = vmatprep.subr.mxu0 0.0
        %3630 = vmatpush1.msra.mxu0 0.0
        %3631 = vmatprep.subr.mxu0 0.0
        %3632 = vmatpush1.msra.mxu0 0.0
        %3633 = vmatprep.subr.mxu0 0.0
        %3634 = vmatpush1.msra.mxu0 0.0
        %3635 = vmatprep.subr.mxu0 0.0
        %3636 = vmatpush1.msra.mxu0 0.0
        %3637 = vmatprep.subr.mxu0 0.0
        %3638 = vmatpush1.msra.mxu0 0.0
        %3639 = vmatprep.subr.mxu0 0.0
        %3640 = vmatpush1.msra.mxu0 0.0
        %3641 = vmatprep.subr.mxu0 0.0
        %3642 = vmatpush1.msra.mxu0 0.0
        %3643 = vmatprep.subr.mxu0 0.0
        %3644 = vmatpush1.msra.mxu0 0.0
        %3645 = vmatprep.subr.mxu0 0.0
        %3646 = vmatpush1.msra.mxu0 0.0
        %3647 = vmatprep.subr.mxu0 0.0
        %3648 = vmatpush1.msra.mxu0 0.0
        %3649 = vmatprep.subr.mxu0 0.0
        %3650 = vmatpush1.msra.mxu0 0.0
        %3651 = vmatprep.subr.mxu0 0.0
        %3652 = vmatpush1.msra.mxu0 0.0
        %3653 = vmatprep.subr.mxu0 0.0
        %3654 = vmatpush1.msra.mxu0 0.0
        %3655 = vmatprep.subr.mxu0 0.0
        %3656 = vmatpush1.msra.mxu0 0.0
        %3657 = vmatprep.subr.mxu0 0.0
        %3658 = vmatpush1.msra.mxu0 0.0
        %3659 = vmatprep.subr.mxu0 0.0
        %3660 = vmatpush1.msra.mxu0 0.0
        %3661 = vmatprep.subr.mxu0 0.0
        %3662 = vmatpush1.msra.mxu0 0.0
        %3663 = vmatprep.subr.mxu0 0.0
        %3664 = vmatpush1.msra.mxu0 0.0
        %3665 = vmatprep.subr.mxu0 0.0
        %3666 = vmatpush1.msra.mxu0 0.0
        %3667 = vmatprep.subr.mxu0 0.0
        %3668 = vmatpush1.msra.mxu0 0.0
        %3669 = vmatprep.subr.mxu0 0.0
        %3670 = vmatpush1.msra.mxu0 0.0
        %3671 = vmatprep.subr.mxu0 0.0
        %3672 = vmatpush1.msra.mxu0 0.0
        %3673 = vmatprep.subr.mxu0 0.0
        %3674 = vmatpush1.msra.mxu0 0.0
        %3675 = vmatprep.subr.mxu0 0.0
        %3676 = vmatpush1.msra.mxu0 0.0
        %3677 = vmatprep.subr.mxu0 0.0
        %3678 = vmatpush1.msra.mxu0 0.0
        %3679 = vmatprep.mubr.f32.mxu0 0.0
        %3680 = vmatmul.mubr.f32.gmra.mrb[0].mxu0 %v3613
        %v3681 = vpop.f32.mrb[0].mxu0
        %v3682 = vadd.f32 %v3610, %v3681
        %v3683 = vpop.f32.mrb[0].mxu0
        %3684 = vdwg.mxu0
        %v3685 = vadd.f32 %v2277, %v3682
        %v3686 = vsel %vm574, %v3685, 0.0
        %3687 = vadd.xlane.f32.xlu0 %v3686
        %v3688 = vpop.xlane.xlu0 %3687
        %v3689 = vmul.f32 %v3688, %v665
        %v3690 = vsub.f32 %v3685, %v3689
        %v3691 = vmul.f32 %v3690, %v3690
        %v3692 = vsel %vm574, %v3691, 0.0
        %3693 = vadd.xlane.f32.xlu0 %v3692
        %v3694 = vpop.xlane.xlu0 %3693
        %v3695 = vmul.f32 %v3694, %v665
        %v3696 = vadd.f32 %v3695, 1e-05
        %v3697 = vrsqrt.pop %v3696
        %v3698 = vmul.f32 %v3690, %v3697
        %v3699 = vlaneseq
        %v3700 = vshrl.u32 %v3699, 7
        %v3701 = vsub.s32 2, %v3700
        %v3702 = vrot.slane %v2279, %v3701
        %v3703 = vmul.f32 %v3698, %v3702
        %v3704 = vlaneseq
        %v3705 = vshrl.u32 %v3704, 7
        %v3706 = vsub.s32 3, %v3705
        %v3707 = vrot.slane %v2279, %v3706
        %v3708 = vadd.f32 %v3703, %v3707
        %s3709 = scalar_lea.vmem %s11, 32
        %v3710 = vld [vmem:[%s3709] sm:$0xff]
        %v3711 = vld [vmem:[%s3709 + $0x8] sm:$0xff]
        %v3712 = vld [vmem:[%s3709 + $0x10] sm:$0xff]
        %v3713 = vld [vmem:[%s3709 + $0x18] sm:$0xff]
        %s3714 = scalar_lea.vmem %s12, 1
        %v3715 = vld [vmem:[%s3714] sm:$0x1]
        %v3717 = vlaneseq
        %v3718 = vshrl.u32 %v3717, 7
        %v3719 = vsub.s32 0, %v3718
        %v3720 = vrot.slane %v3715, %v3719
        %v3723 = vsel %vm574, %v3708, 0
        %3725 = vmatprep.subr.mxu0 0.0
        %3726 = vmatpush1.msra.mxu0 %v3710
        %3727 = vmatprep.subr.mxu0 0.0
        %3728 = vmatpush1.msra.mxu0 %v3711
        %3729 = vmatprep.subr.mxu0 0.0
        %3730 = vmatpush1.msra.mxu0 %v3712
        %3731 = vmatprep.subr.mxu0 0.0
        %3732 = vmatpush1.msra.mxu0 %v3713
        %3733 = vmatprep.subr.mxu0 0.0
        %3734 = vmatpush1.msra.mxu0 0.0
        %3735 = vmatprep.subr.mxu0 0.0
        %3736 = vmatpush1.msra.mxu0 0.0
        %3737 = vmatprep.subr.mxu0 0.0
        %3738 = vmatpush1.msra.mxu0 0.0
        %3739 = vmatprep.subr.mxu0 0.0
        %3740 = vmatpush1.msra.mxu0 0.0
        %3741 = vmatprep.subr.mxu0 0.0
        %3742 = vmatpush1.msra.mxu0 0.0
        %3743 = vmatprep.subr.mxu0 0.0
        %3744 = vmatpush1.msra.mxu0 0.0
        %3745 = vmatprep.subr.mxu0 0.0
        %3746 = vmatpush1.msra.mxu0 0.0
        %3747 = vmatprep.subr.mxu0 0.0
        %3748 = vmatpush1.msra.mxu0 0.0
        %3749 = vmatprep.subr.mxu0 0.0
        %3750 = vmatpush1.msra.mxu0 0.0
        %3751 = vmatprep.subr.mxu0 0.0
        %3752 = vmatpush1.msra.mxu0 0.0
        %3753 = vmatprep.subr.mxu0 0.0
        %3754 = vmatpush1.msra.mxu0 0.0
        %3755 = vmatprep.subr.mxu0 0.0
        %3756 = vmatpush1.msra.mxu0 0.0
        %3757 = vmatprep.subr.mxu0 0.0
        %3758 = vmatpush1.msra.mxu0 0.0
        %3759 = vmatprep.subr.mxu0 0.0
        %3760 = vmatpush1.msra.mxu0 0.0
        %3761 = vmatprep.subr.mxu0 0.0
        %3762 = vmatpush1.msra.mxu0 0.0
        %3763 = vmatprep.subr.mxu0 0.0
        %3764 = vmatpush1.msra.mxu0 0.0
        %3765 = vmatprep.subr.mxu0 0.0
        %3766 = vmatpush1.msra.mxu0 0.0
        %3767 = vmatprep.subr.mxu0 0.0
        %3768 = vmatpush1.msra.mxu0 0.0
        %3769 = vmatprep.subr.mxu0 0.0
        %3770 = vmatpush1.msra.mxu0 0.0
        %3771 = vmatprep.subr.mxu0 0.0
        %3772 = vmatpush1.msra.mxu0 0.0
        %3773 = vmatprep.subr.mxu0 0.0
        %3774 = vmatpush1.msra.mxu0 0.0
        %3775 = vmatprep.subr.mxu0 0.0
        %3776 = vmatpush1.msra.mxu0 0.0
        %3777 = vmatprep.subr.mxu0 0.0
        %3778 = vmatpush1.msra.mxu0 0.0
        %3779 = vmatprep.subr.mxu0 0.0
        %3780 = vmatpush1.msra.mxu0 0.0
        %3781 = vmatprep.subr.mxu0 0.0
        %3782 = vmatpush1.msra.mxu0 0.0
        %3783 = vmatprep.subr.mxu0 0.0
        %3784 = vmatpush1.msra.mxu0 0.0
        %3785 = vmatprep.subr.mxu0 0.0
        %3786 = vmatpush1.msra.mxu0 0.0
        %3787 = vmatprep.subr.mxu0 0.0
        %3788 = vmatpush1.msra.mxu0 0.0
        %3789 = vmatprep.mubr.f32.mxu0 0.0
        %3790 = vmatmul.mubr.f32.gmra.mrb[0].mxu0 %v3723
        %v3791 = vpop.f32.mrb[0].mxu0
        %v3792 = vadd.f32 %v3720, %v3791
        %v3793 = vpop.f32.mrb[0].mxu0
        %3794 = vdwg.mxu0
        %v3795 = vmul.f32 %v3792, 0.5
        %v3796 = vmul.f32 %v3792, 0.044715
        %v3797 = vmul.f32 %v3796, %v3792
        %v3798 = vmul.f32 %v3797, %v3792
        %v3799 = vadd.f32 %v3792, %v3798
        %v3800 = vmul.f32 %v3799, 0.7978846
        %v3801 = vtanh.pop %v3800
        %v3802 = vadd.f32 %v3801, 1.0
        %v3803 = vmul.f32 %v3795, %v3802
        %s3804 = scalar_lea.vmem %s13, 128
        %v3805 = vld [vmem:[%s3804] sm:$0xff]
        %v3806 = vld [vmem:[%s3804 + $0x8] sm:$0xff]
        %v3807 = vld [vmem:[%s3804 + $0x10] sm:$0xff]
        %v3808 = vld [vmem:[%s3804 + $0x18] sm:$0xff]
        %v3809 = vld [vmem:[%s3804 + $0x20] sm:$0xff]
        %v3810 = vld [vmem:[%s3804 + $0x28] sm:$0xff]
        %v3811 = vld [vmem:[%s3804 + $0x30] sm:$0xff]
        %v3812 = vld [vmem:[%s3804 + $0x38] sm:$0xff]
        %v3813 = vld [vmem:[%s3804 + $0x40] sm:$0xff]
        %v3814 = vld [vmem:[%s3804 + $0x48] sm:$0xff]
        %v3815 = vld [vmem:[%s3804 + $0x50] sm:$0xff]
        %v3816 = vld [vmem:[%s3804 + $0x58] sm:$0xff]
        %v3817 = vld [vmem:[%s3804 + $0x60] sm:$0xff]
        %v3818 = vld [vmem:[%s3804 + $0x68] sm:$0xff]
        %v3819 = vld [vmem:[%s3804 + $0x70] sm:$0xff]
        %v3820 = vld [vmem:[%s3804 + $0x78] sm:$0xff]
        %s3821 = scalar_lea.vmem %s14, 1
        %v3822 = vld [vmem:[%s3821] sm:$0x1]
        %v3824 = vlaneseq
        %v3825 = vshrl.u32 %v3824, 7
        %v3826 = vsub.s32 0, %v3825
        %v3827 = vrot.slane %v3822, %v3826
        %3829 = vmatprep.subr.mxu0 0.0
        %3830 = vmatpush1.msra.mxu0 %v3805
        %3831 = vmatprep.subr.mxu0 0.0
        %3832 = vmatpush1.msra.mxu0 %v3806
        %3833 = vmatprep.subr.mxu0 0.0
        %3834 = vmatpush1.msra.mxu0 %v3807
        %3835 = vmatprep.subr.mxu0 0.0
        %3836 = vmatpush1.msra.mxu0 %v3808
        %3837 = vmatprep.subr.mxu0 0.0
        %3838 = vmatpush1.msra.mxu0 %v3809
        %3839 = vmatprep.subr.mxu0 0.0
        %3840 = vmatpush1.msra.mxu0 %v3810
        %3841 = vmatprep.subr.mxu0 0.0
        %3842 = vmatpush1.msra.mxu0 %v3811
        %3843 = vmatprep.subr.mxu0 0.0
        %3844 = vmatpush1.msra.mxu0 %v3812
        %3845 = vmatprep.subr.mxu0 0.0
        %3846 = vmatpush1.msra.mxu0 %v3813
        %3847 = vmatprep.subr.mxu0 0.0
        %3848 = vmatpush1.msra.mxu0 %v3814
        %3849 = vmatprep.subr.mxu0 0.0
        %3850 = vmatpush1.msra.mxu0 %v3815
        %3851 = vmatprep.subr.mxu0 0.0
        %3852 = vmatpush1.msra.mxu0 %v3816
        %3853 = vmatprep.subr.mxu0 0.0
        %3854 = vmatpush1.msra.mxu0 %v3817
        %3855 = vmatprep.subr.mxu0 0.0
        %3856 = vmatpush1.msra.mxu0 %v3818
        %3857 = vmatprep.subr.mxu0 0.0
        %3858 = vmatpush1.msra.mxu0 %v3819
        %3859 = vmatprep.subr.mxu0 0.0
        %3860 = vmatpush1.msra.mxu0 %v3820
        %3861 = vmatprep.subr.mxu0 0.0
        %3862 = vmatpush1.msra.mxu0 0.0
        %3863 = vmatprep.subr.mxu0 0.0
        %3864 = vmatpush1.msra.mxu0 0.0
        %3865 = vmatprep.subr.mxu0 0.0
        %3866 = vmatpush1.msra.mxu0 0.0
        %3867 = vmatprep.subr.mxu0 0.0
        %3868 = vmatpush1.msra.mxu0 0.0
        %3869 = vmatprep.subr.mxu0 0.0
        %3870 = vmatpush1.msra.mxu0 0.0
        %3871 = vmatprep.subr.mxu0 0.0
        %3872 = vmatpush1.msra.mxu0 0.0
        %3873 = vmatprep.subr.mxu0 0.0
        %3874 = vmatpush1.msra.mxu0 0.0
        %3875 = vmatprep.subr.mxu0 0.0
        %3876 = vmatpush1.msra.mxu0 0.0
        %3877 = vmatprep.subr.mxu0 0.0
        %3878 = vmatpush1.msra.mxu0 0.0
        %3879 = vmatprep.subr.mxu0 0.0
        %3880 = vmatpush1.msra.mxu0 0.0
        %3881 = vmatprep.subr.mxu0 0.0
        %3882 = vmatpush1.msra.mxu0 0.0
        %3883 = vmatprep.subr.mxu0 0.0
        %3884 = vmatpush1.msra.mxu0 0.0
        %3885 = vmatprep.subr.mxu0 0.0
        %3886 = vmatpush1.msra.mxu0 0.0
        %3887 = vmatprep.subr.mxu0 0.0
        %3888 = vmatpush1.msra.mxu0 0.0
        %3889 = vmatprep.subr.mxu0 0.0
        %3890 = vmatpush1.msra.mxu0 0.0
        %3891 = vmatprep.subr.mxu0 0.0
        %3892 = vmatpush1.msra.mxu0 0.0
        %3893 = vmatprep.mubr.f32.mxu0 0.0
        %3894 = vmatmul.mubr.f32.gmra.mrb[0].mxu0 %v3803
        %v3895 = vpop.f32.mrb[0].mxu0
        %v3896 = vadd.f32 %v3827, %v3895
        %v3897 = vpop.f32.mrb[0].mxu0
        %3898 = vdwg.mxu0
        %v3899 = vadd.f32 %v3685, %v3896
        %v3900 = vld [vmem:[%s15] sm:$0x1]
        %v3901 = vld [vmem:[%s15 + $0x1] sm:$0x1]
        %v3902 = vsel %vm574, %v3899, 0.0
        %3903 = vadd.xlane.f32.xlu0 %v3902
        %v3904 = vpop.xlane.xlu0 %3903
        %v3905 = vmul.f32 %v3904, %v665
        %v3906 = vsub.f32 %v3899, %v3905
        %v3907 = vmul.f32 %v3906, %v3906
        %v3908 = vsel %vm574, %v3907, 0.0
        %3909 = vadd.xlane.f32.xlu0 %v3908
        %v3910 = vpop.xlane.xlu0 %3909
        %v3911 = vmul.f32 %v3910, %v665
        %v3912 = vadd.f32 %v3911, 1e-05
        %v3913 = vrsqrt.pop %v3912
        %v3914 = vmul.f32 %v3906, %v3913
        %v3915 = vlaneseq
        %v3916 = vshrl.u32 %v3915, 7
        %v3917 = vsub.s32 0, %v3916
        %v3918 = vrot.slane %v3900, %v3917
        %v3919 = vmul.f32 %v3914, %v3918
        %v3920 = vlaneseq
        %v3921 = vshrl.u32 %v3920, 7
        %v3922 = vsub.s32 0, %v3921
        %v3923 = vrot.slane %v3901, %v3922
        %v3924 = vadd.f32 %v3919, %v3923
        %v3925 = vld [vmem:[%s16] sm:$0xff]
        %v3926 = vld [vmem:[%s16 + $0x8] sm:$0xff]
        %v3927 = vld [vmem:[%s16 + $0x10] sm:$0xff]
        %v3928 = vld [vmem:[%s16 + $0x18] sm:$0xff]
        %v3930 = vsel %vm574, %v3924, 0
        %3932 = vmatprep.subr.mxu0 0.0
        %3933 = vmatpush1.msra.mxu0 %v3925
        %3934 = vmatprep.subr.mxu0 0.0
        %3935 = vmatpush1.msra.mxu0 %v3926
        %3936 = vmatprep.subr.mxu0 0.0
        %3937 = vmatpush1.msra.mxu0 %v3927
        %3938 = vmatprep.subr.mxu0 0.0
        %3939 = vmatpush1.msra.mxu0 %v3928
        %3940 = vmatprep.subr.mxu0 0.0
        %3941 = vmatpush1.msra.mxu0 0.0
        %3942 = vmatprep.subr.mxu0 0.0
        %3943 = vmatpush1.msra.mxu0 0.0
        %3944 = vmatprep.subr.mxu0 0.0
        %3945 = vmatpush1.msra.mxu0 0.0
        %3946 = vmatprep.subr.mxu0 0.0
        %3947 = vmatpush1.msra.mxu0 0.0
        %3948 = vmatprep.subr.mxu0 0.0
        %3949 = vmatpush1.msra.mxu0 0.0
        %3950 = vmatprep.subr.mxu0 0.0
        %3951 = vmatpush1.msra.mxu0 0.0
        %3952 = vmatprep.subr.mxu0 0.0
        %3953 = vmatpush1.msra.mxu0 0.0
        %3954 = vmatprep.subr.mxu0 0.0
        %3955 = vmatpush1.msra.mxu0 0.0
        %3956 = vmatprep.subr.mxu0 0.0
        %3957 = vmatpush1.msra.mxu0 0.0
        %3958 = vmatprep.subr.mxu0 0.0
        %3959 = vmatpush1.msra.mxu0 0.0
        %3960 = vmatprep.subr.mxu0 0.0
        %3961 = vmatpush1.msra.mxu0 0.0
        %3962 = vmatprep.subr.mxu0 0.0
        %3963 = vmatpush1.msra.mxu0 0.0
        %3964 = vmatprep.subr.mxu0 0.0
        %3965 = vmatpush1.msra.mxu0 0.0
        %3966 = vmatprep.subr.mxu0 0.0
        %3967 = vmatpush1.msra.mxu0 0.0
        %3968 = vmatprep.subr.mxu0 0.0
        %3969 = vmatpush1.msra.mxu0 0.0
        %3970 = vmatprep.subr.mxu0 0.0
        %3971 = vmatpush1.msra.mxu0 0.0
        %3972 = vmatprep.subr.mxu0 0.0
        %3973 = vmatpush1.msra.mxu0 0.0
        %3974 = vmatprep.subr.mxu0 0.0
        %3975 = vmatpush1.msra.mxu0 0.0
        %3976 = vmatprep.subr.mxu0 0.0
        %3977 = vmatpush1.msra.mxu0 0.0
        %3978 = vmatprep.subr.mxu0 0.0
        %3979 = vmatpush1.msra.mxu0 0.0
        %3980 = vmatprep.subr.mxu0 0.0
        %3981 = vmatpush1.msra.mxu0 0.0
        %3982 = vmatprep.subr.mxu0 0.0
        %3983 = vmatpush1.msra.mxu0 0.0
        %3984 = vmatprep.subr.mxu0 0.0
        %3985 = vmatpush1.msra.mxu0 0.0
        %3986 = vmatprep.subr.mxu0 0.0
        %3987 = vmatpush1.msra.mxu0 0.0
        %3988 = vmatprep.subr.mxu0 0.0
        %3989 = vmatpush1.msra.mxu0 0.0
        %3990 = vmatprep.subr.mxu0 0.0
        %3991 = vmatpush1.msra.mxu0 0.0
        %3992 = vmatprep.subr.mxu0 0.0
        %3993 = vmatpush1.msra.mxu0 0.0
        %3994 = vmatprep.subr.mxu0 0.0
        %3995 = vmatpush1.msra.mxu0 0.0
        %3996 = vmatprep.mubr.f32.mxu0 0.0
        %3997 = vmatmul.mubr.f32.gmra.mrb[0].mxu0 %v3930
        %v3998 = vpop.f32.mrb[0].mxu0
        %v3999 = vadd.f32 0.0, %v3998
        %v4000 = vpop.f32.mrb[0].mxu0
        %4001 = vdwg.mxu0
        %4002 = vst [vmem:[%s553] sm:$0xff] %v3999
        %s4003 = sand.u32 %s407, 1
        %s4004 = scalar_lea.sflag [#allocation4], %s4003
        %s4005 = sand.u32 %s407, 1
        %s4006 = smul.addr %s4005, 8
        %s4007 = scalar_lea.vmem [#allocation3], %s4006
        // Predicated region
        $region89: #{tpu_custom_call.1} parent=87 // pred_check
          %p4008 = pneg %p417
        $region90: #{tpu_custom_call.1} parent=87 // pred_check_branch
          %4010 = sbr.rel (%p4008) target = $region92
        $region91: #{tpu_custom_call.1} parent=87 // pred_region
          %s4012 = ssub.s32 128, 128
          %4013 = vsyncadd %s4004, %s4012
          %s4014 = smul.addr %s32, 128
          %s4015 = scalar_lea.hbm %s17, %s4014
          %s4017 = sshll.u32 %s4007, 4
          %s4018 = int_to_ptr.vmem [resolvable:$true] %s4017
          %4020 = dma.vmem_to_hbm [thread:$0]  %s4018, 128, %s4015, %s4004
        $region92: #{tpu_custom_call.1} parent=87 // pred_fallthru
          _
      $region88: #{tpu_custom_call.1} parent=5 // pred_fallthru
        _
      %p4021 = scmp.le.s32.totalorder 2, %s27
      // Predicated region
      $region93: #{tpu_custom_call.1} parent=5 // pred_check
        %p4022 = pneg %p4021
      $region94: #{tpu_custom_call.1} parent=5 // pred_check_branch
        %4024 = sbr.rel (%p4022) target = $region96
      $region95: #{tpu_custom_call.1} parent=5 // pred_region
        %s4025 = ssub.s32 %s27, 2
        // Predicated region
        $region97: #{tpu_custom_call.1} parent=95 // pred_check
          %p4026 = pneg %p423
        $region98: #{tpu_custom_call.1} parent=95 // pred_check_branch
          %4028 = sbr.rel (%p4026) target = $region100
        $region99: #{tpu_custom_call.1} parent=95 // pred_region
          %s4029 = sand.u32 %s408, 1
          %s4030 = scalar_lea.sflag [#allocation4], %s4029
          %s4031 = sand.u32 %s408, 1
          %s4032 = smul.addr %s4031, 8
          %s4033 = scalar_lea.vmem [#allocation3], %s4032
          %4034 = dma.done %s4030, 128
        $region100: #{tpu_custom_call.1} parent=95 // pred_fallthru
          _
      $region96: #{tpu_custom_call.1} parent=5 // pred_fallthru
        _
    $region6: #{tpu_custom_call.1} parent=1 // loop_footer
      %s31 = sadd.s32 1, %s27
    $region7: #{tpu_custom_call.1} parent=1 // loop_footer_branch
      %26 = sbr.rel target = $region3
    $region8: #{tpu_custom_call.1} parent=1 // loop_exit
      _
    %4035 = vsyncpa [#allocation4], 1
    %s4036 = scalar_lea.sflag [#allocation4], 1
    %4037 = vsyncpa %s4036, 1

</llo_original>
